<compile_context>
chip_gen: v5e
topology: v5e:2x2
jax: 0.10.0
libtpu: 0.0.40
codegen_flags: <defaults>
</compile_context>

<pallas_src>
import functools

import jax
import jax.numpy as jnp
from jax.experimental import pallas as pl
from jax.experimental.pallas import tpu as pltpu


def _round_up(a: int, b: int) -> int:
    return ((a + b - 1) // b) * b


def _nemotron_mlp_kernel(x_ref, w_up_ref, w_down_ref, o_ref, acc_ref, *,
                         low_precision_act: bool):
    # x_ref:      [tm, H]   token tile (bf16)
    # w_up_ref:   [H, ti]   up-projection tile for this I-chunk (contiguous block)
    # w_down_ref: [ti, H]   down-projection tile for this I-chunk
    # o_ref:      [tm, H]   output tile (written on last reduction step)
    # acc_ref:    [tm, H]   f32 accumulator scratch (resident across k)
    k = pl.program_id(1)

    # Up-projection partial: bf16 x bf16 -> f32 on the MXU.
    up = jnp.dot(x_ref[...], w_up_ref[...], preferred_element_type=jnp.float32)

    # Nemotron "relu2" (squared ReLU). Default is f32 on the VPU with a single
    # downcast of h to bf16 for the second matmul. low_precision_act=True does
    # the elementwise work in bf16 (v6e/v7x vreg/VALU saving suggested by the
    # review) at a small extra numeric cost — kept off by default.
    if low_precision_act:
        u = up.astype(w_down_ref.dtype)
        r = jnp.maximum(u, 0)
        h = r * r
    else:
        r = jnp.maximum(up, 0.0)
        h = (r * r).astype(w_down_ref.dtype)

    # Down-projection partial sum; accumulation stays f32 in the scratch.
    partial = jnp.dot(h, w_down_ref[...], preferred_element_type=jnp.float32)

    @pl.when(k == 0)
    def _():
        acc_ref[...] = partial      # direct assign: no zero-init store + reload

    @pl.when(k > 0)
    def _():
        acc_ref[...] += partial

    @pl.when(k == pl.num_programs(1) - 1)
    def _():
        o_ref[...] = acc_ref[...].astype(o_ref.dtype)


def _chip_info():
    """(device_kind lowercased, physical VMEM bytes) with safe fallbacks."""
    kind = ""
    try:
        kind = jax.devices()[0].device_kind.lower()
    except Exception:
        pass
    try:
        vmem_cap = int(pltpu.get_tpu_info().vmem_capacity_bytes)
    except Exception:
        # 128 MiB for v5/v6 families, conservative 64 MiB otherwise (v7x).
        vmem_cap = 128 * 2**20 if ("v5" in kind or "v6" in kind) else 64 * 2**20
    return kind, vmem_cap


def nemotron_mlp(x, w_up, w_down, *, tm=None, ti=None,
                 compute_dtype=jnp.bfloat16, low_precision_act=False,
                 vmem_limit_bytes=None):
    """Fused NemotronMLP forward: relu2(x @ w_up) @ w_down."""
    T, H = x.shape
    Hi, I = w_up.shape
    assert Hi == H and w_down.shape == (I, H)

    out_dtype = x.dtype
    bpe = jnp.dtype(compute_dtype).itemsize
    out_bpe = jnp.dtype(out_dtype).itemsize

    # ---- generation-aware tile defaults -------------------------------------
    kind, vmem_cap = _chip_info()
    if tm is None or ti is None:
        if "v6" in kind:                       # 128 MiB VMEM, ~680 FLOP/B crossover
            d_tm, d_ti = 512, 512
        elif "v5" in kind:                     # 128 MiB VMEM, ~240 FLOP/B crossover
            d_tm, d_ti = 256, 1024
        elif vmem_cap >= 96 * 2**20:           # unknown big-VMEM part
            d_tm, d_ti = 512, 512
        else:                                  # v7x: 64 MiB physical VMEM / TC
            d_tm, d_ti = 256, 256
        if tm is None:
            tm = d_tm
        if ti is None:
            ti = d_ti

    # Token tile: multiple of 128 (fills MXU rows), never larger than needed.
    tm = max(128, (tm // 128) * 128)
    tm = min(tm, _round_up(T, 128))

    # Reduction tile: multiple of 128; I is padded up to a multiple of ti below
    # (never fall back to ti = I, which would stage full weights in VMEM).
    if I >= 128:
        ti = max(128, (min(ti, I) // 128) * 128)
    else:
        ti = I  # tiny intermediate dim: single reduction step, full extent.

    # ---- VMEM budget: exact buffer counts, clamped to physical VMEM ---------
    headroom = 2 * 2**20
    budget = int(0.85 * vmem_cap)

    def vmem_usage(tm_, ti_):
        return (2 * tm_ * H * bpe            # x tile (double-buffered)
                + 2 * H * ti_ * bpe          # W_up tile (double-buffered)
                + 2 * ti_ * H * bpe          # W_down tile (double-buffered)
                + 2 * tm_ * H * out_bpe      # out tile (conservative: 2 bufs)
                + tm_ * H * 4)               # f32 accumulator scratch

    while vmem_usage(tm, ti) + headroom > budget and (ti > 128 or tm > 128):
        if ti >= tm and ti > 128:
            ti = max(128, ((ti // 2) // 128) * 128)
        else:
            tm = max(128, ((tm // 2) // 128) * 128)

    if vmem_limit_bytes is None:
        vmem_limit_bytes = int(min(budget,
                                   max(32 * 2**20, vmem_usage(tm, ti) + headroom)))

    # ---- cast, pad and relayout ---------------------------------------------
    xc = x.astype(compute_dtype)
    wu = w_up.astype(compute_dtype)
    wd = w_down.astype(compute_dtype)

    T_pad = _round_up(T, tm)
    if T_pad != T:
        xc = jnp.pad(xc, ((0, T_pad - T), (0, 0)))

    I_pad = _round_up(I, ti)
    if I_pad != I:
        # Zero-padded intermediate columns: up=0 -> relu2=0 -> contribute 0.
        wu = jnp.pad(wu, ((0, 0), (0, I_pad - I)))
        wd = jnp.pad(wd, ((0, I_pad - I), (0, 0)))

    nt = T_pad // tm
    nk = I_pad // ti

    # Block-contiguous W_up layout: each streamed [H, ti] tile becomes one
    # contiguous DMA instead of H strided ti-wide segments. (In a real model
    # this relayout happens once at weight-load time.)
    wu_blocked = wu.reshape(H, nk, ti).transpose(1, 0, 2)  # [nk, H, ti]

    grid = (nt, nk)
    kernel = functools.partial(_nemotron_mlp_kernel,
                               low_precision_act=low_precision_act)

    cost = pl.CostEstimate(
        flops=4 * T_pad * H * I_pad,                       # two matmuls
        transcendentals=0,
        bytes_accessed=(T_pad * H * (bpe + out_bpe)        # x in + out
                        + nt * 2 * H * I_pad * bpe))       # weights per token tile

    def build(out_pipeline_mode):
        if out_pipeline_mode is not None:
            out_spec = pl.BlockSpec((tm, H), lambda i, k: (i, 0),
                                    pipeline_mode=out_pipeline_mode)
        else:
            out_spec = pl.BlockSpec((tm, H), lambda i, k: (i, 0))
        return pl.pallas_call(
            kernel,
            out_shape=jax.ShapeDtypeStruct((T_pad, H), out_dtype),
            grid_spec=pltpu.PrefetchScalarGridSpec(
                num_scalar_prefetch=0,
                grid=grid,
                in_specs=[
                    pl.BlockSpec((tm, H), lambda i, k: (i, 0)),         # x tile
                    pl.BlockSpec((None, H, ti), lambda i, k: (k, 0, 0)),  # W_up tile
                    pl.BlockSpec((ti, H), lambda i, k: (k, 0)),         # W_down tile
                ],
                out_specs=out_spec,
                scratch_shapes=[pltpu.VMEM((tm, H), jnp.float32)],
            ),
            compiler_params=pltpu.CompilerParams(
                dimension_semantics=("parallel", "arbitrary"),
                vmem_limit_bytes=vmem_limit_bytes,
            ),
            cost_estimate=cost,
        )

    try:
        # Output block is written once per nk steps -> single-buffer it and
        # spend the freed VMEM on larger tiles.
        out = build(pl.Buffered(1))(xc, wu_blocked, wd)
    except Exception:
        # Fallback if pipeline_mode=Buffered(1) is unsupported on this stack.
        out = build(None)(xc, wu_blocked, wd)

    if T_pad != T:
        out = out[:T]
    return out


def reference_mlp(x, w_up, w_down):
    xf = x.astype(jnp.float32)
    up = xf @ w_up.astype(jnp.float32)
    r = jnp.maximum(up, 0.0)
    h = r * r
    return h @ w_down.astype(jnp.float32)


if __name__ == "__main__":
    # Small shapes that still exercise the tiling / padding paths.
    T, H, I = 256, 256, 384
    key = jax.random.PRNGKey(0)
    kx, ku, kd = jax.random.split(key, 3)

    x = jax.random.normal(kx, (T, H), dtype=jnp.float32).astype(jnp.bfloat16)
    w_up = (jax.random.normal(ku, (H, I), dtype=jnp.float32)
            * (1.0 / H**0.5)).astype(jnp.bfloat16)
    w_down = (jax.random.normal(kd, (I, H), dtype=jnp.float32)
              * (1.0 / I**0.5)).astype(jnp.bfloat16)

    ref = reference_mlp(x, w_up, w_down)

    # 1) Auto (generation-aware) tiling.
    out = jax.block_until_ready(nemotron_mlp(x, w_up, w_down))
    diff = jnp.abs(out.astype(jnp.float32) - ref)
    assert jnp.allclose(out.astype(jnp.float32), ref, atol=3e-2, rtol=3e-2), (
        f"auto-tiling mismatch vs reference: max abs diff {float(diff.max()):.4e}")

    # 2) Explicit small tiles: 2 token tiles x 2 reduction tiles, with both
    #    T padding (200 -> 256) and I padding (384 -> 512) exercised.
    x2 = x[:200]
    ref2 = reference_mlp(x2, w_up, w_down)
    out2 = jax.block_until_ready(nemotron_mlp(x2, w_up, w_down, tm=128, ti=256))
    diff2 = jnp.abs(out2.astype(jnp.float32) - ref2)
    assert jnp.allclose(out2.astype(jnp.float32), ref2, atol=3e-2, rtol=3e-2), (
        f"tiled mismatch vs reference: max abs diff {float(diff2.max()):.4e}")

    print("KERNEL_OK")
</pallas_src>

<mosaic_0001>
module attributes {stable_mosaic.version = 11 : i64} {
  func.func @_nemotron_mlp_kernel(%arg0: i32, %arg1: i32, %arg2: memref<256x256xbf16, #tpu.memory_space<vmem>>, %arg3: memref<1x256x256xbf16, #tpu.memory_space<vmem>>, %arg4: memref<256x256xbf16, #tpu.memory_space<vmem>>, %arg5: memref<256x256xbf16, #tpu.memory_space<vmem>>, %arg6: memref<256x256xf32, #tpu.memory_space<vmem>>) attributes {dimension_semantics = [#tpu.dimension_semantics<parallel>, #tpu.dimension_semantics<arbitrary>], iteration_bounds = array<i64: 1, 2>, scalar_prefetch = 0 : i64, scratch_operands = 1 : i64, tpu.core_type = #tpu.core_type<tc>, window_params = [{transform_indices = @transform_0, window_bounds = array<i64: 256, 256>}, {transform_indices = @transform_1, window_bounds = array<i64: 1, 256, 256>}, {transform_indices = @transform_2, window_bounds = array<i64: 256, 256>}, {pipeline_mode = #tpu.pipeline_mode<synchronous>, transform_indices = @transform_3, window_bounds = array<i64: 256, 256>}]} {
    %c0 = arith.constant 0 : index
    %c0_0 = arith.constant 0 : index
    %0 = vector.load %arg2[%c0, %c0_0] : memref<256x256xbf16, #tpu.memory_space<vmem>>, vector<256x256xbf16>
    %c0_1 = arith.constant 0 : index
    %c0_2 = arith.constant 0 : index
    %c0_3 = arith.constant 0 : index
    %1 = vector.load %arg3[%c0_1, %c0_2, %c0_3] : memref<1x256x256xbf16, #tpu.memory_space<vmem>>, vector<1x256x256xbf16>
    %2 = vector.shape_cast %1 : vector<1x256x256xbf16> to vector<256x256xbf16>
    %cst = arith.constant dense<0.000000e+00> : vector<256x256xf32>
    %3 = tpu.matmul %0, %2, %cst {dimension_numbers = #tpu.dot_dimension_numbers<[1], [0], [0], [1], [0, 0, 1, 1], [], []>} : vector<256x256xbf16>, vector<256x256xbf16>, vector<256x256xf32> -> vector<256x256xf32>
    %cst_4 = arith.constant 0.000000e+00 : f32
    %4 = vector.broadcast %cst_4 : f32 to vector<256x256xf32>
    %5 = arith.maximumf %3, %4 : vector<256x256xf32>
    %6 = arith.mulf %5, %5 : vector<256x256xf32>
    %7 = arith.truncf %6 : vector<256x256xf32> to vector<256x256xbf16>
    %c0_5 = arith.constant 0 : index
    %c0_6 = arith.constant 0 : index
    %8 = vector.load %arg4[%c0_5, %c0_6] : memref<256x256xbf16, #tpu.memory_space<vmem>>, vector<256x256xbf16>
    %cst_7 = arith.constant dense<0.000000e+00> : vector<256x256xf32>
    %9 = tpu.matmul %7, %8, %cst_7 {dimension_numbers = #tpu.dot_dimension_numbers<[1], [0], [0], [1], [0, 0, 1, 1], [], []>} : vector<256x256xbf16>, vector<256x256xbf16>, vector<256x256xf32> -> vector<256x256xf32>
    %c0_i32 = arith.constant 0 : i32
    %10 = arith.cmpi eq, %arg1, %c0_i32 : i32
    %11 = arith.extui %10 : i1 to i32
    %c0_i32_8 = arith.constant 0 : i32
    %12 = arith.cmpi ne, %11, %c0_i32_8 : i32
    scf.if %12 {
      %c0_12 = arith.constant 0 : index
      %c0_13 = arith.constant 0 : index
      %19 = vector.load %arg6[%c0_12, %c0_13] : memref<256x256xf32, #tpu.memory_space<vmem>>, vector<256x256xf32>
      tpu.vector_store %arg6[%c0_12, %c0_13], %9 {strides = array<i32>} : memref<256x256xf32, #tpu.memory_space<vmem>>, vector<256x256xf32>,
    } else {
    }
    %c0_i32_9 = arith.constant 0 : i32
    %13 = arith.cmpi sgt, %arg1, %c0_i32_9 : i32
    %14 = arith.extui %13 : i1 to i32
    %c0_i32_10 = arith.constant 0 : i32
    %15 = arith.cmpi ne, %14, %c0_i32_10 : i32
    scf.if %15 {
      %c0_12 = arith.constant 0 : index
      %c0_13 = arith.constant 0 : index
      %19 = vector.load %arg6[%c0_12, %c0_13] : memref<256x256xf32, #tpu.memory_space<vmem>>, vector<256x256xf32>
      %20 = arith.addf %19, %9 : vector<256x256xf32>
      %c0_14 = arith.constant 0 : index
      %c0_15 = arith.constant 0 : index
      %21 = vector.load %arg6[%c0_14, %c0_15] : memref<256x256xf32, #tpu.memory_space<vmem>>, vector<256x256xf32>
      tpu.vector_store %arg6[%c0_14, %c0_15], %20 {strides = array<i32>} : memref<256x256xf32, #tpu.memory_space<vmem>>, vector<256x256xf32>,
    } else {
    }
    %c1_i32 = arith.constant 1 : i32
    %16 = arith.cmpi eq, %arg1, %c1_i32 : i32
    %17 = arith.extui %16 : i1 to i32
    %c0_i32_11 = arith.constant 0 : i32
    %18 = arith.cmpi ne, %17, %c0_i32_11 : i32
    scf.if %18 {
      %c0_12 = arith.constant 0 : index
      %c0_13 = arith.constant 0 : index
      %19 = vector.load %arg6[%c0_12, %c0_13] : memref<256x256xf32, #tpu.memory_space<vmem>>, vector<256x256xf32>
      %20 = arith.truncf %19 : vector<256x256xf32> to vector<256x256xbf16>
      %c0_14 = arith.constant 0 : index
      %c0_15 = arith.constant 0 : index
      %21 = vector.load %arg5[%c0_14, %c0_15] : memref<256x256xbf16, #tpu.memory_space<vmem>>, vector<256x256xbf16>
      tpu.vector_store %arg5[%c0_14, %c0_15], %20 {strides = array<i32>} : memref<256x256xbf16, #tpu.memory_space<vmem>>, vector<256x256xbf16>,
    } else {
    }
    return
  }
  func.func @transform_0(%arg0: i32, %arg1: i32) -> (i32, i32) {
    %c0_i32 = arith.constant 0 : i32
    %c0_i32_0 = arith.constant 0 : i32
    return %arg0, %c0_i32 : i32, i32
  }
  func.func @transform_1(%arg0: i32, %arg1: i32) -> (i32, i32, i32) {
    %c0_i32 = arith.constant 0 : i32
    %c0_i32_0 = arith.constant 0 : i32
    %c0_i32_1 = arith.constant 0 : i32
    return %arg1, %c0_i32, %c0_i32_0 : i32, i32, i32
  }
  func.func @transform_2(%arg0: i32, %arg1: i32) -> (i32, i32) {
    %c0_i32 = arith.constant 0 : i32
    %c0_i32_0 = arith.constant 0 : i32
    return %arg1, %c0_i32 : i32, i32
  }
  func.func @transform_3(%arg0: i32, %arg1: i32) -> (i32, i32) {
    %c0_i32 = arith.constant 0 : i32
    %c0_i32_0 = arith.constant 0 : i32
    return %arg0, %c0_i32 : i32, i32
  }
}

module attributes {stable_mosaic.version = 11 : i64} {
  func.func @_nemotron_mlp_kernel(%arg0: i32, %arg1: i32, %arg2: memref<256x256xbf16, #tpu.memory_space<vmem>>, %arg3: memref<1x256x256xbf16, #tpu.memory_space<vmem>>, %arg4: memref<256x256xbf16, #tpu.memory_space<vmem>>, %arg5: memref<256x256xbf16, #tpu.memory_space<vmem>>, %arg6: memref<256x256xf32, #tpu.memory_space<vmem>>) attributes {dimension_semantics = [#tpu.dimension_semantics<parallel>, #tpu.dimension_semantics<arbitrary>], iteration_bounds = array<i64: 1, 2>, scalar_prefetch = 0 : i64, scratch_operands = 1 : i64, tpu.core_type = #tpu.core_type<tc>, window_params = [{transform_indices = @transform_0, window_bounds = array<i64: 256, 256>}, {transform_indices = @transform_1, window_bounds = array<i64: 1, 256, 256>}, {transform_indices = @transform_2, window_bounds = array<i64: 256, 256>}, {transform_indices = @transform_3, window_bounds = array<i64: 256, 256>}]} {
    %c0 = arith.constant 0 : index
    %c0_0 = arith.constant 0 : index
    %0 = vector.load %arg2[%c0, %c0_0] : memref<256x256xbf16, #tpu.memory_space<vmem>>, vector<256x256xbf16>
    %c0_1 = arith.constant 0 : index
    %c0_2 = arith.constant 0 : index
    %c0_3 = arith.constant 0 : index
    %1 = vector.load %arg3[%c0_1, %c0_2, %c0_3] : memref<1x256x256xbf16, #tpu.memory_space<vmem>>, vector<1x256x256xbf16>
    %2 = vector.shape_cast %1 : vector<1x256x256xbf16> to vector<256x256xbf16>
    %cst = arith.constant dense<0.000000e+00> : vector<256x256xf32>
    %3 = tpu.matmul %0, %2, %cst {dimension_numbers = #tpu.dot_dimension_numbers<[1], [0], [0], [1], [0, 0, 1, 1], [], []>} : vector<256x256xbf16>, vector<256x256xbf16>, vector<256x256xf32> -> vector<256x256xf32>
    %cst_4 = arith.constant 0.000000e+00 : f32
    %4 = vector.broadcast %cst_4 : f32 to vector<256x256xf32>
    %5 = arith.maximumf %3, %4 : vector<256x256xf32>
    %6 = arith.mulf %5, %5 : vector<256x256xf32>
    %7 = arith.truncf %6 : vector<256x256xf32> to vector<256x256xbf16>
    %c0_5 = arith.constant 0 : index
    %c0_6 = arith.constant 0 : index
    %8 = vector.load %arg4[%c0_5, %c0_6] : memref<256x256xbf16, #tpu.memory_space<vmem>>, vector<256x256xbf16>
    %cst_7 = arith.constant dense<0.000000e+00> : vector<256x256xf32>
    %9 = tpu.matmul %7, %8, %cst_7 {dimension_numbers = #tpu.dot_dimension_numbers<[1], [0], [0], [1], [0, 0, 1, 1], [], []>} : vector<256x256xbf16>, vector<256x256xbf16>, vector<256x256xf32> -> vector<256x256xf32>
    %c0_i32 = arith.constant 0 : i32
    %10 = arith.cmpi eq, %arg1, %c0_i32 : i32
    %11 = arith.extui %10 : i1 to i32
    %c0_i32_8 = arith.constant 0 : i32
    %12 = arith.cmpi ne, %11, %c0_i32_8 : i32
    scf.if %12 {
      %c0_12 = arith.constant 0 : index
      %c0_13 = arith.constant 0 : index
      %19 = vector.load %arg6[%c0_12, %c0_13] : memref<256x256xf32, #tpu.memory_space<vmem>>, vector<256x256xf32>
      tpu.vector_store %arg6[%c0_12, %c0_13], %9 {strides = array<i32>} : memref<256x256xf32, #tpu.memory_space<vmem>>, vector<256x256xf32>,
    } else {
    }
    %c0_i32_9 = arith.constant 0 : i32
    %13 = arith.cmpi sgt, %arg1, %c0_i32_9 : i32
    %14 = arith.extui %13 : i1 to i32
    %c0_i32_10 = arith.constant 0 : i32
    %15 = arith.cmpi ne, %14, %c0_i32_10 : i32
    scf.if %15 {
      %c0_12 = arith.constant 0 : index
      %c0_13 = arith.constant 0 : index
      %19 = vector.load %arg6[%c0_12, %c0_13] : memref<256x256xf32, #tpu.memory_space<vmem>>, vector<256x256xf32>
      %20 = arith.addf %19, %9 : vector<256x256xf32>
      %c0_14 = arith.constant 0 : index
      %c0_15 = arith.constant 0 : index
      %21 = vector.load %arg6[%c0_14, %c0_15] : memref<256x256xf32, #tpu.memory_space<vmem>>, vector<256x256xf32>
      tpu.vector_store %arg6[%c0_14, %c0_15], %20 {strides = array<i32>} : memref<256x256xf32, #tpu.memory_space<vmem>>, vector<256x256xf32>,
    } else {
    }
    %c1_i32 = arith.constant 1 : i32
    %16 = arith.cmpi eq, %arg1, %c1_i32 : i32
    %17 = arith.extui %16 : i1 to i32
    %c0_i32_11 = arith.constant 0 : i32
    %18 = arith.cmpi ne, %17, %c0_i32_11 : i32
    scf.if %18 {
      %c0_12 = arith.constant 0 : index
      %c0_13 = arith.constant 0 : index
      %19 = vector.load %arg6[%c0_12, %c0_13] : memref<256x256xf32, #tpu.memory_space<vmem>>, vector<256x256xf32>
      %20 = arith.truncf %19 : vector<256x256xf32> to vector<256x256xbf16>
      %c0_14 = arith.constant 0 : index
      %c0_15 = arith.constant 0 : index
      %21 = vector.load %arg5[%c0_14, %c0_15] : memref<256x256xbf16, #tpu.memory_space<vmem>>, vector<256x256xbf16>
      tpu.vector_store %arg5[%c0_14, %c0_15], %20 {strides = array<i32>} : memref<256x256xbf16, #tpu.memory_space<vmem>>, vector<256x256xbf16>,
    } else {
    }
    return
  }
  func.func @transform_0(%arg0: i32, %arg1: i32) -> (i32, i32) {
    %c0_i32 = arith.constant 0 : i32
    %c0_i32_0 = arith.constant 0 : i32
    return %arg0, %c0_i32 : i32, i32
  }
  func.func @transform_1(%arg0: i32, %arg1: i32) -> (i32, i32, i32) {
    %c0_i32 = arith.constant 0 : i32
    %c0_i32_0 = arith.constant 0 : i32
    %c0_i32_1 = arith.constant 0 : i32
    return %arg1, %c0_i32, %c0_i32_0 : i32, i32, i32
  }
  func.func @transform_2(%arg0: i32, %arg1: i32) -> (i32, i32) {
    %c0_i32 = arith.constant 0 : i32
    %c0_i32_0 = arith.constant 0 : i32
    return %arg1, %c0_i32 : i32, i32
  }
  func.func @transform_3(%arg0: i32, %arg1: i32) -> (i32, i32) {
    %c0_i32 = arith.constant 0 : i32
    %c0_i32_0 = arith.constant 0 : i32
    return %arg0, %c0_i32 : i32, i32
  }
}

</mosaic_0001>

<llo_original>
// kernel: tpu_custom_call.1
$region0: #{tpu_custom_call.1}
  #allocation0 [shape = 'u32[]', space=smem, size = 0x4, offset = 0x4, fixed_abs, tag = 'smem constant byte address 0x4 - core index']
  #allocation1 [shape = 'u32[72,128]{1,0:T(1,128)}', space=vmem, size = 0x9000, scoped, tag = 'internal scratch']
  #allocation2 [shape = 'f32[256,256]{1,0:T(8,128)}', space=vmem, size = 0x40000, scoped, tag = 'scratch operand']
  %s0 = inlined_call_operand.hbm [shape: bf16[256,256], index: 0, kind: input, shape index: {}]
  %s1 = inlined_call_operand.hbm [shape: bf16[2,256,256], index: 1, kind: input, shape index: {}]
  %s2 = inlined_call_operand.hbm [shape: bf16[512,256], index: 2, kind: input, shape index: {}]
  %s3 = inlined_call_operand.hbm [shape: bf16[256,256], index: 3, kind: output, shape index: {}]
  %s4 = sld [smem:[#allocation0]]
  $region69: #{tpu_custom_call.1} parent=0
    _
  %s6 = ssub.s32 1, %s4
  %s7 = scalar_select 0, %s6, %s4
  $region1: #{tpu_custom_call.1} parent=0
    #allocation3 [shape = 'u8[131072]{0}', space=vmem, size = 0x20000, scoped, tag = 'input window, operand 0, single buffered']
    #allocation4 [shape = 's32[2]{0}', space=sflag, size = 0x8, scoped, tag = 'scoped memory for tpu_custom_call.1']
    #allocation5 [shape = 's32[2]{0}', space=sflag, size = 0x8, scoped, tag = 'scoped memory for tpu_custom_call.1']
    #allocation6 [shape = 'u8[262144]{0}', space=vmem, size = 0x40000, scoped, tag = 'input window, operand 1']
    #allocation7 [shape = 's32[2]{0}', space=sflag, size = 0x8, scoped, tag = 'scoped memory for tpu_custom_call.1']
    #allocation8 [shape = 'u8[262144]{0}', space=vmem, size = 0x40000, scoped, tag = 'input window, operand 2']
    #allocation9 [shape = 'u8[131072]{0}', space=vmem, size = 0x20000, scoped, tag = 'output window, operand 0, single buffered']
    %8 = vsyncpa [#allocation4], 0
    %9 = vsyncpa [#allocation7], 0
    %s10 = scalar_lea.sflag [#allocation7], 1
    %11 = vsyncpa %s10, 0
    %12 = vsyncpa [#allocation5], 0
    loop: start=0, step=1, limit=4
    $region2: #{tpu_custom_call.1} parent=1 // loop_pre_header
      _
    $region3: #{tpu_custom_call.1} parent=1 // loop_header
      %s14 = sphi 0, %s18
      %p15 = scmp.ge.s32.totalorder %s14, 4
      %s21 = sphi 0, %s33
      %s22 = sphi 0, %s29
      %s23 = sphi 0, %s21
      %s24 = sphi 0, %s22
      %s25 = sphi 0, %s23
      %s26 = sphi 0, %s24
      %s36 = sphi 0, %s38
      %s39 = sphi 0, %s36
      %s40 = sphi 0, %s39
      %s56 = sphi 0, %s40
      %s62 = sphi 0, %s64
      %s65 = sphi 0, %s62
      %s66 = sphi 0, %s65
      %s82 = sphi 0, %s66
      %s88 = sphi 0, %s90
      %s91 = sphi 0, %s88
      %s92 = sphi 0, %s91
      %s108 = sphi 0, %s92
      %s114 = sphi 0, %s116
      %s117 = sphi 0, %s114
      %s118 = sphi 0, %s117
      %s134 = sphi 0, %s118
    $region4: #{tpu_custom_call.1} parent=1 // loop_header_branch
      %17 = sbr.rel (%p15) target = $region8
    $region5: #{tpu_custom_call.1} parent=1 // loop_body
      %s19 = ssub.s32 %s14, 1
      %s20 = ssub.s32 %s14, 2
      %s27 = sadd.s32 1, %s22
      %p28 = scmp.ge.s32.totalorder %s27, 2
      %s29 = scalar_select %p28, 0, %s27
      %s30 = sadd.s32 1, %s21
      %s31 = scalar_select %p28, %s30, %s21
      %p32 = scmp.ge.s32.totalorder %s31, 1
      %s33 = scalar_select %p32, 0, %s31
      %s34 = ssub.s32 %s21, %s33
      %p35 = scmp.eq.s32.totalorder %s34, 0
      %s37 = sadd.s32 %s36, 1
      %s38 = scalar_select %p35, %s36, %s37
      %p41 = pneg %p35
      %p42 = scmp.eq.s32.totalorder %s14, 1
      %p43 = por %p41, %p42
      %p44 = scmp.ne.s32.totalorder %s36, %s39
      %p45 = scmp.eq.s32.totalorder %s14, 0
      %p46 = por %p44, %p45
      %p47 = scmp.ne.s32.totalorder %s36, %s39
      %p48 = scmp.eq.s32.totalorder %s19, 1
      %p49 = por %p47, %p48
      %p50 = scmp.ne.s32.totalorder %s39, %s40
      %p51 = scmp.eq.s32.totalorder %s19, 0
      %p52 = por %p50, %p51
      %p53 = scmp.ne.s32.totalorder %s39, %s40
      %p54 = scmp.eq.s32.totalorder %s20, 1
      %p55 = por %p53, %p54
      %p57 = scmp.ne.s32.totalorder %s40, %s56
      %p58 = scmp.eq.s32.totalorder %s20, 0
      %p59 = por %p57, %p58
      %s60 = ssub.s32 %s22, %s29
      %p61 = scmp.eq.s32.totalorder %s60, 0
      %s63 = sadd.s32 %s62, 1
      %s64 = scalar_select %p61, %s62, %s63
      %p67 = pneg %p61
      %p68 = scmp.eq.s32.totalorder %s14, 1
      %p69 = por %p67, %p68
      %p70 = scmp.ne.s32.totalorder %s62, %s65
      %p71 = scmp.eq.s32.totalorder %s14, 0
      %p72 = por %p70, %p71
      %p73 = scmp.ne.s32.totalorder %s62, %s65
      %p74 = scmp.eq.s32.totalorder %s19, 1
      %p75 = por %p73, %p74
      %p76 = scmp.ne.s32.totalorder %s65, %s66
      %p77 = scmp.eq.s32.totalorder %s19, 0
      %p78 = por %p76, %p77
      %p79 = scmp.ne.s32.totalorder %s65, %s66
      %p80 = scmp.eq.s32.totalorder %s20, 1
      %p81 = por %p79, %p80
      %p83 = scmp.ne.s32.totalorder %s66, %s82
      %p84 = scmp.eq.s32.totalorder %s20, 0
      %p85 = por %p83, %p84
      %s86 = ssub.s32 %s22, %s29
      %p87 = scmp.eq.s32.totalorder %s86, 0
      %s89 = sadd.s32 %s88, 1
      %s90 = scalar_select %p87, %s88, %s89
      %p93 = pneg %p87
      %p94 = scmp.eq.s32.totalorder %s14, 1
      %p95 = por %p93, %p94
      %p96 = scmp.ne.s32.totalorder %s88, %s91
      %p97 = scmp.eq.s32.totalorder %s14, 0
      %p98 = por %p96, %p97
      %p99 = scmp.ne.s32.totalorder %s88, %s91
      %p100 = scmp.eq.s32.totalorder %s19, 1
      %p101 = por %p99, %p100
      %p102 = scmp.ne.s32.totalorder %s91, %s92
      %p103 = scmp.eq.s32.totalorder %s19, 0
      %p104 = por %p102, %p103
      %p105 = scmp.ne.s32.totalorder %s91, %s92
      %p106 = scmp.eq.s32.totalorder %s20, 1
      %p107 = por %p105, %p106
      %p109 = scmp.ne.s32.totalorder %s92, %s108
      %p110 = scmp.eq.s32.totalorder %s20, 0
      %p111 = por %p109, %p110
      %s112 = ssub.s32 %s21, %s33
      %p113 = scmp.eq.s32.totalorder %s112, 0
      %s115 = sadd.s32 %s114, 1
      %s116 = scalar_select %p113, %s114, %s115
      %p119 = pneg %p113
      %p120 = scmp.eq.s32.totalorder %s14, 1
      %p121 = por %p119, %p120
      %p122 = scmp.ne.s32.totalorder %s114, %s117
      %p123 = scmp.eq.s32.totalorder %s14, 0
      %p124 = por %p122, %p123
      %p125 = scmp.ne.s32.totalorder %s114, %s117
      %p126 = scmp.eq.s32.totalorder %s19, 1
      %p127 = por %p125, %p126
      %p128 = scmp.ne.s32.totalorder %s117, %s118
      %p129 = scmp.eq.s32.totalorder %s19, 0
      %p130 = por %p128, %p129
      %p131 = scmp.ne.s32.totalorder %s117, %s118
      %p132 = scmp.eq.s32.totalorder %s20, 1
      %p133 = por %p131, %p132
      %p135 = scmp.ne.s32.totalorder %s118, %s134
      %p136 = scmp.eq.s32.totalorder %s20, 0
      %p137 = por %p135, %p136
      %p138 = scmp.le.s32.totalorder 1, %s14
      %p139 = scmp.lt.s32.totalorder %s14, 3
      %p140 = pnand %p138, %p139
      %p141 = pneg %p140
      // Predicated region
      $region9: #{tpu_custom_call.1} parent=5 // pred_check
        _
      $region10: #{tpu_custom_call.1} parent=5 // pred_check_branch
        %143 = sbr.rel (%p140) target = $region12
      $region11: #{tpu_custom_call.1} parent=5 // pred_region
        %s144 = ssub.s32 %s14, 1
        // Predicated region
        $region13: #{tpu_custom_call.1} parent=11 // pred_check
          %p145 = pneg %p52
        $region14: #{tpu_custom_call.1} parent=11 // pred_check_branch
          %147 = sbr.rel (%p145) target = $region16
        $region15: #{tpu_custom_call.1} parent=11 // pred_region
          %s148 = smul.u32 32, %s23
          %150 = vsyncadd [#allocation4], 0
          %s151 = smul.addr %s148, 2
          %s152 = smul.addr %s151, 4
          %s153 = scalar_lea.hbm %s0, %s152
          %s154 = sshll.u32 %s153, 4
          %s155 = int_to_ptr.hbm [resolvable:$true] %s154
          %s156 = sshll.u32 [#allocation3], 4
          %s157 = int_to_ptr.vmem [resolvable:$true] %s156
          %162 = dma.hbm_to_vmem [thread:$0]  %s155, 4096, %s157, [#allocation4], 128, 128, 8
        $region16: #{tpu_custom_call.1} parent=11 // pred_fallthru
          _
      $region12: #{tpu_custom_call.1} parent=5 // pred_fallthru
        _
      %p163 = scmp.lt.s32.totalorder %s14, 2
      // Predicated region
      $region17: #{tpu_custom_call.1} parent=5 // pred_check
        %p164 = pneg %p163
      $region18: #{tpu_custom_call.1} parent=5 // pred_check_branch
        %166 = sbr.rel (%p164) target = $region20
      $region19: #{tpu_custom_call.1} parent=5 // pred_region
        // Predicated region
        $region21: #{tpu_custom_call.1} parent=19 // pred_check
          %p167 = pneg %p72
        $region22: #{tpu_custom_call.1} parent=19 // pred_check_branch
          %169 = sbr.rel (%p167) target = $region24
        $region23: #{tpu_custom_call.1} parent=19 // pred_region
          %s170 = sand.u32 %s14, 1
          %s171 = scalar_lea.sflag [#allocation7], %s170
          %s172 = sand.u32 %s62, 1
          %s173 = smul.addr %s172, 256
          %s174 = scalar_lea.vmem [#allocation6], %s173
          %176 = vsyncadd %s171, 0
          %s177 = smul.addr %s22, 64
          %s178 = smul.addr %s177, 4
          %s179 = scalar_lea.hbm %s1, %s178
          %s180 = sshll.u32 %s179, 4
          %s181 = int_to_ptr.hbm [resolvable:$true] %s180
          %s182 = sshll.u32 %s174, 4
          %s183 = int_to_ptr.vmem [resolvable:$true] %s182
          %188 = dma.hbm_to_vmem [thread:$0]  %s181, 4096, %s183, %s171, 128, 128, 8
        $region24: #{tpu_custom_call.1} parent=19 // pred_fallthru
          _
        // Predicated region
        $region25: #{tpu_custom_call.1} parent=19 // pred_check
          %p189 = pneg %p98
        $region26: #{tpu_custom_call.1} parent=19 // pred_check_branch
          %191 = sbr.rel (%p189) target = $region28
        $region27: #{tpu_custom_call.1} parent=19 // pred_region
          %s192 = sand.u32 %s14, 1
          %s193 = scalar_lea.sflag [#allocation7], %s192
          %s194 = sand.u32 %s88, 1
          %s195 = smul.addr %s194, 256
          %s196 = scalar_lea.vmem [#allocation8], %s195
          %s197 = smul.u32 32, %s22
          %199 = vsyncadd %s193, 0
          %s200 = smul.addr %s197, 2
          %s201 = smul.addr %s200, 4
          %s202 = scalar_lea.hbm %s2, %s201
          %s203 = sshll.u32 %s202, 4
          %s204 = int_to_ptr.hbm [resolvable:$true] %s203
          %s205 = sshll.u32 %s196, 4
          %s206 = int_to_ptr.vmem [resolvable:$true] %s205
          %211 = dma.hbm_to_vmem [thread:$0]  %s204, 4096, %s206, %s193, 128, 128, 8
        $region28: #{tpu_custom_call.1} parent=19 // pred_fallthru
          _
      $region20: #{tpu_custom_call.1} parent=5 // pred_fallthru
        _
      %p212 = scmp.le.s32.totalorder 1, %s14
      %p213 = scmp.lt.s32.totalorder %s14, 3
      %p214 = pnand %p212, %p213
      %p215 = pneg %p214
      // Predicated region
      $region29: #{tpu_custom_call.1} parent=5 // pred_check
        _
      $region30: #{tpu_custom_call.1} parent=5 // pred_check_branch
        %217 = sbr.rel (%p214) target = $region32
      $region31: #{tpu_custom_call.1} parent=5 // pred_region
        %s218 = ssub.s32 %s14, 1
        // Predicated region
        $region33: #{tpu_custom_call.1} parent=31 // pred_check
          %p219 = pneg %p52
        $region34: #{tpu_custom_call.1} parent=31 // pred_check_branch
          %221 = sbr.rel (%p219) target = $region36
        $region35: #{tpu_custom_call.1} parent=31 // pred_region
          %223 = dma.done [#allocation4], 4096
        $region36: #{tpu_custom_call.1} parent=31 // pred_fallthru
          _
        %s224 = sand.u32 %s19, 1
        %s225 = scalar_lea.sflag [#allocation7], %s224
        %s226 = sand.u32 %s65, 1
        %s227 = smul.addr %s226, 256
        %s228 = scalar_lea.vmem [#allocation6], %s227
        // Predicated region
        $region37: #{tpu_custom_call.1} parent=31 // pred_check
          %p229 = pneg %p78
        $region38: #{tpu_custom_call.1} parent=31 // pred_check_branch
          %231 = sbr.rel (%p229) target = $region40
        $region39: #{tpu_custom_call.1} parent=31 // pred_region
          %233 = dma.done %s225, 4096
        $region40: #{tpu_custom_call.1} parent=31 // pred_fallthru
          _
        %s234 = sand.u32 %s19, 1
        %s235 = scalar_lea.sflag [#allocation7], %s234
        %s236 = sand.u32 %s91, 1
        %s237 = smul.addr %s236, 256
        %s238 = scalar_lea.vmem [#allocation8], %s237
        // Predicated region
        $region41: #{tpu_custom_call.1} parent=31 // pred_check
          %p239 = pneg %p104
        $region42: #{tpu_custom_call.1} parent=31 // pred_check_branch
          %241 = sbr.rel (%p239) target = $region44
        $region43: #{tpu_custom_call.1} parent=31 // pred_region
          %243 = dma.done %s235, 4096
        $region44: #{tpu_custom_call.1} parent=31 // pred_fallthru
          _
        %p244 = pneg %p52
        %p245 = pneg %p49
        %s246 = sand.u32 %s19, 1
        %s247 = scalar_lea.sflag [#allocation7], %s246
        %s248 = sand.u32 %s65, 1
        %s249 = smul.addr %s248, 256
        %s250 = scalar_lea.vmem [#allocation6], %s249
        %p251 = pneg %p78
        %p252 = pneg %p75
        %s253 = sand.u32 %s19, 1
        %s254 = scalar_lea.sflag [#allocation7], %s253
        %s255 = sand.u32 %s91, 1
        %s256 = smul.addr %s255, 256
        %s257 = scalar_lea.vmem [#allocation8], %s256
        %p258 = pneg %p104
        %p259 = pneg %p101
        %p260 = pneg %p130
        %p261 = pneg %p127
        %s262 = smul.u32 32, %s23
        %s263 = smul.u32 32, %s24
        %s264 = smul.u32 32, %s23
        %v265 = vld [vmem:[#allocation3] sm:$0xff]
        %v266 = vld [vmem:[#allocation3 + $0x8] sm:$0xff]
        %v267 = vld [vmem:[#allocation3 + $0x10] sm:$0xff]
        %v268 = vld [vmem:[#allocation3 + $0x18] sm:$0xff]
        %v269 = vld [vmem:[#allocation3 + $0x20] sm:$0xff]
        %v270 = vld [vmem:[#allocation3 + $0x28] sm:$0xff]
        %v271 = vld [vmem:[#allocation3 + $0x30] sm:$0xff]
        %v272 = vld [vmem:[#allocation3 + $0x38] sm:$0xff]
        %v273 = vld [vmem:[#allocation3 + $0x40] sm:$0xff]
        %v274 = vld [vmem:[#allocation3 + $0x48] sm:$0xff]
        %v275 = vld [vmem:[#allocation3 + $0x50] sm:$0xff]
        %v276 = vld [vmem:[#allocation3 + $0x58] sm:$0xff]
        %v277 = vld [vmem:[#allocation3 + $0x60] sm:$0xff]
        %v278 = vld [vmem:[#allocation3 + $0x68] sm:$0xff]
        %v279 = vld [vmem:[#allocation3 + $0x70] sm:$0xff]
        %v280 = vld [vmem:[#allocation3 + $0x78] sm:$0xff]
        %v281 = vld [vmem:[#allocation3 + $0x80] sm:$0xff]
        %v282 = vld [vmem:[#allocation3 + $0x88] sm:$0xff]
        %v283 = vld [vmem:[#allocation3 + $0x90] sm:$0xff]
        %v284 = vld [vmem:[#allocation3 + $0x98] sm:$0xff]
        %v285 = vld [vmem:[#allocation3 + $0xa0] sm:$0xff]
        %v286 = vld [vmem:[#allocation3 + $0xa8] sm:$0xff]
        %v287 = vld [vmem:[#allocation3 + $0xb0] sm:$0xff]
        %v288 = vld [vmem:[#allocation3 + $0xb8] sm:$0xff]
        %v289 = vld [vmem:[#allocation3 + $0xc0] sm:$0xff]
        %v290 = vld [vmem:[#allocation3 + $0xc8] sm:$0xff]
        %v291 = vld [vmem:[#allocation3 + $0xd0] sm:$0xff]
        %v292 = vld [vmem:[#allocation3 + $0xd8] sm:$0xff]
        %v293 = vld [vmem:[#allocation3 + $0xe0] sm:$0xff]
        %v294 = vld [vmem:[#allocation3 + $0xe8] sm:$0xff]
        %v295 = vld [vmem:[#allocation3 + $0xf0] sm:$0xff]
        %v296 = vld [vmem:[#allocation3 + $0xf8] sm:$0xff]
        %v297 = vld [vmem:[%s228] sm:$0xff]
        %v298 = vld [vmem:[%s228 + $0x8] sm:$0xff]
        %v299 = vld [vmem:[%s228 + $0x10] sm:$0xff]
        %v300 = vld [vmem:[%s228 + $0x18] sm:$0xff]
        %v301 = vld [vmem:[%s228 + $0x20] sm:$0xff]
        %v302 = vld [vmem:[%s228 + $0x28] sm:$0xff]
        %v303 = vld [vmem:[%s228 + $0x30] sm:$0xff]
        %v304 = vld [vmem:[%s228 + $0x38] sm:$0xff]
        %v305 = vld [vmem:[%s228 + $0x40] sm:$0xff]
        %v306 = vld [vmem:[%s228 + $0x48] sm:$0xff]
        %v307 = vld [vmem:[%s228 + $0x50] sm:$0xff]
        %v308 = vld [vmem:[%s228 + $0x58] sm:$0xff]
        %v309 = vld [vmem:[%s228 + $0x60] sm:$0xff]
        %v310 = vld [vmem:[%s228 + $0x68] sm:$0xff]
        %v311 = vld [vmem:[%s228 + $0x70] sm:$0xff]
        %v312 = vld [vmem:[%s228 + $0x78] sm:$0xff]
        %v313 = vld [vmem:[%s228 + $0x80] sm:$0xff]
        %v314 = vld [vmem:[%s228 + $0x88] sm:$0xff]
        %v315 = vld [vmem:[%s228 + $0x90] sm:$0xff]
        %v316 = vld [vmem:[%s228 + $0x98] sm:$0xff]
        %v317 = vld [vmem:[%s228 + $0xa0] sm:$0xff]
        %v318 = vld [vmem:[%s228 + $0xa8] sm:$0xff]
        %v319 = vld [vmem:[%s228 + $0xb0] sm:$0xff]
        %v320 = vld [vmem:[%s228 + $0xb8] sm:$0xff]
        %v321 = vld [vmem:[%s228 + $0xc0] sm:$0xff]
        %v322 = vld [vmem:[%s228 + $0xc8] sm:$0xff]
        %v323 = vld [vmem:[%s228 + $0xd0] sm:$0xff]
        %v324 = vld [vmem:[%s228 + $0xd8] sm:$0xff]
        %v325 = vld [vmem:[%s228 + $0xe0] sm:$0xff]
        %v326 = vld [vmem:[%s228 + $0xe8] sm:$0xff]
        %v327 = vld [vmem:[%s228 + $0xf0] sm:$0xff]
        %v328 = vld [vmem:[%s228 + $0xf8] sm:$0xff]
        %v361 = vunpack.c.l.b16 %v265
        %v362 = vunpack.c.h.b16 %v265
        %v363 = vunpack.c.l.b16 %v266
        %v364 = vunpack.c.h.b16 %v266
        %v365 = vunpack.c.l.b16 %v267
        %v366 = vunpack.c.h.b16 %v267
        %v367 = vunpack.c.l.b16 %v268
        %v368 = vunpack.c.h.b16 %v268
        %v369 = vunpack.c.l.b16 %v269
        %v370 = vunpack.c.h.b16 %v269
        %v371 = vunpack.c.l.b16 %v270
        %v372 = vunpack.c.h.b16 %v270
        %v373 = vunpack.c.l.b16 %v271
        %v374 = vunpack.c.h.b16 %v271
        %v375 = vunpack.c.l.b16 %v272
        %v376 = vunpack.c.h.b16 %v272
        %v377 = vunpack.c.l.b16 %v273
        %v378 = vunpack.c.h.b16 %v273
        %v379 = vunpack.c.l.b16 %v274
        %v380 = vunpack.c.h.b16 %v274
        %v381 = vunpack.c.l.b16 %v275
        %v382 = vunpack.c.h.b16 %v275
        %v383 = vunpack.c.l.b16 %v276
        %v384 = vunpack.c.h.b16 %v276
        %v385 = vunpack.c.l.b16 %v277
        %v386 = vunpack.c.h.b16 %v277
        %v387 = vunpack.c.l.b16 %v278
        %v388 = vunpack.c.h.b16 %v278
        %v389 = vunpack.c.l.b16 %v279
        %v390 = vunpack.c.h.b16 %v279
        %v391 = vunpack.c.l.b16 %v280
        %v392 = vunpack.c.h.b16 %v280
        %v393 = vunpack.c.l.b16 %v281
        %v394 = vunpack.c.h.b16 %v281
        %v395 = vunpack.c.l.b16 %v282
        %v396 = vunpack.c.h.b16 %v282
        %v397 = vunpack.c.l.b16 %v283
        %v398 = vunpack.c.h.b16 %v283
        %v399 = vunpack.c.l.b16 %v284
        %v400 = vunpack.c.h.b16 %v284
        %v401 = vunpack.c.l.b16 %v285
        %v402 = vunpack.c.h.b16 %v285
        %v403 = vunpack.c.l.b16 %v286
        %v404 = vunpack.c.h.b16 %v286
        %v405 = vunpack.c.l.b16 %v287
        %v406 = vunpack.c.h.b16 %v287
        %v407 = vunpack.c.l.b16 %v288
        %v408 = vunpack.c.h.b16 %v288
        %v409 = vunpack.c.l.b16 %v289
        %v410 = vunpack.c.h.b16 %v289
        %v411 = vunpack.c.l.b16 %v290
        %v412 = vunpack.c.h.b16 %v290
        %v413 = vunpack.c.l.b16 %v291
        %v414 = vunpack.c.h.b16 %v291
        %v415 = vunpack.c.l.b16 %v292
        %v416 = vunpack.c.h.b16 %v292
        %v417 = vunpack.c.l.b16 %v293
        %v418 = vunpack.c.h.b16 %v293
        %v419 = vunpack.c.l.b16 %v294
        %v420 = vunpack.c.h.b16 %v294
        %v421 = vunpack.c.l.b16 %v295
        %v422 = vunpack.c.h.b16 %v295
        %v423 = vunpack.c.l.b16 %v296
        %v424 = vunpack.c.h.b16 %v296
        %v425 = vpack.c.b16 %v363, %v361
        %v426 = vpack.c.b16 %v364, %v362
        %v427 = vpack.c.b16 %v367, %v365
        %v428 = vpack.c.b16 %v368, %v366
        %v429 = vpack.c.b16 %v371, %v369
        %v430 = vpack.c.b16 %v372, %v370
        %v431 = vpack.c.b16 %v375, %v373
        %v432 = vpack.c.b16 %v376, %v374
        %v433 = vpack.c.b16 %v379, %v377
        %v434 = vpack.c.b16 %v380, %v378
        %v435 = vpack.c.b16 %v383, %v381
        %v436 = vpack.c.b16 %v384, %v382
        %v437 = vpack.c.b16 %v387, %v385
        %v438 = vpack.c.b16 %v388, %v386
        %v439 = vpack.c.b16 %v391, %v389
        %v440 = vpack.c.b16 %v392, %v390
        %v441 = vpack.c.b16 %v395, %v393
        %v442 = vpack.c.b16 %v396, %v394
        %v443 = vpack.c.b16 %v399, %v397
        %v444 = vpack.c.b16 %v400, %v398
        %v445 = vpack.c.b16 %v403, %v401
        %v446 = vpack.c.b16 %v404, %v402
        %v447 = vpack.c.b16 %v407, %v405
        %v448 = vpack.c.b16 %v408, %v406
        %v449 = vpack.c.b16 %v411, %v409
        %v450 = vpack.c.b16 %v412, %v410
        %v451 = vpack.c.b16 %v415, %v413
        %v452 = vpack.c.b16 %v416, %v414
        %v453 = vpack.c.b16 %v419, %v417
        %v454 = vpack.c.b16 %v420, %v418
        %v455 = vpack.c.b16 %v423, %v421
        %v456 = vpack.c.b16 %v424, %v422
        %v521 = vunpack.c.l.b16 %v297
        %v522 = vunpack.c.h.b16 %v297
        %v523 = vunpack.c.l.b16 %v298
        %v524 = vunpack.c.h.b16 %v298
        %v525 = vunpack.c.l.b16 %v299
        %v526 = vunpack.c.h.b16 %v299
        %v527 = vunpack.c.l.b16 %v300
        %v528 = vunpack.c.h.b16 %v300
        %v529 = vunpack.c.l.b16 %v301
        %v530 = vunpack.c.h.b16 %v301
        %v531 = vunpack.c.l.b16 %v302
        %v532 = vunpack.c.h.b16 %v302
        %v533 = vunpack.c.l.b16 %v303
        %v534 = vunpack.c.h.b16 %v303
        %v535 = vunpack.c.l.b16 %v304
        %v536 = vunpack.c.h.b16 %v304
        %v537 = vunpack.c.l.b16 %v305
        %v538 = vunpack.c.h.b16 %v305
        %v539 = vunpack.c.l.b16 %v306
        %v540 = vunpack.c.h.b16 %v306
        %v541 = vunpack.c.l.b16 %v307
        %v542 = vunpack.c.h.b16 %v307
        %v543 = vunpack.c.l.b16 %v308
        %v544 = vunpack.c.h.b16 %v308
        %v545 = vunpack.c.l.b16 %v309
        %v546 = vunpack.c.h.b16 %v309
        %v547 = vunpack.c.l.b16 %v310
        %v548 = vunpack.c.h.b16 %v310
        %v549 = vunpack.c.l.b16 %v311
        %v550 = vunpack.c.h.b16 %v311
        %v551 = vunpack.c.l.b16 %v312
        %v552 = vunpack.c.h.b16 %v312
        %v553 = vunpack.c.l.b16 %v313
        %v554 = vunpack.c.h.b16 %v313
        %v555 = vunpack.c.l.b16 %v314
        %v556 = vunpack.c.h.b16 %v314
        %v557 = vunpack.c.l.b16 %v315
        %v558 = vunpack.c.h.b16 %v315
        %v559 = vunpack.c.l.b16 %v316
        %v560 = vunpack.c.h.b16 %v316
        %v561 = vunpack.c.l.b16 %v317
        %v562 = vunpack.c.h.b16 %v317
        %v563 = vunpack.c.l.b16 %v318
        %v564 = vunpack.c.h.b16 %v318
        %v565 = vunpack.c.l.b16 %v319
        %v566 = vunpack.c.h.b16 %v319
        %v567 = vunpack.c.l.b16 %v320
        %v568 = vunpack.c.h.b16 %v320
        %v569 = vunpack.c.l.b16 %v321
        %v570 = vunpack.c.h.b16 %v321
        %v571 = vunpack.c.l.b16 %v322
        %v572 = vunpack.c.h.b16 %v322
        %v573 = vunpack.c.l.b16 %v323
        %v574 = vunpack.c.h.b16 %v323
        %v575 = vunpack.c.l.b16 %v324
        %v576 = vunpack.c.h.b16 %v324
        %v577 = vunpack.c.l.b16 %v325
        %v578 = vunpack.c.h.b16 %v325
        %v579 = vunpack.c.l.b16 %v326
        %v580 = vunpack.c.h.b16 %v326
        %v581 = vunpack.c.l.b16 %v327
        %v582 = vunpack.c.h.b16 %v327
        %v583 = vunpack.c.l.b16 %v328
        %v584 = vunpack.c.h.b16 %v328
        %v585 = vpack.c.b16 %v523, %v521
        %v586 = vpack.c.b16 %v524, %v522
        %v587 = vpack.c.b16 %v527, %v525
        %v588 = vpack.c.b16 %v528, %v526
        %v589 = vpack.c.b16 %v531, %v529
        %v590 = vpack.c.b16 %v532, %v530
        %v591 = vpack.c.b16 %v535, %v533
        %v592 = vpack.c.b16 %v536, %v534
        %v593 = vpack.c.b16 %v539, %v537
        %v594 = vpack.c.b16 %v540, %v538
        %v595 = vpack.c.b16 %v543, %v541
        %v596 = vpack.c.b16 %v544, %v542
        %v597 = vpack.c.b16 %v547, %v545
        %v598 = vpack.c.b16 %v548, %v546
        %v599 = vpack.c.b16 %v551, %v549
        %v600 = vpack.c.b16 %v552, %v550
        %v601 = vpack.c.b16 %v555, %v553
        %v602 = vpack.c.b16 %v556, %v554
        %v603 = vpack.c.b16 %v559, %v557
        %v604 = vpack.c.b16 %v560, %v558
        %v605 = vpack.c.b16 %v563, %v561
        %v606 = vpack.c.b16 %v564, %v562
        %v607 = vpack.c.b16 %v567, %v565
        %v608 = vpack.c.b16 %v568, %v566
        %v609 = vpack.c.b16 %v571, %v569
        %v610 = vpack.c.b16 %v572, %v570
        %v611 = vpack.c.b16 %v575, %v573
        %v612 = vpack.c.b16 %v576, %v574
        %v613 = vpack.c.b16 %v579, %v577
        %v614 = vpack.c.b16 %v580, %v578
        %v615 = vpack.c.b16 %v583, %v581
        %v616 = vpack.c.b16 %v584, %v582
        %649 = vmatpush.bf16.msra.mxu0 %v599
        %650 = vmatpush.bf16.msra.mxu0 %v597
        %651 = vmatpush.bf16.msra.mxu0 %v595
        %652 = vmatpush.bf16.msra.mxu0 %v593
        %653 = vmatpush.bf16.msra.mxu0 %v591
        %654 = vmatpush.bf16.msra.mxu0 %v589
        %655 = vmatpush.bf16.msra.mxu0 %v587
        %656 = vmatpush.bf16.msra.mxu0 %v585
        %657 = vmatmul.bf16.gmra.mxu0 %v425
        %v658 = vpop.f32.mrf.mxu0
        %v659 = vadd.f32 0.0, %v658
        %v660 = vpop.f32.mrf.mxu0
        %v661 = vadd.f32 0.0, %v660
        %662 = vmatmul.bf16.gmra.mxu0 %v427
        %v663 = vpop.f32.mrf.mxu0
        %v664 = vadd.f32 0.0, %v663
        %v665 = vpop.f32.mrf.mxu0
        %v666 = vadd.f32 0.0, %v665
        %667 = vmatmul.bf16.gmra.mxu0 %v429
        %v668 = vpop.f32.mrf.mxu0
        %v669 = vadd.f32 0.0, %v668
        %v670 = vpop.f32.mrf.mxu0
        %v671 = vadd.f32 0.0, %v670
        %672 = vmatmul.bf16.gmra.mxu0 %v431
        %v673 = vpop.f32.mrf.mxu0
        %v674 = vadd.f32 0.0, %v673
        %v675 = vpop.f32.mrf.mxu0
        %v676 = vadd.f32 0.0, %v675
        %677 = vmatmul.bf16.gmra.mxu0 %v433
        %v678 = vpop.f32.mrf.mxu0
        %v679 = vadd.f32 0.0, %v678
        %v680 = vpop.f32.mrf.mxu0
        %v681 = vadd.f32 0.0, %v680
        %682 = vmatmul.bf16.gmra.mxu0 %v435
        %v683 = vpop.f32.mrf.mxu0
        %v684 = vadd.f32 0.0, %v683
        %v685 = vpop.f32.mrf.mxu0
        %v686 = vadd.f32 0.0, %v685
        %687 = vmatmul.bf16.gmra.mxu0 %v437
        %v688 = vpop.f32.mrf.mxu0
        %v689 = vadd.f32 0.0, %v688
        %v690 = vpop.f32.mrf.mxu0
        %v691 = vadd.f32 0.0, %v690
        %692 = vmatmul.bf16.gmra.mxu0 %v439
        %v693 = vpop.f32.mrf.mxu0
        %v694 = vadd.f32 0.0, %v693
        %v695 = vpop.f32.mrf.mxu0
        %v696 = vadd.f32 0.0, %v695
        %697 = vmatmul.bf16.gmra.mxu0 %v441
        %v698 = vpop.f32.mrf.mxu0
        %v699 = vadd.f32 0.0, %v698
        %v700 = vpop.f32.mrf.mxu0
        %v701 = vadd.f32 0.0, %v700
        %702 = vmatmul.bf16.gmra.mxu0 %v443
        %v703 = vpop.f32.mrf.mxu0
        %v704 = vadd.f32 0.0, %v703
        %v705 = vpop.f32.mrf.mxu0
        %v706 = vadd.f32 0.0, %v705
        %707 = vmatmul.bf16.gmra.mxu0 %v445
        %v708 = vpop.f32.mrf.mxu0
        %v709 = vadd.f32 0.0, %v708
        %v710 = vpop.f32.mrf.mxu0
        %v711 = vadd.f32 0.0, %v710
        %712 = vmatmul.bf16.gmra.mxu0 %v447
        %v713 = vpop.f32.mrf.mxu0
        %v714 = vadd.f32 0.0, %v713
        %v715 = vpop.f32.mrf.mxu0
        %v716 = vadd.f32 0.0, %v715
        %717 = vmatmul.bf16.gmra.mxu0 %v449
        %v718 = vpop.f32.mrf.mxu0
        %v719 = vadd.f32 0.0, %v718
        %v720 = vpop.f32.mrf.mxu0
        %v721 = vadd.f32 0.0, %v720
        %722 = vmatmul.bf16.gmra.mxu0 %v451
        %v723 = vpop.f32.mrf.mxu0
        %v724 = vadd.f32 0.0, %v723
        %v725 = vpop.f32.mrf.mxu0
        %v726 = vadd.f32 0.0, %v725
        %727 = vmatmul.bf16.gmra.mxu0 %v453
        %v728 = vpop.f32.mrf.mxu0
        %v729 = vadd.f32 0.0, %v728
        %v730 = vpop.f32.mrf.mxu0
        %v731 = vadd.f32 0.0, %v730
        %732 = vmatmul.bf16.gmra.mxu0 %v455
        %v733 = vpop.f32.mrf.mxu0
        %v734 = vadd.f32 0.0, %v733
        %v735 = vpop.f32.mrf.mxu0
        %v736 = vadd.f32 0.0, %v735
        %737 = vdwg.mxu0
        %738 = vmatpush.bf16.msra.mxu0 %v615
        %739 = vmatpush.bf16.msra.mxu0 %v613
        %740 = vmatpush.bf16.msra.mxu0 %v611
        %741 = vmatpush.bf16.msra.mxu0 %v609
        %742 = vmatpush.bf16.msra.mxu0 %v607
        %743 = vmatpush.bf16.msra.mxu0 %v605
        %744 = vmatpush.bf16.msra.mxu0 %v603
        %745 = vmatpush.bf16.msra.mxu0 %v601
        %746 = vmatmul.bf16.gmra.mxu0 %v426
        %v747 = vpop.f32.mrf.mxu0
        %v748 = vadd.f32 %v659, %v747
        %v749 = vpop.f32.mrf.mxu0
        %v750 = vadd.f32 %v661, %v749
        %751 = vmatmul.bf16.gmra.mxu0 %v428
        %v752 = vpop.f32.mrf.mxu0
        %v753 = vadd.f32 %v664, %v752
        %v754 = vpop.f32.mrf.mxu0
        %v755 = vadd.f32 %v666, %v754
        %756 = vmatmul.bf16.gmra.mxu0 %v430
        %v757 = vpop.f32.mrf.mxu0
        %v758 = vadd.f32 %v669, %v757
        %v759 = vpop.f32.mrf.mxu0
        %v760 = vadd.f32 %v671, %v759
        %761 = vmatmul.bf16.gmra.mxu0 %v432
        %v762 = vpop.f32.mrf.mxu0
        %v763 = vadd.f32 %v674, %v762
        %v764 = vpop.f32.mrf.mxu0
        %v765 = vadd.f32 %v676, %v764
        %766 = vmatmul.bf16.gmra.mxu0 %v434
        %v767 = vpop.f32.mrf.mxu0
        %v768 = vadd.f32 %v679, %v767
        %v769 = vpop.f32.mrf.mxu0
        %v770 = vadd.f32 %v681, %v769
        %771 = vmatmul.bf16.gmra.mxu0 %v436
        %v772 = vpop.f32.mrf.mxu0
        %v773 = vadd.f32 %v684, %v772
        %v774 = vpop.f32.mrf.mxu0
        %v775 = vadd.f32 %v686, %v774
        %776 = vmatmul.bf16.gmra.mxu0 %v438
        %v777 = vpop.f32.mrf.mxu0
        %v778 = vadd.f32 %v689, %v777
        %v779 = vpop.f32.mrf.mxu0
        %v780 = vadd.f32 %v691, %v779
        %781 = vmatmul.bf16.gmra.mxu0 %v440
        %v782 = vpop.f32.mrf.mxu0
        %v783 = vadd.f32 %v694, %v782
        %v784 = vpop.f32.mrf.mxu0
        %v785 = vadd.f32 %v696, %v784
        %786 = vmatmul.bf16.gmra.mxu0 %v442
        %v787 = vpop.f32.mrf.mxu0
        %v788 = vadd.f32 %v699, %v787
        %v789 = vpop.f32.mrf.mxu0
        %v790 = vadd.f32 %v701, %v789
        %791 = vmatmul.bf16.gmra.mxu0 %v444
        %v792 = vpop.f32.mrf.mxu0
        %v793 = vadd.f32 %v704, %v792
        %v794 = vpop.f32.mrf.mxu0
        %v795 = vadd.f32 %v706, %v794
        %796 = vmatmul.bf16.gmra.mxu0 %v446
        %v797 = vpop.f32.mrf.mxu0
        %v798 = vadd.f32 %v709, %v797
        %v799 = vpop.f32.mrf.mxu0
        %v800 = vadd.f32 %v711, %v799
        %801 = vmatmul.bf16.gmra.mxu0 %v448
        %v802 = vpop.f32.mrf.mxu0
        %v803 = vadd.f32 %v714, %v802
        %v804 = vpop.f32.mrf.mxu0
        %v805 = vadd.f32 %v716, %v804
        %806 = vmatmul.bf16.gmra.mxu0 %v450
        %v807 = vpop.f32.mrf.mxu0
        %v808 = vadd.f32 %v719, %v807
        %v809 = vpop.f32.mrf.mxu0
        %v810 = vadd.f32 %v721, %v809
        %811 = vmatmul.bf16.gmra.mxu0 %v452
        %v812 = vpop.f32.mrf.mxu0
        %v813 = vadd.f32 %v724, %v812
        %v814 = vpop.f32.mrf.mxu0
        %v815 = vadd.f32 %v726, %v814
        %816 = vmatmul.bf16.gmra.mxu0 %v454
        %v817 = vpop.f32.mrf.mxu0
        %v818 = vadd.f32 %v729, %v817
        %v819 = vpop.f32.mrf.mxu0
        %v820 = vadd.f32 %v731, %v819
        %821 = vmatmul.bf16.gmra.mxu0 %v456
        %v822 = vpop.f32.mrf.mxu0
        %v823 = vadd.f32 %v734, %v822
        %v824 = vpop.f32.mrf.mxu0
        %v825 = vadd.f32 %v736, %v824
        %826 = vdwg.mxu0
        %827 = vmatpush.bf16.msra.mxu0 %v600
        %828 = vmatpush.bf16.msra.mxu0 %v598
        %829 = vmatpush.bf16.msra.mxu0 %v596
        %830 = vmatpush.bf16.msra.mxu0 %v594
        %831 = vmatpush.bf16.msra.mxu0 %v592
        %832 = vmatpush.bf16.msra.mxu0 %v590
        %833 = vmatpush.bf16.msra.mxu0 %v588
        %834 = vmatpush.bf16.msra.mxu0 %v586
        %835 = vmatmul.bf16.gmra.mxu0 %v425
        %v836 = vpop.f32.mrf.mxu0
        %v837 = vadd.f32 0.0, %v836
        %v838 = vpop.f32.mrf.mxu0
        %v839 = vadd.f32 0.0, %v838
        %840 = vmatmul.bf16.gmra.mxu0 %v427
        %v841 = vpop.f32.mrf.mxu0
        %v842 = vadd.f32 0.0, %v841
        %v843 = vpop.f32.mrf.mxu0
        %v844 = vadd.f32 0.0, %v843
        %845 = vmatmul.bf16.gmra.mxu0 %v429
        %v846 = vpop.f32.mrf.mxu0
        %v847 = vadd.f32 0.0, %v846
        %v848 = vpop.f32.mrf.mxu0
        %v849 = vadd.f32 0.0, %v848
        %850 = vmatmul.bf16.gmra.mxu0 %v431
        %v851 = vpop.f32.mrf.mxu0
        %v852 = vadd.f32 0.0, %v851
        %v853 = vpop.f32.mrf.mxu0
        %v854 = vadd.f32 0.0, %v853
        %855 = vmatmul.bf16.gmra.mxu0 %v433
        %v856 = vpop.f32.mrf.mxu0
        %v857 = vadd.f32 0.0, %v856
        %v858 = vpop.f32.mrf.mxu0
        %v859 = vadd.f32 0.0, %v858
        %860 = vmatmul.bf16.gmra.mxu0 %v435
        %v861 = vpop.f32.mrf.mxu0
        %v862 = vadd.f32 0.0, %v861
        %v863 = vpop.f32.mrf.mxu0
        %v864 = vadd.f32 0.0, %v863
        %865 = vmatmul.bf16.gmra.mxu0 %v437
        %v866 = vpop.f32.mrf.mxu0
        %v867 = vadd.f32 0.0, %v866
        %v868 = vpop.f32.mrf.mxu0
        %v869 = vadd.f32 0.0, %v868
        %870 = vmatmul.bf16.gmra.mxu0 %v439
        %v871 = vpop.f32.mrf.mxu0
        %v872 = vadd.f32 0.0, %v871
        %v873 = vpop.f32.mrf.mxu0
        %v874 = vadd.f32 0.0, %v873
        %875 = vmatmul.bf16.gmra.mxu0 %v441
        %v876 = vpop.f32.mrf.mxu0
        %v877 = vadd.f32 0.0, %v876
        %v878 = vpop.f32.mrf.mxu0
        %v879 = vadd.f32 0.0, %v878
        %880 = vmatmul.bf16.gmra.mxu0 %v443
        %v881 = vpop.f32.mrf.mxu0
        %v882 = vadd.f32 0.0, %v881
        %v883 = vpop.f32.mrf.mxu0
        %v884 = vadd.f32 0.0, %v883
        %885 = vmatmul.bf16.gmra.mxu0 %v445
        %v886 = vpop.f32.mrf.mxu0
        %v887 = vadd.f32 0.0, %v886
        %v888 = vpop.f32.mrf.mxu0
        %v889 = vadd.f32 0.0, %v888
        %890 = vmatmul.bf16.gmra.mxu0 %v447
        %v891 = vpop.f32.mrf.mxu0
        %v892 = vadd.f32 0.0, %v891
        %v893 = vpop.f32.mrf.mxu0
        %v894 = vadd.f32 0.0, %v893
        %895 = vmatmul.bf16.gmra.mxu0 %v449
        %v896 = vpop.f32.mrf.mxu0
        %v897 = vadd.f32 0.0, %v896
        %v898 = vpop.f32.mrf.mxu0
        %v899 = vadd.f32 0.0, %v898
        %900 = vmatmul.bf16.gmra.mxu0 %v451
        %v901 = vpop.f32.mrf.mxu0
        %v902 = vadd.f32 0.0, %v901
        %v903 = vpop.f32.mrf.mxu0
        %v904 = vadd.f32 0.0, %v903
        %905 = vmatmul.bf16.gmra.mxu0 %v453
        %v906 = vpop.f32.mrf.mxu0
        %v907 = vadd.f32 0.0, %v906
        %v908 = vpop.f32.mrf.mxu0
        %v909 = vadd.f32 0.0, %v908
        %910 = vmatmul.bf16.gmra.mxu0 %v455
        %v911 = vpop.f32.mrf.mxu0
        %v912 = vadd.f32 0.0, %v911
        %v913 = vpop.f32.mrf.mxu0
        %v914 = vadd.f32 0.0, %v913
        %915 = vdwg.mxu0
        %916 = vmatpush.bf16.msra.mxu0 %v616
        %917 = vmatpush.bf16.msra.mxu0 %v614
        %918 = vmatpush.bf16.msra.mxu0 %v612
        %919 = vmatpush.bf16.msra.mxu0 %v610
        %920 = vmatpush.bf16.msra.mxu0 %v608
        %921 = vmatpush.bf16.msra.mxu0 %v606
        %922 = vmatpush.bf16.msra.mxu0 %v604
        %923 = vmatpush.bf16.msra.mxu0 %v602
        %924 = vmatmul.bf16.gmra.mxu0 %v426
        %v925 = vpop.f32.mrf.mxu0
        %v926 = vadd.f32 %v837, %v925
        %v927 = vpop.f32.mrf.mxu0
        %v928 = vadd.f32 %v839, %v927
        %929 = vmatmul.bf16.gmra.mxu0 %v428
        %v930 = vpop.f32.mrf.mxu0
        %v931 = vadd.f32 %v842, %v930
        %v932 = vpop.f32.mrf.mxu0
        %v933 = vadd.f32 %v844, %v932
        %934 = vmatmul.bf16.gmra.mxu0 %v430
        %v935 = vpop.f32.mrf.mxu0
        %v936 = vadd.f32 %v847, %v935
        %v937 = vpop.f32.mrf.mxu0
        %v938 = vadd.f32 %v849, %v937
        %939 = vmatmul.bf16.gmra.mxu0 %v432
        %v940 = vpop.f32.mrf.mxu0
        %v941 = vadd.f32 %v852, %v940
        %v942 = vpop.f32.mrf.mxu0
        %v943 = vadd.f32 %v854, %v942
        %944 = vmatmul.bf16.gmra.mxu0 %v434
        %v945 = vpop.f32.mrf.mxu0
        %v946 = vadd.f32 %v857, %v945
        %v947 = vpop.f32.mrf.mxu0
        %v948 = vadd.f32 %v859, %v947
        %949 = vmatmul.bf16.gmra.mxu0 %v436
        %v950 = vpop.f32.mrf.mxu0
        %v951 = vadd.f32 %v862, %v950
        %v952 = vpop.f32.mrf.mxu0
        %v953 = vadd.f32 %v864, %v952
        %954 = vmatmul.bf16.gmra.mxu0 %v438
        %v955 = vpop.f32.mrf.mxu0
        %v956 = vadd.f32 %v867, %v955
        %v957 = vpop.f32.mrf.mxu0
        %v958 = vadd.f32 %v869, %v957
        %959 = vmatmul.bf16.gmra.mxu0 %v440
        %v960 = vpop.f32.mrf.mxu0
        %v961 = vadd.f32 %v872, %v960
        %v962 = vpop.f32.mrf.mxu0
        %v963 = vadd.f32 %v874, %v962
        %964 = vmatmul.bf16.gmra.mxu0 %v442
        %v965 = vpop.f32.mrf.mxu0
        %v966 = vadd.f32 %v877, %v965
        %v967 = vpop.f32.mrf.mxu0
        %v968 = vadd.f32 %v879, %v967
        %969 = vmatmul.bf16.gmra.mxu0 %v444
        %v970 = vpop.f32.mrf.mxu0
        %v971 = vadd.f32 %v882, %v970
        %v972 = vpop.f32.mrf.mxu0
        %v973 = vadd.f32 %v884, %v972
        %974 = vmatmul.bf16.gmra.mxu0 %v446
        %v975 = vpop.f32.mrf.mxu0
        %v976 = vadd.f32 %v887, %v975
        %v977 = vpop.f32.mrf.mxu0
        %v978 = vadd.f32 %v889, %v977
        %979 = vmatmul.bf16.gmra.mxu0 %v448
        %v980 = vpop.f32.mrf.mxu0
        %v981 = vadd.f32 %v892, %v980
        %v982 = vpop.f32.mrf.mxu0
        %v983 = vadd.f32 %v894, %v982
        %984 = vmatmul.bf16.gmra.mxu0 %v450
        %v985 = vpop.f32.mrf.mxu0
        %v986 = vadd.f32 %v897, %v985
        %v987 = vpop.f32.mrf.mxu0
        %v988 = vadd.f32 %v899, %v987
        %989 = vmatmul.bf16.gmra.mxu0 %v452
        %v990 = vpop.f32.mrf.mxu0
        %v991 = vadd.f32 %v902, %v990
        %v992 = vpop.f32.mrf.mxu0
        %v993 = vadd.f32 %v904, %v992
        %994 = vmatmul.bf16.gmra.mxu0 %v454
        %v995 = vpop.f32.mrf.mxu0
        %v996 = vadd.f32 %v907, %v995
        %v997 = vpop.f32.mrf.mxu0
        %v998 = vadd.f32 %v909, %v997
        %999 = vmatmul.bf16.gmra.mxu0 %v456
        %v1000 = vpop.f32.mrf.mxu0
        %v1001 = vadd.f32 %v912, %v1000
        %v1002 = vpop.f32.mrf.mxu0
        %v1003 = vadd.f32 %v914, %v1002
        %1004 = vdwg.mxu0
        %v1005 = vmax.f32 %v748, 0.0
        %v1006 = vmax.f32 %v926, 0.0
        %v1007 = vmax.f32 %v750, 0.0
        %v1008 = vmax.f32 %v928, 0.0
        %v1009 = vmax.f32 %v753, 0.0
        %v1010 = vmax.f32 %v931, 0.0
        %v1011 = vmax.f32 %v755, 0.0
        %v1012 = vmax.f32 %v933, 0.0
        %v1013 = vmax.f32 %v758, 0.0
        %v1014 = vmax.f32 %v936, 0.0
        %v1015 = vmax.f32 %v760, 0.0
        %v1016 = vmax.f32 %v938, 0.0
        %v1017 = vmax.f32 %v763, 0.0
        %v1018 = vmax.f32 %v941, 0.0
        %v1019 = vmax.f32 %v765, 0.0
        %v1020 = vmax.f32 %v943, 0.0
        %v1021 = vmax.f32 %v768, 0.0
        %v1022 = vmax.f32 %v946, 0.0
        %v1023 = vmax.f32 %v770, 0.0
        %v1024 = vmax.f32 %v948, 0.0
        %v1025 = vmax.f32 %v773, 0.0
        %v1026 = vmax.f32 %v951, 0.0
        %v1027 = vmax.f32 %v775, 0.0
        %v1028 = vmax.f32 %v953, 0.0
        %v1029 = vmax.f32 %v778, 0.0
        %v1030 = vmax.f32 %v956, 0.0
        %v1031 = vmax.f32 %v780, 0.0
        %v1032 = vmax.f32 %v958, 0.0
        %v1033 = vmax.f32 %v783, 0.0
        %v1034 = vmax.f32 %v961, 0.0
        %v1035 = vmax.f32 %v785, 0.0
        %v1036 = vmax.f32 %v963, 0.0
        %v1037 = vmax.f32 %v788, 0.0
        %v1038 = vmax.f32 %v966, 0.0
        %v1039 = vmax.f32 %v790, 0.0
        %v1040 = vmax.f32 %v968, 0.0
        %v1041 = vmax.f32 %v793, 0.0
        %v1042 = vmax.f32 %v971, 0.0
        %v1043 = vmax.f32 %v795, 0.0
        %v1044 = vmax.f32 %v973, 0.0
        %v1045 = vmax.f32 %v798, 0.0
        %v1046 = vmax.f32 %v976, 0.0
        %v1047 = vmax.f32 %v800, 0.0
        %v1048 = vmax.f32 %v978, 0.0
        %v1049 = vmax.f32 %v803, 0.0
        %v1050 = vmax.f32 %v981, 0.0
        %v1051 = vmax.f32 %v805, 0.0
        %v1052 = vmax.f32 %v983, 0.0
        %v1053 = vmax.f32 %v808, 0.0
        %v1054 = vmax.f32 %v986, 0.0
        %v1055 = vmax.f32 %v810, 0.0
        %v1056 = vmax.f32 %v988, 0.0
        %v1057 = vmax.f32 %v813, 0.0
        %v1058 = vmax.f32 %v991, 0.0
        %v1059 = vmax.f32 %v815, 0.0
        %v1060 = vmax.f32 %v993, 0.0
        %v1061 = vmax.f32 %v818, 0.0
        %v1062 = vmax.f32 %v996, 0.0
        %v1063 = vmax.f32 %v820, 0.0
        %v1064 = vmax.f32 %v998, 0.0
        %v1065 = vmax.f32 %v823, 0.0
        %v1066 = vmax.f32 %v1001, 0.0
        %v1067 = vmax.f32 %v825, 0.0
        %v1068 = vmax.f32 %v1003, 0.0
        %v1069 = vmul.f32 %v1005, %v1005
        %v1070 = vmul.f32 %v1006, %v1006
        %v1071 = vmul.f32 %v1007, %v1007
        %v1072 = vmul.f32 %v1008, %v1008
        %v1073 = vmul.f32 %v1009, %v1009
        %v1074 = vmul.f32 %v1010, %v1010
        %v1075 = vmul.f32 %v1011, %v1011
        %v1076 = vmul.f32 %v1012, %v1012
        %v1077 = vmul.f32 %v1013, %v1013
        %v1078 = vmul.f32 %v1014, %v1014
        %v1079 = vmul.f32 %v1015, %v1015
        %v1080 = vmul.f32 %v1016, %v1016
        %v1081 = vmul.f32 %v1017, %v1017
        %v1082 = vmul.f32 %v1018, %v1018
        %v1083 = vmul.f32 %v1019, %v1019
        %v1084 = vmul.f32 %v1020, %v1020
        %v1085 = vmul.f32 %v1021, %v1021
        %v1086 = vmul.f32 %v1022, %v1022
        %v1087 = vmul.f32 %v1023, %v1023
        %v1088 = vmul.f32 %v1024, %v1024
        %v1089 = vmul.f32 %v1025, %v1025
        %v1090 = vmul.f32 %v1026, %v1026
        %v1091 = vmul.f32 %v1027, %v1027
        %v1092 = vmul.f32 %v1028, %v1028
        %v1093 = vmul.f32 %v1029, %v1029
        %v1094 = vmul.f32 %v1030, %v1030
        %v1095 = vmul.f32 %v1031, %v1031
        %v1096 = vmul.f32 %v1032, %v1032
        %v1097 = vmul.f32 %v1033, %v1033
        %v1098 = vmul.f32 %v1034, %v1034
        %v1099 = vmul.f32 %v1035, %v1035
        %v1100 = vmul.f32 %v1036, %v1036
        %v1101 = vmul.f32 %v1037, %v1037
        %v1102 = vmul.f32 %v1038, %v1038
        %v1103 = vmul.f32 %v1039, %v1039
        %v1104 = vmul.f32 %v1040, %v1040
        %v1105 = vmul.f32 %v1041, %v1041
        %v1106 = vmul.f32 %v1042, %v1042
        %v1107 = vmul.f32 %v1043, %v1043
        %v1108 = vmul.f32 %v1044, %v1044
        %v1109 = vmul.f32 %v1045, %v1045
        %v1110 = vmul.f32 %v1046, %v1046
        %v1111 = vmul.f32 %v1047, %v1047
        %v1112 = vmul.f32 %v1048, %v1048
        %v1113 = vmul.f32 %v1049, %v1049
        %v1114 = vmul.f32 %v1050, %v1050
        %v1115 = vmul.f32 %v1051, %v1051
        %v1116 = vmul.f32 %v1052, %v1052
        %v1117 = vmul.f32 %v1053, %v1053
        %v1118 = vmul.f32 %v1054, %v1054
        %v1119 = vmul.f32 %v1055, %v1055
        %v1120 = vmul.f32 %v1056, %v1056
        %v1121 = vmul.f32 %v1057, %v1057
        %v1122 = vmul.f32 %v1058, %v1058
        %v1123 = vmul.f32 %v1059, %v1059
        %v1124 = vmul.f32 %v1060, %v1060
        %v1125 = vmul.f32 %v1061, %v1061
        %v1126 = vmul.f32 %v1062, %v1062
        %v1127 = vmul.f32 %v1063, %v1063
        %v1128 = vmul.f32 %v1064, %v1064
        %v1129 = vmul.f32 %v1065, %v1065
        %v1130 = vmul.f32 %v1066, %v1066
        %v1131 = vmul.f32 %v1067, %v1067
        %v1132 = vmul.f32 %v1068, %v1068
        %v1133 = vpack.c.bf16 %v1071, %v1069
        %v1134 = vpack.c.bf16 %v1072, %v1070
        %v1135 = vpack.c.bf16 %v1075, %v1073
        %v1136 = vpack.c.bf16 %v1076, %v1074
        %v1137 = vpack.c.bf16 %v1079, %v1077
        %v1138 = vpack.c.bf16 %v1080, %v1078
        %v1139 = vpack.c.bf16 %v1083, %v1081
        %v1140 = vpack.c.bf16 %v1084, %v1082
        %v1141 = vpack.c.bf16 %v1087, %v1085
        %v1142 = vpack.c.bf16 %v1088, %v1086
        %v1143 = vpack.c.bf16 %v1091, %v1089
        %v1144 = vpack.c.bf16 %v1092, %v1090
        %v1145 = vpack.c.bf16 %v1095, %v1093
        %v1146 = vpack.c.bf16 %v1096, %v1094
        %v1147 = vpack.c.bf16 %v1099, %v1097
        %v1148 = vpack.c.bf16 %v1100, %v1098
        %v1149 = vpack.c.bf16 %v1103, %v1101
        %v1150 = vpack.c.bf16 %v1104, %v1102
        %v1151 = vpack.c.bf16 %v1107, %v1105
        %v1152 = vpack.c.bf16 %v1108, %v1106
        %v1153 = vpack.c.bf16 %v1111, %v1109
        %v1154 = vpack.c.bf16 %v1112, %v1110
        %v1155 = vpack.c.bf16 %v1115, %v1113
        %v1156 = vpack.c.bf16 %v1116, %v1114
        %v1157 = vpack.c.bf16 %v1119, %v1117
        %v1158 = vpack.c.bf16 %v1120, %v1118
        %v1159 = vpack.c.bf16 %v1123, %v1121
        %v1160 = vpack.c.bf16 %v1124, %v1122
        %v1161 = vpack.c.bf16 %v1127, %v1125
        %v1162 = vpack.c.bf16 %v1128, %v1126
        %v1163 = vpack.c.bf16 %v1131, %v1129
        %v1164 = vpack.c.bf16 %v1132, %v1130
        %v1165 = vld [vmem:[%s238] sm:$0xff]
        %v1166 = vld [vmem:[%s238 + $0x8] sm:$0xff]
        %v1167 = vld [vmem:[%s238 + $0x10] sm:$0xff]
        %v1168 = vld [vmem:[%s238 + $0x18] sm:$0xff]
        %v1169 = vld [vmem:[%s238 + $0x20] sm:$0xff]
        %v1170 = vld [vmem:[%s238 + $0x28] sm:$0xff]
        %v1171 = vld [vmem:[%s238 + $0x30] sm:$0xff]
        %v1172 = vld [vmem:[%s238 + $0x38] sm:$0xff]
        %v1173 = vld [vmem:[%s238 + $0x40] sm:$0xff]
        %v1174 = vld [vmem:[%s238 + $0x48] sm:$0xff]
        %v1175 = vld [vmem:[%s238 + $0x50] sm:$0xff]
        %v1176 = vld [vmem:[%s238 + $0x58] sm:$0xff]
        %v1177 = vld [vmem:[%s238 + $0x60] sm:$0xff]
        %v1178 = vld [vmem:[%s238 + $0x68] sm:$0xff]
        %v1179 = vld [vmem:[%s238 + $0x70] sm:$0xff]
        %v1180 = vld [vmem:[%s238 + $0x78] sm:$0xff]
        %v1181 = vld [vmem:[%s238 + $0x80] sm:$0xff]
        %v1182 = vld [vmem:[%s238 + $0x88] sm:$0xff]
        %v1183 = vld [vmem:[%s238 + $0x90] sm:$0xff]
        %v1184 = vld [vmem:[%s238 + $0x98] sm:$0xff]
        %v1185 = vld [vmem:[%s238 + $0xa0] sm:$0xff]
        %v1186 = vld [vmem:[%s238 + $0xa8] sm:$0xff]
        %v1187 = vld [vmem:[%s238 + $0xb0] sm:$0xff]
        %v1188 = vld [vmem:[%s238 + $0xb8] sm:$0xff]
        %v1189 = vld [vmem:[%s238 + $0xc0] sm:$0xff]
        %v1190 = vld [vmem:[%s238 + $0xc8] sm:$0xff]
        %v1191 = vld [vmem:[%s238 + $0xd0] sm:$0xff]
        %v1192 = vld [vmem:[%s238 + $0xd8] sm:$0xff]
        %v1193 = vld [vmem:[%s238 + $0xe0] sm:$0xff]
        %v1194 = vld [vmem:[%s238 + $0xe8] sm:$0xff]
        %v1195 = vld [vmem:[%s238 + $0xf0] sm:$0xff]
        %v1196 = vld [vmem:[%s238 + $0xf8] sm:$0xff]
        %v1229 = vunpack.c.l.b16 %v1165
        %v1230 = vunpack.c.h.b16 %v1165
        %v1231 = vunpack.c.l.b16 %v1166
        %v1232 = vunpack.c.h.b16 %v1166
        %v1233 = vunpack.c.l.b16 %v1167
        %v1234 = vunpack.c.h.b16 %v1167
        %v1235 = vunpack.c.l.b16 %v1168
        %v1236 = vunpack.c.h.b16 %v1168
        %v1237 = vunpack.c.l.b16 %v1169
        %v1238 = vunpack.c.h.b16 %v1169
        %v1239 = vunpack.c.l.b16 %v1170
        %v1240 = vunpack.c.h.b16 %v1170
        %v1241 = vunpack.c.l.b16 %v1171
        %v1242 = vunpack.c.h.b16 %v1171
        %v1243 = vunpack.c.l.b16 %v1172
        %v1244 = vunpack.c.h.b16 %v1172
        %v1245 = vunpack.c.l.b16 %v1173
        %v1246 = vunpack.c.h.b16 %v1173
        %v1247 = vunpack.c.l.b16 %v1174
        %v1248 = vunpack.c.h.b16 %v1174
        %v1249 = vunpack.c.l.b16 %v1175
        %v1250 = vunpack.c.h.b16 %v1175
        %v1251 = vunpack.c.l.b16 %v1176
        %v1252 = vunpack.c.h.b16 %v1176
        %v1253 = vunpack.c.l.b16 %v1177
        %v1254 = vunpack.c.h.b16 %v1177
        %v1255 = vunpack.c.l.b16 %v1178
        %v1256 = vunpack.c.h.b16 %v1178
        %v1257 = vunpack.c.l.b16 %v1179
        %v1258 = vunpack.c.h.b16 %v1179
        %v1259 = vunpack.c.l.b16 %v1180
        %v1260 = vunpack.c.h.b16 %v1180
        %v1261 = vunpack.c.l.b16 %v1181
        %v1262 = vunpack.c.h.b16 %v1181
        %v1263 = vunpack.c.l.b16 %v1182
        %v1264 = vunpack.c.h.b16 %v1182
        %v1265 = vunpack.c.l.b16 %v1183
        %v1266 = vunpack.c.h.b16 %v1183
        %v1267 = vunpack.c.l.b16 %v1184
        %v1268 = vunpack.c.h.b16 %v1184
        %v1269 = vunpack.c.l.b16 %v1185
        %v1270 = vunpack.c.h.b16 %v1185
        %v1271 = vunpack.c.l.b16 %v1186
        %v1272 = vunpack.c.h.b16 %v1186
        %v1273 = vunpack.c.l.b16 %v1187
        %v1274 = vunpack.c.h.b16 %v1187
        %v1275 = vunpack.c.l.b16 %v1188
        %v1276 = vunpack.c.h.b16 %v1188
        %v1277 = vunpack.c.l.b16 %v1189
        %v1278 = vunpack.c.h.b16 %v1189
        %v1279 = vunpack.c.l.b16 %v1190
        %v1280 = vunpack.c.h.b16 %v1190
        %v1281 = vunpack.c.l.b16 %v1191
        %v1282 = vunpack.c.h.b16 %v1191
        %v1283 = vunpack.c.l.b16 %v1192
        %v1284 = vunpack.c.h.b16 %v1192
        %v1285 = vunpack.c.l.b16 %v1193
        %v1286 = vunpack.c.h.b16 %v1193
        %v1287 = vunpack.c.l.b16 %v1194
        %v1288 = vunpack.c.h.b16 %v1194
        %v1289 = vunpack.c.l.b16 %v1195
        %v1290 = vunpack.c.h.b16 %v1195
        %v1291 = vunpack.c.l.b16 %v1196
        %v1292 = vunpack.c.h.b16 %v1196
        %v1293 = vpack.c.b16 %v1231, %v1229
        %v1294 = vpack.c.b16 %v1232, %v1230
        %v1295 = vpack.c.b16 %v1235, %v1233
        %v1296 = vpack.c.b16 %v1236, %v1234
        %v1297 = vpack.c.b16 %v1239, %v1237
        %v1298 = vpack.c.b16 %v1240, %v1238
        %v1299 = vpack.c.b16 %v1243, %v1241
        %v1300 = vpack.c.b16 %v1244, %v1242
        %v1301 = vpack.c.b16 %v1247, %v1245
        %v1302 = vpack.c.b16 %v1248, %v1246
        %v1303 = vpack.c.b16 %v1251, %v1249
        %v1304 = vpack.c.b16 %v1252, %v1250
        %v1305 = vpack.c.b16 %v1255, %v1253
        %v1306 = vpack.c.b16 %v1256, %v1254
        %v1307 = vpack.c.b16 %v1259, %v1257
        %v1308 = vpack.c.b16 %v1260, %v1258
        %v1309 = vpack.c.b16 %v1263, %v1261
        %v1310 = vpack.c.b16 %v1264, %v1262
        %v1311 = vpack.c.b16 %v1267, %v1265
        %v1312 = vpack.c.b16 %v1268, %v1266
        %v1313 = vpack.c.b16 %v1271, %v1269
        %v1314 = vpack.c.b16 %v1272, %v1270
        %v1315 = vpack.c.b16 %v1275, %v1273
        %v1316 = vpack.c.b16 %v1276, %v1274
        %v1317 = vpack.c.b16 %v1279, %v1277
        %v1318 = vpack.c.b16 %v1280, %v1278
        %v1319 = vpack.c.b16 %v1283, %v1281
        %v1320 = vpack.c.b16 %v1284, %v1282
        %v1321 = vpack.c.b16 %v1287, %v1285
        %v1322 = vpack.c.b16 %v1288, %v1286
        %v1323 = vpack.c.b16 %v1291, %v1289
        %v1324 = vpack.c.b16 %v1292, %v1290
        %1357 = vmatpush.bf16.msra.mxu0 %v1307
        %1358 = vmatpush.bf16.msra.mxu0 %v1305
        %1359 = vmatpush.bf16.msra.mxu0 %v1303
        %1360 = vmatpush.bf16.msra.mxu0 %v1301
        %1361 = vmatpush.bf16.msra.mxu0 %v1299
        %1362 = vmatpush.bf16.msra.mxu0 %v1297
        %1363 = vmatpush.bf16.msra.mxu0 %v1295
        %1364 = vmatpush.bf16.msra.mxu0 %v1293
        %1365 = vmatmul.bf16.gmra.mxu0 %v1133
        %v1366 = vpop.f32.mrf.mxu0
        %v1367 = vadd.f32 0.0, %v1366
        %v1368 = vpop.f32.mrf.mxu0
        %v1369 = vadd.f32 0.0, %v1368
        %1370 = vmatmul.bf16.gmra.mxu0 %v1135
        %v1371 = vpop.f32.mrf.mxu0
        %v1372 = vadd.f32 0.0, %v1371
        %v1373 = vpop.f32.mrf.mxu0
        %v1374 = vadd.f32 0.0, %v1373
        %1375 = vmatmul.bf16.gmra.mxu0 %v1137
        %v1376 = vpop.f32.mrf.mxu0
        %v1377 = vadd.f32 0.0, %v1376
        %v1378 = vpop.f32.mrf.mxu0
        %v1379 = vadd.f32 0.0, %v1378
        %1380 = vmatmul.bf16.gmra.mxu0 %v1139
        %v1381 = vpop.f32.mrf.mxu0
        %v1382 = vadd.f32 0.0, %v1381
        %v1383 = vpop.f32.mrf.mxu0
        %v1384 = vadd.f32 0.0, %v1383
        %1385 = vmatmul.bf16.gmra.mxu0 %v1141
        %v1386 = vpop.f32.mrf.mxu0
        %v1387 = vadd.f32 0.0, %v1386
        %v1388 = vpop.f32.mrf.mxu0
        %v1389 = vadd.f32 0.0, %v1388
        %1390 = vmatmul.bf16.gmra.mxu0 %v1143
        %v1391 = vpop.f32.mrf.mxu0
        %v1392 = vadd.f32 0.0, %v1391
        %v1393 = vpop.f32.mrf.mxu0
        %v1394 = vadd.f32 0.0, %v1393
        %1395 = vmatmul.bf16.gmra.mxu0 %v1145
        %v1396 = vpop.f32.mrf.mxu0
        %v1397 = vadd.f32 0.0, %v1396
        %v1398 = vpop.f32.mrf.mxu0
        %v1399 = vadd.f32 0.0, %v1398
        %1400 = vmatmul.bf16.gmra.mxu0 %v1147
        %v1401 = vpop.f32.mrf.mxu0
        %v1402 = vadd.f32 0.0, %v1401
        %v1403 = vpop.f32.mrf.mxu0
        %v1404 = vadd.f32 0.0, %v1403
        %1405 = vmatmul.bf16.gmra.mxu0 %v1149
        %v1406 = vpop.f32.mrf.mxu0
        %v1407 = vadd.f32 0.0, %v1406
        %v1408 = vpop.f32.mrf.mxu0
        %v1409 = vadd.f32 0.0, %v1408
        %1410 = vmatmul.bf16.gmra.mxu0 %v1151
        %v1411 = vpop.f32.mrf.mxu0
        %v1412 = vadd.f32 0.0, %v1411
        %v1413 = vpop.f32.mrf.mxu0
        %v1414 = vadd.f32 0.0, %v1413
        %1415 = vmatmul.bf16.gmra.mxu0 %v1153
        %v1416 = vpop.f32.mrf.mxu0
        %v1417 = vadd.f32 0.0, %v1416
        %v1418 = vpop.f32.mrf.mxu0
        %v1419 = vadd.f32 0.0, %v1418
        %1420 = vmatmul.bf16.gmra.mxu0 %v1155
        %v1421 = vpop.f32.mrf.mxu0
        %v1422 = vadd.f32 0.0, %v1421
        %v1423 = vpop.f32.mrf.mxu0
        %v1424 = vadd.f32 0.0, %v1423
        %1425 = vmatmul.bf16.gmra.mxu0 %v1157
        %v1426 = vpop.f32.mrf.mxu0
        %v1427 = vadd.f32 0.0, %v1426
        %v1428 = vpop.f32.mrf.mxu0
        %v1429 = vadd.f32 0.0, %v1428
        %1430 = vmatmul.bf16.gmra.mxu0 %v1159
        %v1431 = vpop.f32.mrf.mxu0
        %v1432 = vadd.f32 0.0, %v1431
        %v1433 = vpop.f32.mrf.mxu0
        %v1434 = vadd.f32 0.0, %v1433
        %1435 = vmatmul.bf16.gmra.mxu0 %v1161
        %v1436 = vpop.f32.mrf.mxu0
        %v1437 = vadd.f32 0.0, %v1436
        %v1438 = vpop.f32.mrf.mxu0
        %v1439 = vadd.f32 0.0, %v1438
        %1440 = vmatmul.bf16.gmra.mxu0 %v1163
        %v1441 = vpop.f32.mrf.mxu0
        %v1442 = vadd.f32 0.0, %v1441
        %v1443 = vpop.f32.mrf.mxu0
        %v1444 = vadd.f32 0.0, %v1443
        %1445 = vdwg.mxu0
        %1446 = vmatpush.bf16.msra.mxu0 %v1323
        %1447 = vmatpush.bf16.msra.mxu0 %v1321
        %1448 = vmatpush.bf16.msra.mxu0 %v1319
        %1449 = vmatpush.bf16.msra.mxu0 %v1317
        %1450 = vmatpush.bf16.msra.mxu0 %v1315
        %1451 = vmatpush.bf16.msra.mxu0 %v1313
        %1452 = vmatpush.bf16.msra.mxu0 %v1311
        %1453 = vmatpush.bf16.msra.mxu0 %v1309
        %1454 = vmatmul.bf16.gmra.mxu0 %v1134
        %v1455 = vpop.f32.mrf.mxu0
        %v1456 = vadd.f32 %v1367, %v1455
        %v1457 = vpop.f32.mrf.mxu0
        %v1458 = vadd.f32 %v1369, %v1457
        %1459 = vmatmul.bf16.gmra.mxu0 %v1136
        %v1460 = vpop.f32.mrf.mxu0
        %v1461 = vadd.f32 %v1372, %v1460
        %v1462 = vpop.f32.mrf.mxu0
        %v1463 = vadd.f32 %v1374, %v1462
        %1464 = vmatmul.bf16.gmra.mxu0 %v1138
        %v1465 = vpop.f32.mrf.mxu0
        %v1466 = vadd.f32 %v1377, %v1465
        %v1467 = vpop.f32.mrf.mxu0
        %v1468 = vadd.f32 %v1379, %v1467
        %1469 = vmatmul.bf16.gmra.mxu0 %v1140
        %v1470 = vpop.f32.mrf.mxu0
        %v1471 = vadd.f32 %v1382, %v1470
        %v1472 = vpop.f32.mrf.mxu0
        %v1473 = vadd.f32 %v1384, %v1472
        %1474 = vmatmul.bf16.gmra.mxu0 %v1142
        %v1475 = vpop.f32.mrf.mxu0
        %v1476 = vadd.f32 %v1387, %v1475
        %v1477 = vpop.f32.mrf.mxu0
        %v1478 = vadd.f32 %v1389, %v1477
        %1479 = vmatmul.bf16.gmra.mxu0 %v1144
        %v1480 = vpop.f32.mrf.mxu0
        %v1481 = vadd.f32 %v1392, %v1480
        %v1482 = vpop.f32.mrf.mxu0
        %v1483 = vadd.f32 %v1394, %v1482
        %1484 = vmatmul.bf16.gmra.mxu0 %v1146
        %v1485 = vpop.f32.mrf.mxu0
        %v1486 = vadd.f32 %v1397, %v1485
        %v1487 = vpop.f32.mrf.mxu0
        %v1488 = vadd.f32 %v1399, %v1487
        %1489 = vmatmul.bf16.gmra.mxu0 %v1148
        %v1490 = vpop.f32.mrf.mxu0
        %v1491 = vadd.f32 %v1402, %v1490
        %v1492 = vpop.f32.mrf.mxu0
        %v1493 = vadd.f32 %v1404, %v1492
        %1494 = vmatmul.bf16.gmra.mxu0 %v1150
        %v1495 = vpop.f32.mrf.mxu0
        %v1496 = vadd.f32 %v1407, %v1495
        %v1497 = vpop.f32.mrf.mxu0
        %v1498 = vadd.f32 %v1409, %v1497
        %1499 = vmatmul.bf16.gmra.mxu0 %v1152
        %v1500 = vpop.f32.mrf.mxu0
        %v1501 = vadd.f32 %v1412, %v1500
        %v1502 = vpop.f32.mrf.mxu0
        %v1503 = vadd.f32 %v1414, %v1502
        %1504 = vmatmul.bf16.gmra.mxu0 %v1154
        %v1505 = vpop.f32.mrf.mxu0
        %v1506 = vadd.f32 %v1417, %v1505
        %v1507 = vpop.f32.mrf.mxu0
        %v1508 = vadd.f32 %v1419, %v1507
        %1509 = vmatmul.bf16.gmra.mxu0 %v1156
        %v1510 = vpop.f32.mrf.mxu0
        %v1511 = vadd.f32 %v1422, %v1510
        %v1512 = vpop.f32.mrf.mxu0
        %v1513 = vadd.f32 %v1424, %v1512
        %1514 = vmatmul.bf16.gmra.mxu0 %v1158
        %v1515 = vpop.f32.mrf.mxu0
        %v1516 = vadd.f32 %v1427, %v1515
        %v1517 = vpop.f32.mrf.mxu0
        %v1518 = vadd.f32 %v1429, %v1517
        %1519 = vmatmul.bf16.gmra.mxu0 %v1160
        %v1520 = vpop.f32.mrf.mxu0
        %v1521 = vadd.f32 %v1432, %v1520
        %v1522 = vpop.f32.mrf.mxu0
        %v1523 = vadd.f32 %v1434, %v1522
        %1524 = vmatmul.bf16.gmra.mxu0 %v1162
        %v1525 = vpop.f32.mrf.mxu0
        %v1526 = vadd.f32 %v1437, %v1525
        %v1527 = vpop.f32.mrf.mxu0
        %v1528 = vadd.f32 %v1439, %v1527
        %1529 = vmatmul.bf16.gmra.mxu0 %v1164
        %v1530 = vpop.f32.mrf.mxu0
        %v1531 = vadd.f32 %v1442, %v1530
        %v1532 = vpop.f32.mrf.mxu0
        %v1533 = vadd.f32 %v1444, %v1532
        %1534 = vdwg.mxu0
        %1535 = vmatpush.bf16.msra.mxu0 %v1308
        %1536 = vmatpush.bf16.msra.mxu0 %v1306
        %1537 = vmatpush.bf16.msra.mxu0 %v1304
        %1538 = vmatpush.bf16.msra.mxu0 %v1302
        %1539 = vmatpush.bf16.msra.mxu0 %v1300
        %1540 = vmatpush.bf16.msra.mxu0 %v1298
        %1541 = vmatpush.bf16.msra.mxu0 %v1296
        %1542 = vmatpush.bf16.msra.mxu0 %v1294
        %1543 = vmatmul.bf16.gmra.mxu0 %v1133
        %v1544 = vpop.f32.mrf.mxu0
        %v1545 = vadd.f32 0.0, %v1544
        %v1546 = vpop.f32.mrf.mxu0
        %v1547 = vadd.f32 0.0, %v1546
        %1548 = vmatmul.bf16.gmra.mxu0 %v1135
        %v1549 = vpop.f32.mrf.mxu0
        %v1550 = vadd.f32 0.0, %v1549
        %v1551 = vpop.f32.mrf.mxu0
        %v1552 = vadd.f32 0.0, %v1551
        %1553 = vmatmul.bf16.gmra.mxu0 %v1137
        %v1554 = vpop.f32.mrf.mxu0
        %v1555 = vadd.f32 0.0, %v1554
        %v1556 = vpop.f32.mrf.mxu0
        %v1557 = vadd.f32 0.0, %v1556
        %1558 = vmatmul.bf16.gmra.mxu0 %v1139
        %v1559 = vpop.f32.mrf.mxu0
        %v1560 = vadd.f32 0.0, %v1559
        %v1561 = vpop.f32.mrf.mxu0
        %v1562 = vadd.f32 0.0, %v1561
        %1563 = vmatmul.bf16.gmra.mxu0 %v1141
        %v1564 = vpop.f32.mrf.mxu0
        %v1565 = vadd.f32 0.0, %v1564
        %v1566 = vpop.f32.mrf.mxu0
        %v1567 = vadd.f32 0.0, %v1566
        %1568 = vmatmul.bf16.gmra.mxu0 %v1143
        %v1569 = vpop.f32.mrf.mxu0
        %v1570 = vadd.f32 0.0, %v1569
        %v1571 = vpop.f32.mrf.mxu0
        %v1572 = vadd.f32 0.0, %v1571
        %1573 = vmatmul.bf16.gmra.mxu0 %v1145
        %v1574 = vpop.f32.mrf.mxu0
        %v1575 = vadd.f32 0.0, %v1574
        %v1576 = vpop.f32.mrf.mxu0
        %v1577 = vadd.f32 0.0, %v1576
        %1578 = vmatmul.bf16.gmra.mxu0 %v1147
        %v1579 = vpop.f32.mrf.mxu0
        %v1580 = vadd.f32 0.0, %v1579
        %v1581 = vpop.f32.mrf.mxu0
        %v1582 = vadd.f32 0.0, %v1581
        %1583 = vmatmul.bf16.gmra.mxu0 %v1149
        %v1584 = vpop.f32.mrf.mxu0
        %v1585 = vadd.f32 0.0, %v1584
        %v1586 = vpop.f32.mrf.mxu0
        %v1587 = vadd.f32 0.0, %v1586
        %1588 = vmatmul.bf16.gmra.mxu0 %v1151
        %v1589 = vpop.f32.mrf.mxu0
        %v1590 = vadd.f32 0.0, %v1589
        %v1591 = vpop.f32.mrf.mxu0
        %v1592 = vadd.f32 0.0, %v1591
        %1593 = vmatmul.bf16.gmra.mxu0 %v1153
        %v1594 = vpop.f32.mrf.mxu0
        %v1595 = vadd.f32 0.0, %v1594
        %v1596 = vpop.f32.mrf.mxu0
        %v1597 = vadd.f32 0.0, %v1596
        %1598 = vmatmul.bf16.gmra.mxu0 %v1155
        %v1599 = vpop.f32.mrf.mxu0
        %v1600 = vadd.f32 0.0, %v1599
        %v1601 = vpop.f32.mrf.mxu0
        %v1602 = vadd.f32 0.0, %v1601
        %1603 = vmatmul.bf16.gmra.mxu0 %v1157
        %v1604 = vpop.f32.mrf.mxu0
        %v1605 = vadd.f32 0.0, %v1604
        %v1606 = vpop.f32.mrf.mxu0
        %v1607 = vadd.f32 0.0, %v1606
        %1608 = vmatmul.bf16.gmra.mxu0 %v1159
        %v1609 = vpop.f32.mrf.mxu0
        %v1610 = vadd.f32 0.0, %v1609
        %v1611 = vpop.f32.mrf.mxu0
        %v1612 = vadd.f32 0.0, %v1611
        %1613 = vmatmul.bf16.gmra.mxu0 %v1161
        %v1614 = vpop.f32.mrf.mxu0
        %v1615 = vadd.f32 0.0, %v1614
        %v1616 = vpop.f32.mrf.mxu0
        %v1617 = vadd.f32 0.0, %v1616
        %1618 = vmatmul.bf16.gmra.mxu0 %v1163
        %v1619 = vpop.f32.mrf.mxu0
        %v1620 = vadd.f32 0.0, %v1619
        %v1621 = vpop.f32.mrf.mxu0
        %v1622 = vadd.f32 0.0, %v1621
        %1623 = vdwg.mxu0
        %1624 = vmatpush.bf16.msra.mxu0 %v1324
        %1625 = vmatpush.bf16.msra.mxu0 %v1322
        %1626 = vmatpush.bf16.msra.mxu0 %v1320
        %1627 = vmatpush.bf16.msra.mxu0 %v1318
        %1628 = vmatpush.bf16.msra.mxu0 %v1316
        %1629 = vmatpush.bf16.msra.mxu0 %v1314
        %1630 = vmatpush.bf16.msra.mxu0 %v1312
        %1631 = vmatpush.bf16.msra.mxu0 %v1310
        %1632 = vmatmul.bf16.gmra.mxu0 %v1134
        %v1633 = vpop.f32.mrf.mxu0
        %v1634 = vadd.f32 %v1545, %v1633
        %v1635 = vpop.f32.mrf.mxu0
        %v1636 = vadd.f32 %v1547, %v1635
        %1637 = vmatmul.bf16.gmra.mxu0 %v1136
        %v1638 = vpop.f32.mrf.mxu0
        %v1639 = vadd.f32 %v1550, %v1638
        %v1640 = vpop.f32.mrf.mxu0
        %v1641 = vadd.f32 %v1552, %v1640
        %1642 = vmatmul.bf16.gmra.mxu0 %v1138
        %v1643 = vpop.f32.mrf.mxu0
        %v1644 = vadd.f32 %v1555, %v1643
        %v1645 = vpop.f32.mrf.mxu0
        %v1646 = vadd.f32 %v1557, %v1645
        %1647 = vmatmul.bf16.gmra.mxu0 %v1140
        %v1648 = vpop.f32.mrf.mxu0
        %v1649 = vadd.f32 %v1560, %v1648
        %v1650 = vpop.f32.mrf.mxu0
        %v1651 = vadd.f32 %v1562, %v1650
        %1652 = vmatmul.bf16.gmra.mxu0 %v1142
        %v1653 = vpop.f32.mrf.mxu0
        %v1654 = vadd.f32 %v1565, %v1653
        %v1655 = vpop.f32.mrf.mxu0
        %v1656 = vadd.f32 %v1567, %v1655
        %1657 = vmatmul.bf16.gmra.mxu0 %v1144
        %v1658 = vpop.f32.mrf.mxu0
        %v1659 = vadd.f32 %v1570, %v1658
        %v1660 = vpop.f32.mrf.mxu0
        %v1661 = vadd.f32 %v1572, %v1660
        %1662 = vmatmul.bf16.gmra.mxu0 %v1146
        %v1663 = vpop.f32.mrf.mxu0
        %v1664 = vadd.f32 %v1575, %v1663
        %v1665 = vpop.f32.mrf.mxu0
        %v1666 = vadd.f32 %v1577, %v1665
        %1667 = vmatmul.bf16.gmra.mxu0 %v1148
        %v1668 = vpop.f32.mrf.mxu0
        %v1669 = vadd.f32 %v1580, %v1668
        %v1670 = vpop.f32.mrf.mxu0
        %v1671 = vadd.f32 %v1582, %v1670
        %1672 = vmatmul.bf16.gmra.mxu0 %v1150
        %v1673 = vpop.f32.mrf.mxu0
        %v1674 = vadd.f32 %v1585, %v1673
        %v1675 = vpop.f32.mrf.mxu0
        %v1676 = vadd.f32 %v1587, %v1675
        %1677 = vmatmul.bf16.gmra.mxu0 %v1152
        %v1678 = vpop.f32.mrf.mxu0
        %v1679 = vadd.f32 %v1590, %v1678
        %v1680 = vpop.f32.mrf.mxu0
        %v1681 = vadd.f32 %v1592, %v1680
        %1682 = vmatmul.bf16.gmra.mxu0 %v1154
        %v1683 = vpop.f32.mrf.mxu0
        %v1684 = vadd.f32 %v1595, %v1683
        %v1685 = vpop.f32.mrf.mxu0
        %v1686 = vadd.f32 %v1597, %v1685
        %1687 = vmatmul.bf16.gmra.mxu0 %v1156
        %v1688 = vpop.f32.mrf.mxu0
        %v1689 = vadd.f32 %v1600, %v1688
        %v1690 = vpop.f32.mrf.mxu0
        %v1691 = vadd.f32 %v1602, %v1690
        %1692 = vmatmul.bf16.gmra.mxu0 %v1158
        %v1693 = vpop.f32.mrf.mxu0
        %v1694 = vadd.f32 %v1605, %v1693
        %v1695 = vpop.f32.mrf.mxu0
        %v1696 = vadd.f32 %v1607, %v1695
        %1697 = vmatmul.bf16.gmra.mxu0 %v1160
        %v1698 = vpop.f32.mrf.mxu0
        %v1699 = vadd.f32 %v1610, %v1698
        %v1700 = vpop.f32.mrf.mxu0
        %v1701 = vadd.f32 %v1612, %v1700
        %1702 = vmatmul.bf16.gmra.mxu0 %v1162
        %v1703 = vpop.f32.mrf.mxu0
        %v1704 = vadd.f32 %v1615, %v1703
        %v1705 = vpop.f32.mrf.mxu0
        %v1706 = vadd.f32 %v1617, %v1705
        %1707 = vmatmul.bf16.gmra.mxu0 %v1164
        %v1708 = vpop.f32.mrf.mxu0
        %v1709 = vadd.f32 %v1620, %v1708
        %v1710 = vpop.f32.mrf.mxu0
        %v1711 = vadd.f32 %v1622, %v1710
        %1712 = vdwg.mxu0
        %p1713 = scmp.eq.s32.totalorder %s24, 0
        // Predicated region
        $region45: #{tpu_custom_call.1} parent=31 // pred_check
          %p1714 = pneg %p1713
        $region46: #{tpu_custom_call.1} parent=31 // pred_check_branch
          %1716 = sbr.rel (%p1714) target = $region48
        $region47: #{tpu_custom_call.1} parent=31 // pred_region
          %1717 = vst [vmem:[#allocation2] sm:$0xff] %v1456
          %1718 = vst [vmem:[#allocation2 + $0x8] sm:$0xff] %v1634
          %1719 = vst [vmem:[#allocation2 + $0x10] sm:$0xff] %v1458
          %1720 = vst [vmem:[#allocation2 + $0x18] sm:$0xff] %v1636
          %1721 = vst [vmem:[#allocation2 + $0x20] sm:$0xff] %v1461
          %1722 = vst [vmem:[#allocation2 + $0x28] sm:$0xff] %v1639
          %1723 = vst [vmem:[#allocation2 + $0x30] sm:$0xff] %v1463
          %1724 = vst [vmem:[#allocation2 + $0x38] sm:$0xff] %v1641
          %1725 = vst [vmem:[#allocation2 + $0x40] sm:$0xff] %v1466
          %1726 = vst [vmem:[#allocation2 + $0x48] sm:$0xff] %v1644
          %1727 = vst [vmem:[#allocation2 + $0x50] sm:$0xff] %v1468
          %1728 = vst [vmem:[#allocation2 + $0x58] sm:$0xff] %v1646
          %1729 = vst [vmem:[#allocation2 + $0x60] sm:$0xff] %v1471
          %1730 = vst [vmem:[#allocation2 + $0x68] sm:$0xff] %v1649
          %1731 = vst [vmem:[#allocation2 + $0x70] sm:$0xff] %v1473
          %1732 = vst [vmem:[#allocation2 + $0x78] sm:$0xff] %v1651
          %1733 = vst [vmem:[#allocation2 + $0x80] sm:$0xff] %v1476
          %1734 = vst [vmem:[#allocation2 + $0x88] sm:$0xff] %v1654
          %1735 = vst [vmem:[#allocation2 + $0x90] sm:$0xff] %v1478
          %1736 = vst [vmem:[#allocation2 + $0x98] sm:$0xff] %v1656
          %1737 = vst [vmem:[#allocation2 + $0xa0] sm:$0xff] %v1481
          %1738 = vst [vmem:[#allocation2 + $0xa8] sm:$0xff] %v1659
          %1739 = vst [vmem:[#allocation2 + $0xb0] sm:$0xff] %v1483
          %1740 = vst [vmem:[#allocation2 + $0xb8] sm:$0xff] %v1661
          %1741 = vst [vmem:[#allocation2 + $0xc0] sm:$0xff] %v1486
          %1742 = vst [vmem:[#allocation2 + $0xc8] sm:$0xff] %v1664
          %1743 = vst [vmem:[#allocation2 + $0xd0] sm:$0xff] %v1488
          %1744 = vst [vmem:[#allocation2 + $0xd8] sm:$0xff] %v1666
          %1745 = vst [vmem:[#allocation2 + $0xe0] sm:$0xff] %v1491
          %1746 = vst [vmem:[#allocation2 + $0xe8] sm:$0xff] %v1669
          %1747 = vst [vmem:[#allocation2 + $0xf0] sm:$0xff] %v1493
          %1748 = vst [vmem:[#allocation2 + $0xf8] sm:$0xff] %v1671
          %1749 = vst [vmem:[#allocation2 + $0x100] sm:$0xff] %v1496
          %1750 = vst [vmem:[#allocation2 + $0x108] sm:$0xff] %v1674
          %1751 = vst [vmem:[#allocation2 + $0x110] sm:$0xff] %v1498
          %1752 = vst [vmem:[#allocation2 + $0x118] sm:$0xff] %v1676
          %1753 = vst [vmem:[#allocation2 + $0x120] sm:$0xff] %v1501
          %1754 = vst [vmem:[#allocation2 + $0x128] sm:$0xff] %v1679
          %1755 = vst [vmem:[#allocation2 + $0x130] sm:$0xff] %v1503
          %1756 = vst [vmem:[#allocation2 + $0x138] sm:$0xff] %v1681
          %1757 = vst [vmem:[#allocation2 + $0x140] sm:$0xff] %v1506
          %1758 = vst [vmem:[#allocation2 + $0x148] sm:$0xff] %v1684
          %1759 = vst [vmem:[#allocation2 + $0x150] sm:$0xff] %v1508
          %1760 = vst [vmem:[#allocation2 + $0x158] sm:$0xff] %v1686
          %1761 = vst [vmem:[#allocation2 + $0x160] sm:$0xff] %v1511
          %1762 = vst [vmem:[#allocation2 + $0x168] sm:$0xff] %v1689
          %1763 = vst [vmem:[#allocation2 + $0x170] sm:$0xff] %v1513
          %1764 = vst [vmem:[#allocation2 + $0x178] sm:$0xff] %v1691
          %1765 = vst [vmem:[#allocation2 + $0x180] sm:$0xff] %v1516
          %1766 = vst [vmem:[#allocation2 + $0x188] sm:$0xff] %v1694
          %1767 = vst [vmem:[#allocation2 + $0x190] sm:$0xff] %v1518
          %1768 = vst [vmem:[#allocation2 + $0x198] sm:$0xff] %v1696
          %1769 = vst [vmem:[#allocation2 + $0x1a0] sm:$0xff] %v1521
          %1770 = vst [vmem:[#allocation2 + $0x1a8] sm:$0xff] %v1699
          %1771 = vst [vmem:[#allocation2 + $0x1b0] sm:$0xff] %v1523
          %1772 = vst [vmem:[#allocation2 + $0x1b8] sm:$0xff] %v1701
          %1773 = vst [vmem:[#allocation2 + $0x1c0] sm:$0xff] %v1526
          %1774 = vst [vmem:[#allocation2 + $0x1c8] sm:$0xff] %v1704
          %1775 = vst [vmem:[#allocation2 + $0x1d0] sm:$0xff] %v1528
          %1776 = vst [vmem:[#allocation2 + $0x1d8] sm:$0xff] %v1706
          %1777 = vst [vmem:[#allocation2 + $0x1e0] sm:$0xff] %v1531
          %1778 = vst [vmem:[#allocation2 + $0x1e8] sm:$0xff] %v1709
          %1779 = vst [vmem:[#allocation2 + $0x1f0] sm:$0xff] %v1533
          %1780 = vst [vmem:[#allocation2 + $0x1f8] sm:$0xff] %v1711
        $region48: #{tpu_custom_call.1} parent=31 // pred_fallthru
          _
        %p1781 = scmp.gt.s32.totalorder %s24, 0
        // Predicated region
        $region49: #{tpu_custom_call.1} parent=31 // pred_check
          %p1782 = pneg %p1781
        $region50: #{tpu_custom_call.1} parent=31 // pred_check_branch
          %1784 = sbr.rel (%p1782) target = $region52
        $region51: #{tpu_custom_call.1} parent=31 // pred_region
          %v1785 = vld [vmem:[#allocation2] sm:$0xff]
          %v1786 = vld [vmem:[#allocation2 + $0x8] sm:$0xff]
          %v1787 = vld [vmem:[#allocation2 + $0x10] sm:$0xff]
          %v1788 = vld [vmem:[#allocation2 + $0x18] sm:$0xff]
          %v1789 = vld [vmem:[#allocation2 + $0x20] sm:$0xff]
          %v1790 = vld [vmem:[#allocation2 + $0x28] sm:$0xff]
          %v1791 = vld [vmem:[#allocation2 + $0x30] sm:$0xff]
          %v1792 = vld [vmem:[#allocation2 + $0x38] sm:$0xff]
          %v1793 = vld [vmem:[#allocation2 + $0x40] sm:$0xff]
          %v1794 = vld [vmem:[#allocation2 + $0x48] sm:$0xff]
          %v1795 = vld [vmem:[#allocation2 + $0x50] sm:$0xff]
          %v1796 = vld [vmem:[#allocation2 + $0x58] sm:$0xff]
          %v1797 = vld [vmem:[#allocation2 + $0x60] sm:$0xff]
          %v1798 = vld [vmem:[#allocation2 + $0x68] sm:$0xff]
          %v1799 = vld [vmem:[#allocation2 + $0x70] sm:$0xff]
          %v1800 = vld [vmem:[#allocation2 + $0x78] sm:$0xff]
          %v1801 = vld [vmem:[#allocation2 + $0x80] sm:$0xff]
          %v1802 = vld [vmem:[#allocation2 + $0x88] sm:$0xff]
          %v1803 = vld [vmem:[#allocation2 + $0x90] sm:$0xff]
          %v1804 = vld [vmem:[#allocation2 + $0x98] sm:$0xff]
          %v1805 = vld [vmem:[#allocation2 + $0xa0] sm:$0xff]
          %v1806 = vld [vmem:[#allocation2 + $0xa8] sm:$0xff]
          %v1807 = vld [vmem:[#allocation2 + $0xb0] sm:$0xff]
          %v1808 = vld [vmem:[#allocation2 + $0xb8] sm:$0xff]
          %v1809 = vld [vmem:[#allocation2 + $0xc0] sm:$0xff]
          %v1810 = vld [vmem:[#allocation2 + $0xc8] sm:$0xff]
          %v1811 = vld [vmem:[#allocation2 + $0xd0] sm:$0xff]
          %v1812 = vld [vmem:[#allocation2 + $0xd8] sm:$0xff]
          %v1813 = vld [vmem:[#allocation2 + $0xe0] sm:$0xff]
          %v1814 = vld [vmem:[#allocation2 + $0xe8] sm:$0xff]
          %v1815 = vld [vmem:[#allocation2 + $0xf0] sm:$0xff]
          %v1816 = vld [vmem:[#allocation2 + $0xf8] sm:$0xff]
          %v1817 = vld [vmem:[#allocation2 + $0x100] sm:$0xff]
          %v1818 = vld [vmem:[#allocation2 + $0x108] sm:$0xff]
          %v1819 = vld [vmem:[#allocation2 + $0x110] sm:$0xff]
          %v1820 = vld [vmem:[#allocation2 + $0x118] sm:$0xff]
          %v1821 = vld [vmem:[#allocation2 + $0x120] sm:$0xff]
          %v1822 = vld [vmem:[#allocation2 + $0x128] sm:$0xff]
          %v1823 = vld [vmem:[#allocation2 + $0x130] sm:$0xff]
          %v1824 = vld [vmem:[#allocation2 + $0x138] sm:$0xff]
          %v1825 = vld [vmem:[#allocation2 + $0x140] sm:$0xff]
          %v1826 = vld [vmem:[#allocation2 + $0x148] sm:$0xff]
          %v1827 = vld [vmem:[#allocation2 + $0x150] sm:$0xff]
          %v1828 = vld [vmem:[#allocation2 + $0x158] sm:$0xff]
          %v1829 = vld [vmem:[#allocation2 + $0x160] sm:$0xff]
          %v1830 = vld [vmem:[#allocation2 + $0x168] sm:$0xff]
          %v1831 = vld [vmem:[#allocation2 + $0x170] sm:$0xff]
          %v1832 = vld [vmem:[#allocation2 + $0x178] sm:$0xff]
          %v1833 = vld [vmem:[#allocation2 + $0x180] sm:$0xff]
          %v1834 = vld [vmem:[#allocation2 + $0x188] sm:$0xff]
          %v1835 = vld [vmem:[#allocation2 + $0x190] sm:$0xff]
          %v1836 = vld [vmem:[#allocation2 + $0x198] sm:$0xff]
          %v1837 = vld [vmem:[#allocation2 + $0x1a0] sm:$0xff]
          %v1838 = vld [vmem:[#allocation2 + $0x1a8] sm:$0xff]
          %v1839 = vld [vmem:[#allocation2 + $0x1b0] sm:$0xff]
          %v1840 = vld [vmem:[#allocation2 + $0x1b8] sm:$0xff]
          %v1841 = vld [vmem:[#allocation2 + $0x1c0] sm:$0xff]
          %v1842 = vld [vmem:[#allocation2 + $0x1c8] sm:$0xff]
          %v1843 = vld [vmem:[#allocation2 + $0x1d0] sm:$0xff]
          %v1844 = vld [vmem:[#allocation2 + $0x1d8] sm:$0xff]
          %v1845 = vld [vmem:[#allocation2 + $0x1e0] sm:$0xff]
          %v1846 = vld [vmem:[#allocation2 + $0x1e8] sm:$0xff]
          %v1847 = vld [vmem:[#allocation2 + $0x1f0] sm:$0xff]
          %v1848 = vld [vmem:[#allocation2 + $0x1f8] sm:$0xff]
          %v1849 = vadd.f32 %v1785, %v1456
          %v1850 = vadd.f32 %v1786, %v1634
          %v1851 = vadd.f32 %v1787, %v1458
          %v1852 = vadd.f32 %v1788, %v1636
          %v1853 = vadd.f32 %v1789, %v1461
          %v1854 = vadd.f32 %v1790, %v1639
          %v1855 = vadd.f32 %v1791, %v1463
          %v1856 = vadd.f32 %v1792, %v1641
          %v1857 = vadd.f32 %v1793, %v1466
          %v1858 = vadd.f32 %v1794, %v1644
          %v1859 = vadd.f32 %v1795, %v1468
          %v1860 = vadd.f32 %v1796, %v1646
          %v1861 = vadd.f32 %v1797, %v1471
          %v1862 = vadd.f32 %v1798, %v1649
          %v1863 = vadd.f32 %v1799, %v1473
          %v1864 = vadd.f32 %v1800, %v1651
          %v1865 = vadd.f32 %v1801, %v1476
          %v1866 = vadd.f32 %v1802, %v1654
          %v1867 = vadd.f32 %v1803, %v1478
          %v1868 = vadd.f32 %v1804, %v1656
          %v1869 = vadd.f32 %v1805, %v1481
          %v1870 = vadd.f32 %v1806, %v1659
          %v1871 = vadd.f32 %v1807, %v1483
          %v1872 = vadd.f32 %v1808, %v1661
          %v1873 = vadd.f32 %v1809, %v1486
          %v1874 = vadd.f32 %v1810, %v1664
          %v1875 = vadd.f32 %v1811, %v1488
          %v1876 = vadd.f32 %v1812, %v1666
          %v1877 = vadd.f32 %v1813, %v1491
          %v1878 = vadd.f32 %v1814, %v1669
          %v1879 = vadd.f32 %v1815, %v1493
          %v1880 = vadd.f32 %v1816, %v1671
          %v1881 = vadd.f32 %v1817, %v1496
          %v1882 = vadd.f32 %v1818, %v1674
          %v1883 = vadd.f32 %v1819, %v1498
          %v1884 = vadd.f32 %v1820, %v1676
          %v1885 = vadd.f32 %v1821, %v1501
          %v1886 = vadd.f32 %v1822, %v1679
          %v1887 = vadd.f32 %v1823, %v1503
          %v1888 = vadd.f32 %v1824, %v1681
          %v1889 = vadd.f32 %v1825, %v1506
          %v1890 = vadd.f32 %v1826, %v1684
          %v1891 = vadd.f32 %v1827, %v1508
          %v1892 = vadd.f32 %v1828, %v1686
          %v1893 = vadd.f32 %v1829, %v1511
          %v1894 = vadd.f32 %v1830, %v1689
          %v1895 = vadd.f32 %v1831, %v1513
          %v1896 = vadd.f32 %v1832, %v1691
          %v1897 = vadd.f32 %v1833, %v1516
          %v1898 = vadd.f32 %v1834, %v1694
          %v1899 = vadd.f32 %v1835, %v1518
          %v1900 = vadd.f32 %v1836, %v1696
          %v1901 = vadd.f32 %v1837, %v1521
          %v1902 = vadd.f32 %v1838, %v1699
          %v1903 = vadd.f32 %v1839, %v1523
          %v1904 = vadd.f32 %v1840, %v1701
          %v1905 = vadd.f32 %v1841, %v1526
          %v1906 = vadd.f32 %v1842, %v1704
          %v1907 = vadd.f32 %v1843, %v1528
          %v1908 = vadd.f32 %v1844, %v1706
          %v1909 = vadd.f32 %v1845, %v1531
          %v1910 = vadd.f32 %v1846, %v1709
          %v1911 = vadd.f32 %v1847, %v1533
          %v1912 = vadd.f32 %v1848, %v1711
          %1913 = vst [vmem:[#allocation2] sm:$0xff] %v1849
          %1914 = vst [vmem:[#allocation2 + $0x8] sm:$0xff] %v1850
          %1915 = vst [vmem:[#allocation2 + $0x10] sm:$0xff] %v1851
          %1916 = vst [vmem:[#allocation2 + $0x18] sm:$0xff] %v1852
          %1917 = vst [vmem:[#allocation2 + $0x20] sm:$0xff] %v1853
          %1918 = vst [vmem:[#allocation2 + $0x28] sm:$0xff] %v1854
          %1919 = vst [vmem:[#allocation2 + $0x30] sm:$0xff] %v1855
          %1920 = vst [vmem:[#allocation2 + $0x38] sm:$0xff] %v1856
          %1921 = vst [vmem:[#allocation2 + $0x40] sm:$0xff] %v1857
          %1922 = vst [vmem:[#allocation2 + $0x48] sm:$0xff] %v1858
          %1923 = vst [vmem:[#allocation2 + $0x50] sm:$0xff] %v1859
          %1924 = vst [vmem:[#allocation2 + $0x58] sm:$0xff] %v1860
          %1925 = vst [vmem:[#allocation2 + $0x60] sm:$0xff] %v1861
          %1926 = vst [vmem:[#allocation2 + $0x68] sm:$0xff] %v1862
          %1927 = vst [vmem:[#allocation2 + $0x70] sm:$0xff] %v1863
          %1928 = vst [vmem:[#allocation2 + $0x78] sm:$0xff] %v1864
          %1929 = vst [vmem:[#allocation2 + $0x80] sm:$0xff] %v1865
          %1930 = vst [vmem:[#allocation2 + $0x88] sm:$0xff] %v1866
          %1931 = vst [vmem:[#allocation2 + $0x90] sm:$0xff] %v1867
          %1932 = vst [vmem:[#allocation2 + $0x98] sm:$0xff] %v1868
          %1933 = vst [vmem:[#allocation2 + $0xa0] sm:$0xff] %v1869
          %1934 = vst [vmem:[#allocation2 + $0xa8] sm:$0xff] %v1870
          %1935 = vst [vmem:[#allocation2 + $0xb0] sm:$0xff] %v1871
          %1936 = vst [vmem:[#allocation2 + $0xb8] sm:$0xff] %v1872
          %1937 = vst [vmem:[#allocation2 + $0xc0] sm:$0xff] %v1873
          %1938 = vst [vmem:[#allocation2 + $0xc8] sm:$0xff] %v1874
          %1939 = vst [vmem:[#allocation2 + $0xd0] sm:$0xff] %v1875
          %1940 = vst [vmem:[#allocation2 + $0xd8] sm:$0xff] %v1876
          %1941 = vst [vmem:[#allocation2 + $0xe0] sm:$0xff] %v1877
          %1942 = vst [vmem:[#allocation2 + $0xe8] sm:$0xff] %v1878
          %1943 = vst [vmem:[#allocation2 + $0xf0] sm:$0xff] %v1879
          %1944 = vst [vmem:[#allocation2 + $0xf8] sm:$0xff] %v1880
          %1945 = vst [vmem:[#allocation2 + $0x100] sm:$0xff] %v1881
          %1946 = vst [vmem:[#allocation2 + $0x108] sm:$0xff] %v1882
          %1947 = vst [vmem:[#allocation2 + $0x110] sm:$0xff] %v1883
          %1948 = vst [vmem:[#allocation2 + $0x118] sm:$0xff] %v1884
          %1949 = vst [vmem:[#allocation2 + $0x120] sm:$0xff] %v1885
          %1950 = vst [vmem:[#allocation2 + $0x128] sm:$0xff] %v1886
          %1951 = vst [vmem:[#allocation2 + $0x130] sm:$0xff] %v1887
          %1952 = vst [vmem:[#allocation2 + $0x138] sm:$0xff] %v1888
          %1953 = vst [vmem:[#allocation2 + $0x140] sm:$0xff] %v1889
          %1954 = vst [vmem:[#allocation2 + $0x148] sm:$0xff] %v1890
          %1955 = vst [vmem:[#allocation2 + $0x150] sm:$0xff] %v1891
          %1956 = vst [vmem:[#allocation2 + $0x158] sm:$0xff] %v1892
          %1957 = vst [vmem:[#allocation2 + $0x160] sm:$0xff] %v1893
          %1958 = vst [vmem:[#allocation2 + $0x168] sm:$0xff] %v1894
          %1959 = vst [vmem:[#allocation2 + $0x170] sm:$0xff] %v1895
          %1960 = vst [vmem:[#allocation2 + $0x178] sm:$0xff] %v1896
          %1961 = vst [vmem:[#allocation2 + $0x180] sm:$0xff] %v1897
          %1962 = vst [vmem:[#allocation2 + $0x188] sm:$0xff] %v1898
          %1963 = vst [vmem:[#allocation2 + $0x190] sm:$0xff] %v1899
          %1964 = vst [vmem:[#allocation2 + $0x198] sm:$0xff] %v1900
          %1965 = vst [vmem:[#allocation2 + $0x1a0] sm:$0xff] %v1901
          %1966 = vst [vmem:[#allocation2 + $0x1a8] sm:$0xff] %v1902
          %1967 = vst [vmem:[#allocation2 + $0x1b0] sm:$0xff] %v1903
          %1968 = vst [vmem:[#allocation2 + $0x1b8] sm:$0xff] %v1904
          %1969 = vst [vmem:[#allocation2 + $0x1c0] sm:$0xff] %v1905
          %1970 = vst [vmem:[#allocation2 + $0x1c8] sm:$0xff] %v1906
          %1971 = vst [vmem:[#allocation2 + $0x1d0] sm:$0xff] %v1907
          %1972 = vst [vmem:[#allocation2 + $0x1d8] sm:$0xff] %v1908
          %1973 = vst [vmem:[#allocation2 + $0x1e0] sm:$0xff] %v1909
          %1974 = vst [vmem:[#allocation2 + $0x1e8] sm:$0xff] %v1910
          %1975 = vst [vmem:[#allocation2 + $0x1f0] sm:$0xff] %v1911
          %1976 = vst [vmem:[#allocation2 + $0x1f8] sm:$0xff] %v1912
        $region52: #{tpu_custom_call.1} parent=31 // pred_fallthru
          _
        %p1977 = scmp.eq.s32.totalorder %s24, 1
        // Predicated region
        $region53: #{tpu_custom_call.1} parent=31 // pred_check
          %p1978 = pneg %p1977
        $region54: #{tpu_custom_call.1} parent=31 // pred_check_branch
          %1980 = sbr.rel (%p1978) target = $region56
        $region55: #{tpu_custom_call.1} parent=31 // pred_region
          %v1981 = vld [vmem:[#allocation2] sm:$0xff]
          %v1982 = vld [vmem:[#allocation2 + $0x8] sm:$0xff]
          %v1983 = vld [vmem:[#allocation2 + $0x10] sm:$0xff]
          %v1984 = vld [vmem:[#allocation2 + $0x18] sm:$0xff]
          %v1985 = vld [vmem:[#allocation2 + $0x20] sm:$0xff]
          %v1986 = vld [vmem:[#allocation2 + $0x28] sm:$0xff]
          %v1987 = vld [vmem:[#allocation2 + $0x30] sm:$0xff]
          %v1988 = vld [vmem:[#allocation2 + $0x38] sm:$0xff]
          %v1989 = vld [vmem:[#allocation2 + $0x40] sm:$0xff]
          %v1990 = vld [vmem:[#allocation2 + $0x48] sm:$0xff]
          %v1991 = vld [vmem:[#allocation2 + $0x50] sm:$0xff]
          %v1992 = vld [vmem:[#allocation2 + $0x58] sm:$0xff]
          %v1993 = vld [vmem:[#allocation2 + $0x60] sm:$0xff]
          %v1994 = vld [vmem:[#allocation2 + $0x68] sm:$0xff]
          %v1995 = vld [vmem:[#allocation2 + $0x70] sm:$0xff]
          %v1996 = vld [vmem:[#allocation2 + $0x78] sm:$0xff]
          %v1997 = vld [vmem:[#allocation2 + $0x80] sm:$0xff]
          %v1998 = vld [vmem:[#allocation2 + $0x88] sm:$0xff]
          %v1999 = vld [vmem:[#allocation2 + $0x90] sm:$0xff]
          %v2000 = vld [vmem:[#allocation2 + $0x98] sm:$0xff]
          %v2001 = vld [vmem:[#allocation2 + $0xa0] sm:$0xff]
          %v2002 = vld [vmem:[#allocation2 + $0xa8] sm:$0xff]
          %v2003 = vld [vmem:[#allocation2 + $0xb0] sm:$0xff]
          %v2004 = vld [vmem:[#allocation2 + $0xb8] sm:$0xff]
          %v2005 = vld [vmem:[#allocation2 + $0xc0] sm:$0xff]
          %v2006 = vld [vmem:[#allocation2 + $0xc8] sm:$0xff]
          %v2007 = vld [vmem:[#allocation2 + $0xd0] sm:$0xff]
          %v2008 = vld [vmem:[#allocation2 + $0xd8] sm:$0xff]
          %v2009 = vld [vmem:[#allocation2 + $0xe0] sm:$0xff]
          %v2010 = vld [vmem:[#allocation2 + $0xe8] sm:$0xff]
          %v2011 = vld [vmem:[#allocation2 + $0xf0] sm:$0xff]
          %v2012 = vld [vmem:[#allocation2 + $0xf8] sm:$0xff]
          %v2013 = vld [vmem:[#allocation2 + $0x100] sm:$0xff]
          %v2014 = vld [vmem:[#allocation2 + $0x108] sm:$0xff]
          %v2015 = vld [vmem:[#allocation2 + $0x110] sm:$0xff]
          %v2016 = vld [vmem:[#allocation2 + $0x118] sm:$0xff]
          %v2017 = vld [vmem:[#allocation2 + $0x120] sm:$0xff]
          %v2018 = vld [vmem:[#allocation2 + $0x128] sm:$0xff]
          %v2019 = vld [vmem:[#allocation2 + $0x130] sm:$0xff]
          %v2020 = vld [vmem:[#allocation2 + $0x138] sm:$0xff]
          %v2021 = vld [vmem:[#allocation2 + $0x140] sm:$0xff]
          %v2022 = vld [vmem:[#allocation2 + $0x148] sm:$0xff]
          %v2023 = vld [vmem:[#allocation2 + $0x150] sm:$0xff]
          %v2024 = vld [vmem:[#allocation2 + $0x158] sm:$0xff]
          %v2025 = vld [vmem:[#allocation2 + $0x160] sm:$0xff]
          %v2026 = vld [vmem:[#allocation2 + $0x168] sm:$0xff]
          %v2027 = vld [vmem:[#allocation2 + $0x170] sm:$0xff]
          %v2028 = vld [vmem:[#allocation2 + $0x178] sm:$0xff]
          %v2029 = vld [vmem:[#allocation2 + $0x180] sm:$0xff]
          %v2030 = vld [vmem:[#allocation2 + $0x188] sm:$0xff]
          %v2031 = vld [vmem:[#allocation2 + $0x190] sm:$0xff]
          %v2032 = vld [vmem:[#allocation2 + $0x198] sm:$0xff]
          %v2033 = vld [vmem:[#allocation2 + $0x1a0] sm:$0xff]
          %v2034 = vld [vmem:[#allocation2 + $0x1a8] sm:$0xff]
          %v2035 = vld [vmem:[#allocation2 + $0x1b0] sm:$0xff]
          %v2036 = vld [vmem:[#allocation2 + $0x1b8] sm:$0xff]
          %v2037 = vld [vmem:[#allocation2 + $0x1c0] sm:$0xff]
          %v2038 = vld [vmem:[#allocation2 + $0x1c8] sm:$0xff]
          %v2039 = vld [vmem:[#allocation2 + $0x1d0] sm:$0xff]
          %v2040 = vld [vmem:[#allocation2 + $0x1d8] sm:$0xff]
          %v2041 = vld [vmem:[#allocation2 + $0x1e0] sm:$0xff]
          %v2042 = vld [vmem:[#allocation2 + $0x1e8] sm:$0xff]
          %v2043 = vld [vmem:[#allocation2 + $0x1f0] sm:$0xff]
          %v2044 = vld [vmem:[#allocation2 + $0x1f8] sm:$0xff]
          %v2045 = vpack.c.bf16 %v1982, %v1981
          %v2046 = vpack.c.bf16 %v1984, %v1983
          %v2047 = vpack.c.bf16 %v1986, %v1985
          %v2048 = vpack.c.bf16 %v1988, %v1987
          %v2049 = vpack.c.bf16 %v1990, %v1989
          %v2050 = vpack.c.bf16 %v1992, %v1991
          %v2051 = vpack.c.bf16 %v1994, %v1993
          %v2052 = vpack.c.bf16 %v1996, %v1995
          %v2053 = vpack.c.bf16 %v1998, %v1997
          %v2054 = vpack.c.bf16 %v2000, %v1999
          %v2055 = vpack.c.bf16 %v2002, %v2001
          %v2056 = vpack.c.bf16 %v2004, %v2003
          %v2057 = vpack.c.bf16 %v2006, %v2005
          %v2058 = vpack.c.bf16 %v2008, %v2007
          %v2059 = vpack.c.bf16 %v2010, %v2009
          %v2060 = vpack.c.bf16 %v2012, %v2011
          %v2061 = vpack.c.bf16 %v2014, %v2013
          %v2062 = vpack.c.bf16 %v2016, %v2015
          %v2063 = vpack.c.bf16 %v2018, %v2017
          %v2064 = vpack.c.bf16 %v2020, %v2019
          %v2065 = vpack.c.bf16 %v2022, %v2021
          %v2066 = vpack.c.bf16 %v2024, %v2023
          %v2067 = vpack.c.bf16 %v2026, %v2025
          %v2068 = vpack.c.bf16 %v2028, %v2027
          %v2069 = vpack.c.bf16 %v2030, %v2029
          %v2070 = vpack.c.bf16 %v2032, %v2031
          %v2071 = vpack.c.bf16 %v2034, %v2033
          %v2072 = vpack.c.bf16 %v2036, %v2035
          %v2073 = vpack.c.bf16 %v2038, %v2037
          %v2074 = vpack.c.bf16 %v2040, %v2039
          %v2075 = vpack.c.bf16 %v2042, %v2041
          %v2076 = vpack.c.bf16 %v2044, %v2043
          %2077 = vst [vmem:[#allocation9] sm:$0xff] %v2045
          %2078 = vst [vmem:[#allocation9 + $0x8] sm:$0xff] %v2046
          %2079 = vst [vmem:[#allocation9 + $0x10] sm:$0xff] %v2047
          %2080 = vst [vmem:[#allocation9 + $0x18] sm:$0xff] %v2048
          %2081 = vst [vmem:[#allocation9 + $0x20] sm:$0xff] %v2049
          %2082 = vst [vmem:[#allocation9 + $0x28] sm:$0xff] %v2050
          %2083 = vst [vmem:[#allocation9 + $0x30] sm:$0xff] %v2051
          %2084 = vst [vmem:[#allocation9 + $0x38] sm:$0xff] %v2052
          %2085 = vst [vmem:[#allocation9 + $0x40] sm:$0xff] %v2053
          %2086 = vst [vmem:[#allocation9 + $0x48] sm:$0xff] %v2054
          %2087 = vst [vmem:[#allocation9 + $0x50] sm:$0xff] %v2055
          %2088 = vst [vmem:[#allocation9 + $0x58] sm:$0xff] %v2056
          %2089 = vst [vmem:[#allocation9 + $0x60] sm:$0xff] %v2057
          %2090 = vst [vmem:[#allocation9 + $0x68] sm:$0xff] %v2058
          %2091 = vst [vmem:[#allocation9 + $0x70] sm:$0xff] %v2059
          %2092 = vst [vmem:[#allocation9 + $0x78] sm:$0xff] %v2060
          %2093 = vst [vmem:[#allocation9 + $0x80] sm:$0xff] %v2061
          %2094 = vst [vmem:[#allocation9 + $0x88] sm:$0xff] %v2062
          %2095 = vst [vmem:[#allocation9 + $0x90] sm:$0xff] %v2063
          %2096 = vst [vmem:[#allocation9 + $0x98] sm:$0xff] %v2064
          %2097 = vst [vmem:[#allocation9 + $0xa0] sm:$0xff] %v2065
          %2098 = vst [vmem:[#allocation9 + $0xa8] sm:$0xff] %v2066
          %2099 = vst [vmem:[#allocation9 + $0xb0] sm:$0xff] %v2067
          %2100 = vst [vmem:[#allocation9 + $0xb8] sm:$0xff] %v2068
          %2101 = vst [vmem:[#allocation9 + $0xc0] sm:$0xff] %v2069
          %2102 = vst [vmem:[#allocation9 + $0xc8] sm:$0xff] %v2070
          %2103 = vst [vmem:[#allocation9 + $0xd0] sm:$0xff] %v2071
          %2104 = vst [vmem:[#allocation9 + $0xd8] sm:$0xff] %v2072
          %2105 = vst [vmem:[#allocation9 + $0xe0] sm:$0xff] %v2073
          %2106 = vst [vmem:[#allocation9 + $0xe8] sm:$0xff] %v2074
          %2107 = vst [vmem:[#allocation9 + $0xf0] sm:$0xff] %v2075
          %2108 = vst [vmem:[#allocation9 + $0xf8] sm:$0xff] %v2076
        $region56: #{tpu_custom_call.1} parent=31 // pred_fallthru
          _
        // Predicated region
        $region57: #{tpu_custom_call.1} parent=31 // pred_check
          %p2109 = pneg %p127
        $region58: #{tpu_custom_call.1} parent=31 // pred_check_branch
          %2111 = sbr.rel (%p2109) target = $region60
        $region59: #{tpu_custom_call.1} parent=31 // pred_region
          %s2112 = smul.u32 32, %s23
          %2114 = vsyncadd [#allocation5], 0
          %s2115 = smul.addr %s2112, 2
          %s2116 = smul.addr %s2115, 4
          %s2117 = scalar_lea.hbm %s3, %s2116
          %s2118 = sshll.u32 [#allocation9], 4
          %s2119 = int_to_ptr.vmem [resolvable:$true] %s2118
          %s2120 = sshll.u32 %s2117, 4
          %s2121 = int_to_ptr.hbm [resolvable:$true] %s2120
          %2126 = dma.vmem_to_hbm [thread:$0]  %s2119, 4096, %s2121, [#allocation5], 128, 128, 8
        $region60: #{tpu_custom_call.1} parent=31 // pred_fallthru
          _
        // Predicated region
        $region61: #{tpu_custom_call.1} parent=31 // pred_check
          %p2127 = pneg %p127
        $region62: #{tpu_custom_call.1} parent=31 // pred_check_branch
          %2129 = sbr.rel (%p2127) target = $region64
        $region63: #{tpu_custom_call.1} parent=31 // pred_region
          %2131 = dma.done [#allocation5], 4096
        $region64: #{tpu_custom_call.1} parent=31 // pred_fallthru
          _
      $region32: #{tpu_custom_call.1} parent=5 // pred_fallthru
        _
      %p2132 = scmp.le.s32.totalorder 2, %s14
      // Predicated region
      $region65: #{tpu_custom_call.1} parent=5 // pred_check
        %p2133 = pneg %p2132
      $region66: #{tpu_custom_call.1} parent=5 // pred_check_branch
        %2135 = sbr.rel (%p2133) target = $region68
      $region67: #{tpu_custom_call.1} parent=5 // pred_region
        %s2136 = ssub.s32 %s14, 2
      $region68: #{tpu_custom_call.1} parent=5 // pred_fallthru
        _
    $region6: #{tpu_custom_call.1} parent=1 // loop_footer
      %s18 = sadd.s32 1, %s14
    $region7: #{tpu_custom_call.1} parent=1 // loop_footer_branch
      %13 = sbr.rel target = $region3
    $region8: #{tpu_custom_call.1} parent=1 // loop_exit
      _
    %2137 = vsyncpa [#allocation4], 1
    %s2138 = scalar_lea.sflag [#allocation4], 1
    %2139 = vsyncpa %s2138, 1
    %2140 = vsyncpa [#allocation7], 1
    %s2141 = scalar_lea.sflag [#allocation7], 1
    %2142 = vsyncpa %s2141, 1
    %2143 = vsyncpa [#allocation5], 1
    %s2144 = scalar_lea.sflag [#allocation5], 1
    %2145 = vsyncpa %s2144, 1

// kernel: tpu_custom_call.1
$region0: #{tpu_custom_call.1}
  #allocation0 [shape = 'u32[]', space=smem, size = 0x4, offset = 0x4, fixed_abs, tag = 'smem constant byte address 0x4 - core index']
  #allocation1 [shape = 'u32[72,128]{1,0:T(1,128)}', space=vmem, size = 0x9000, scoped, tag = 'internal scratch']
  #allocation2 [shape = 'f32[256,256]{1,0:T(8,128)}', space=vmem, size = 0x40000, scoped, tag = 'scratch operand']
  %s0 = inlined_call_operand.hbm [shape: bf16[256,256], index: 0, kind: input, shape index: {}]
  %s1 = inlined_call_operand.hbm [shape: bf16[2,256,256], index: 1, kind: input, shape index: {}]
  %s2 = inlined_call_operand.hbm [shape: bf16[512,256], index: 2, kind: input, shape index: {}]
  %s3 = inlined_call_operand.hbm [shape: bf16[256,256], index: 3, kind: output, shape index: {}]
  %s4 = sld [smem:[#allocation0]]
  $region69: #{tpu_custom_call.1} parent=0
    _
  %s6 = ssub.s32 1, %s4
  %s7 = scalar_select 0, %s6, %s4
  $region1: #{tpu_custom_call.1} parent=0
    #allocation3 [shape = 'u8[131072]{0}', space=vmem, size = 0x20000, scoped, tag = 'input window, operand 0, single buffered']
    #allocation4 [shape = 's32[2]{0}', space=sflag, size = 0x8, scoped, tag = 'scoped memory for tpu_custom_call.1']
    #allocation5 [shape = 's32[2]{0}', space=sflag, size = 0x8, scoped, tag = 'scoped memory for tpu_custom_call.1']
    #allocation6 [shape = 'u8[262144]{0}', space=vmem, size = 0x40000, scoped, tag = 'input window, operand 1']
    #allocation7 [shape = 's32[2]{0}', space=sflag, size = 0x8, scoped, tag = 'scoped memory for tpu_custom_call.1']
    #allocation8 [shape = 'u8[262144]{0}', space=vmem, size = 0x40000, scoped, tag = 'input window, operand 2']
    #allocation9 [shape = 'u8[131072]{0}', space=vmem, size = 0x20000, scoped, tag = 'output window, operand 0, single buffered']
    %8 = vsyncpa [#allocation4], 0
    %9 = vsyncpa [#allocation7], 0
    %s10 = scalar_lea.sflag [#allocation7], 1
    %11 = vsyncpa %s10, 0
    %12 = vsyncpa [#allocation5], 0
    loop: start=0, step=1, limit=4
    $region2: #{tpu_custom_call.1} parent=1 // loop_pre_header
      _
    $region3: #{tpu_custom_call.1} parent=1 // loop_header
      %s14 = sphi 0, %s18
      %p15 = scmp.ge.s32.totalorder %s14, 4
      %s21 = sphi 0, %s33
      %s22 = sphi 0, %s29
      %s23 = sphi 0, %s21
      %s24 = sphi 0, %s22
      %s25 = sphi 0, %s23
      %s26 = sphi 0, %s24
      %s36 = sphi 0, %s38
      %s39 = sphi 0, %s36
      %s40 = sphi 0, %s39
      %s56 = sphi 0, %s40
      %s62 = sphi 0, %s64
      %s65 = sphi 0, %s62
      %s66 = sphi 0, %s65
      %s82 = sphi 0, %s66
      %s88 = sphi 0, %s90
      %s91 = sphi 0, %s88
      %s92 = sphi 0, %s91
      %s108 = sphi 0, %s92
      %s114 = sphi 0, %s116
      %s117 = sphi 0, %s114
      %s118 = sphi 0, %s117
      %s134 = sphi 0, %s118
    $region4: #{tpu_custom_call.1} parent=1 // loop_header_branch
      %17 = sbr.rel (%p15) target = $region8
    $region5: #{tpu_custom_call.1} parent=1 // loop_body
      %s19 = ssub.s32 %s14, 1
      %s20 = ssub.s32 %s14, 2
      %s27 = sadd.s32 1, %s22
      %p28 = scmp.ge.s32.totalorder %s27, 2
      %s29 = scalar_select %p28, 0, %s27
      %s30 = sadd.s32 1, %s21
      %s31 = scalar_select %p28, %s30, %s21
      %p32 = scmp.ge.s32.totalorder %s31, 1
      %s33 = scalar_select %p32, 0, %s31
      %s34 = ssub.s32 %s21, %s33
      %p35 = scmp.eq.s32.totalorder %s34, 0
      %s37 = sadd.s32 %s36, 1
      %s38 = scalar_select %p35, %s36, %s37
      %p41 = pneg %p35
      %p42 = scmp.eq.s32.totalorder %s14, 1
      %p43 = por %p41, %p42
      %p44 = scmp.ne.s32.totalorder %s36, %s39
      %p45 = scmp.eq.s32.totalorder %s14, 0
      %p46 = por %p44, %p45
      %p47 = scmp.ne.s32.totalorder %s36, %s39
      %p48 = scmp.eq.s32.totalorder %s19, 1
      %p49 = por %p47, %p48
      %p50 = scmp.ne.s32.totalorder %s39, %s40
      %p51 = scmp.eq.s32.totalorder %s19, 0
      %p52 = por %p50, %p51
      %p53 = scmp.ne.s32.totalorder %s39, %s40
      %p54 = scmp.eq.s32.totalorder %s20, 1
      %p55 = por %p53, %p54
      %p57 = scmp.ne.s32.totalorder %s40, %s56
      %p58 = scmp.eq.s32.totalorder %s20, 0
      %p59 = por %p57, %p58
      %s60 = ssub.s32 %s22, %s29
      %p61 = scmp.eq.s32.totalorder %s60, 0
      %s63 = sadd.s32 %s62, 1
      %s64 = scalar_select %p61, %s62, %s63
      %p67 = pneg %p61
      %p68 = scmp.eq.s32.totalorder %s14, 1
      %p69 = por %p67, %p68
      %p70 = scmp.ne.s32.totalorder %s62, %s65
      %p71 = scmp.eq.s32.totalorder %s14, 0
      %p72 = por %p70, %p71
      %p73 = scmp.ne.s32.totalorder %s62, %s65
      %p74 = scmp.eq.s32.totalorder %s19, 1
      %p75 = por %p73, %p74
      %p76 = scmp.ne.s32.totalorder %s65, %s66
      %p77 = scmp.eq.s32.totalorder %s19, 0
      %p78 = por %p76, %p77
      %p79 = scmp.ne.s32.totalorder %s65, %s66
      %p80 = scmp.eq.s32.totalorder %s20, 1
      %p81 = por %p79, %p80
      %p83 = scmp.ne.s32.totalorder %s66, %s82
      %p84 = scmp.eq.s32.totalorder %s20, 0
      %p85 = por %p83, %p84
      %s86 = ssub.s32 %s22, %s29
      %p87 = scmp.eq.s32.totalorder %s86, 0
      %s89 = sadd.s32 %s88, 1
      %s90 = scalar_select %p87, %s88, %s89
      %p93 = pneg %p87
      %p94 = scmp.eq.s32.totalorder %s14, 1
      %p95 = por %p93, %p94
      %p96 = scmp.ne.s32.totalorder %s88, %s91
      %p97 = scmp.eq.s32.totalorder %s14, 0
      %p98 = por %p96, %p97
      %p99 = scmp.ne.s32.totalorder %s88, %s91
      %p100 = scmp.eq.s32.totalorder %s19, 1
      %p101 = por %p99, %p100
      %p102 = scmp.ne.s32.totalorder %s91, %s92
      %p103 = scmp.eq.s32.totalorder %s19, 0
      %p104 = por %p102, %p103
      %p105 = scmp.ne.s32.totalorder %s91, %s92
      %p106 = scmp.eq.s32.totalorder %s20, 1
      %p107 = por %p105, %p106
      %p109 = scmp.ne.s32.totalorder %s92, %s108
      %p110 = scmp.eq.s32.totalorder %s20, 0
      %p111 = por %p109, %p110
      %s112 = ssub.s32 %s21, %s33
      %p113 = scmp.eq.s32.totalorder %s112, 0
      %s115 = sadd.s32 %s114, 1
      %s116 = scalar_select %p113, %s114, %s115
      %p119 = pneg %p113
      %p120 = scmp.eq.s32.totalorder %s14, 1
      %p121 = por %p119, %p120
      %p122 = scmp.ne.s32.totalorder %s114, %s117
      %p123 = scmp.eq.s32.totalorder %s14, 0
      %p124 = por %p122, %p123
      %p125 = scmp.ne.s32.totalorder %s114, %s117
      %p126 = scmp.eq.s32.totalorder %s19, 1
      %p127 = por %p125, %p126
      %p128 = scmp.ne.s32.totalorder %s117, %s118
      %p129 = scmp.eq.s32.totalorder %s19, 0
      %p130 = por %p128, %p129
      %p131 = scmp.ne.s32.totalorder %s117, %s118
      %p132 = scmp.eq.s32.totalorder %s20, 1
      %p133 = por %p131, %p132
      %p135 = scmp.ne.s32.totalorder %s118, %s134
      %p136 = scmp.eq.s32.totalorder %s20, 0
      %p137 = por %p135, %p136
      %p138 = scmp.le.s32.totalorder 1, %s14
      %p139 = scmp.lt.s32.totalorder %s14, 3
      %p140 = pnand %p138, %p139
      %p141 = pneg %p140
      // Predicated region
      $region9: #{tpu_custom_call.1} parent=5 // pred_check
        _
      $region10: #{tpu_custom_call.1} parent=5 // pred_check_branch
        %143 = sbr.rel (%p140) target = $region12
      $region11: #{tpu_custom_call.1} parent=5 // pred_region
        %s144 = ssub.s32 %s14, 1
        // Predicated region
        $region13: #{tpu_custom_call.1} parent=11 // pred_check
          %p145 = pneg %p52
        $region14: #{tpu_custom_call.1} parent=11 // pred_check_branch
          %147 = sbr.rel (%p145) target = $region16
        $region15: #{tpu_custom_call.1} parent=11 // pred_region
          %s148 = smul.u32 32, %s23
          %150 = vsyncadd [#allocation4], 0
          %s151 = smul.addr %s148, 2
          %s152 = smul.addr %s151, 4
          %s153 = scalar_lea.hbm %s0, %s152
          %s154 = sshll.u32 %s153, 4
          %s155 = int_to_ptr.hbm [resolvable:$true] %s154
          %s156 = sshll.u32 [#allocation3], 4
          %s157 = int_to_ptr.vmem [resolvable:$true] %s156
          %162 = dma.hbm_to_vmem [thread:$0]  %s155, 4096, %s157, [#allocation4], 128, 128, 8
        $region16: #{tpu_custom_call.1} parent=11 // pred_fallthru
          _
      $region12: #{tpu_custom_call.1} parent=5 // pred_fallthru
        _
      %p163 = scmp.lt.s32.totalorder %s14, 2
      // Predicated region
      $region17: #{tpu_custom_call.1} parent=5 // pred_check
        %p164 = pneg %p163
      $region18: #{tpu_custom_call.1} parent=5 // pred_check_branch
        %166 = sbr.rel (%p164) target = $region20
      $region19: #{tpu_custom_call.1} parent=5 // pred_region
        // Predicated region
        $region21: #{tpu_custom_call.1} parent=19 // pred_check
          %p167 = pneg %p72
        $region22: #{tpu_custom_call.1} parent=19 // pred_check_branch
          %169 = sbr.rel (%p167) target = $region24
        $region23: #{tpu_custom_call.1} parent=19 // pred_region
          %s170 = sand.u32 %s14, 1
          %s171 = scalar_lea.sflag [#allocation7], %s170
          %s172 = sand.u32 %s62, 1
          %s173 = smul.addr %s172, 256
          %s174 = scalar_lea.vmem [#allocation6], %s173
          %176 = vsyncadd %s171, 0
          %s177 = smul.addr %s22, 64
          %s178 = smul.addr %s177, 4
          %s179 = scalar_lea.hbm %s1, %s178
          %s180 = sshll.u32 %s179, 4
          %s181 = int_to_ptr.hbm [resolvable:$true] %s180
          %s182 = sshll.u32 %s174, 4
          %s183 = int_to_ptr.vmem [resolvable:$true] %s182
          %188 = dma.hbm_to_vmem [thread:$0]  %s181, 4096, %s183, %s171, 128, 128, 8
        $region24: #{tpu_custom_call.1} parent=19 // pred_fallthru
          _
        // Predicated region
        $region25: #{tpu_custom_call.1} parent=19 // pred_check
          %p189 = pneg %p98
        $region26: #{tpu_custom_call.1} parent=19 // pred_check_branch
          %191 = sbr.rel (%p189) target = $region28
        $region27: #{tpu_custom_call.1} parent=19 // pred_region
          %s192 = sand.u32 %s14, 1
          %s193 = scalar_lea.sflag [#allocation7], %s192
          %s194 = sand.u32 %s88, 1
          %s195 = smul.addr %s194, 256
          %s196 = scalar_lea.vmem [#allocation8], %s195
          %s197 = smul.u32 32, %s22
          %199 = vsyncadd %s193, 0
          %s200 = smul.addr %s197, 2
          %s201 = smul.addr %s200, 4
          %s202 = scalar_lea.hbm %s2, %s201
          %s203 = sshll.u32 %s202, 4
          %s204 = int_to_ptr.hbm [resolvable:$true] %s203
          %s205 = sshll.u32 %s196, 4
          %s206 = int_to_ptr.vmem [resolvable:$true] %s205
          %211 = dma.hbm_to_vmem [thread:$0]  %s204, 4096, %s206, %s193, 128, 128, 8
        $region28: #{tpu_custom_call.1} parent=19 // pred_fallthru
          _
      $region20: #{tpu_custom_call.1} parent=5 // pred_fallthru
        _
      %p212 = scmp.le.s32.totalorder 1, %s14
      %p213 = scmp.lt.s32.totalorder %s14, 3
      %p214 = pnand %p212, %p213
      %p215 = pneg %p214
      // Predicated region
      $region29: #{tpu_custom_call.1} parent=5 // pred_check
        _
      $region30: #{tpu_custom_call.1} parent=5 // pred_check_branch
        %217 = sbr.rel (%p214) target = $region32
      $region31: #{tpu_custom_call.1} parent=5 // pred_region
        %s218 = ssub.s32 %s14, 1
        // Predicated region
        $region33: #{tpu_custom_call.1} parent=31 // pred_check
          %p219 = pneg %p52
        $region34: #{tpu_custom_call.1} parent=31 // pred_check_branch
          %221 = sbr.rel (%p219) target = $region36
        $region35: #{tpu_custom_call.1} parent=31 // pred_region
          %223 = dma.done [#allocation4], 4096
        $region36: #{tpu_custom_call.1} parent=31 // pred_fallthru
          _
        %s224 = sand.u32 %s19, 1
        %s225 = scalar_lea.sflag [#allocation7], %s224
        %s226 = sand.u32 %s65, 1
        %s227 = smul.addr %s226, 256
        %s228 = scalar_lea.vmem [#allocation6], %s227
        // Predicated region
        $region37: #{tpu_custom_call.1} parent=31 // pred_check
          %p229 = pneg %p78
        $region38: #{tpu_custom_call.1} parent=31 // pred_check_branch
          %231 = sbr.rel (%p229) target = $region40
        $region39: #{tpu_custom_call.1} parent=31 // pred_region
          %233 = dma.done %s225, 4096
        $region40: #{tpu_custom_call.1} parent=31 // pred_fallthru
          _
        %s234 = sand.u32 %s19, 1
        %s235 = scalar_lea.sflag [#allocation7], %s234
        %s236 = sand.u32 %s91, 1
        %s237 = smul.addr %s236, 256
        %s238 = scalar_lea.vmem [#allocation8], %s237
        // Predicated region
        $region41: #{tpu_custom_call.1} parent=31 // pred_check
          %p239 = pneg %p104
        $region42: #{tpu_custom_call.1} parent=31 // pred_check_branch
          %241 = sbr.rel (%p239) target = $region44
        $region43: #{tpu_custom_call.1} parent=31 // pred_region
          %243 = dma.done %s235, 4096
        $region44: #{tpu_custom_call.1} parent=31 // pred_fallthru
          _
        %p244 = pneg %p52
        %p245 = pneg %p49
        %s246 = sand.u32 %s19, 1
        %s247 = scalar_lea.sflag [#allocation7], %s246
        %s248 = sand.u32 %s65, 1
        %s249 = smul.addr %s248, 256
        %s250 = scalar_lea.vmem [#allocation6], %s249
        %p251 = pneg %p78
        %p252 = pneg %p75
        %s253 = sand.u32 %s19, 1
        %s254 = scalar_lea.sflag [#allocation7], %s253
        %s255 = sand.u32 %s91, 1
        %s256 = smul.addr %s255, 256
        %s257 = scalar_lea.vmem [#allocation8], %s256
        %p258 = pneg %p104
        %p259 = pneg %p101
        %p260 = pneg %p130
        %p261 = pneg %p127
        %s262 = smul.u32 32, %s23
        %s263 = smul.u32 32, %s24
        %s264 = smul.u32 32, %s23
        %v265 = vld [vmem:[#allocation3] sm:$0xff]
        %v266 = vld [vmem:[#allocation3 + $0x8] sm:$0xff]
        %v267 = vld [vmem:[#allocation3 + $0x10] sm:$0xff]
        %v268 = vld [vmem:[#allocation3 + $0x18] sm:$0xff]
        %v269 = vld [vmem:[#allocation3 + $0x20] sm:$0xff]
        %v270 = vld [vmem:[#allocation3 + $0x28] sm:$0xff]
        %v271 = vld [vmem:[#allocation3 + $0x30] sm:$0xff]
        %v272 = vld [vmem:[#allocation3 + $0x38] sm:$0xff]
        %v273 = vld [vmem:[#allocation3 + $0x40] sm:$0xff]
        %v274 = vld [vmem:[#allocation3 + $0x48] sm:$0xff]
        %v275 = vld [vmem:[#allocation3 + $0x50] sm:$0xff]
        %v276 = vld [vmem:[#allocation3 + $0x58] sm:$0xff]
        %v277 = vld [vmem:[#allocation3 + $0x60] sm:$0xff]
        %v278 = vld [vmem:[#allocation3 + $0x68] sm:$0xff]
        %v279 = vld [vmem:[#allocation3 + $0x70] sm:$0xff]
        %v280 = vld [vmem:[#allocation3 + $0x78] sm:$0xff]
        %v281 = vld [vmem:[#allocation3 + $0x80] sm:$0xff]
        %v282 = vld [vmem:[#allocation3 + $0x88] sm:$0xff]
        %v283 = vld [vmem:[#allocation3 + $0x90] sm:$0xff]
        %v284 = vld [vmem:[#allocation3 + $0x98] sm:$0xff]
        %v285 = vld [vmem:[#allocation3 + $0xa0] sm:$0xff]
        %v286 = vld [vmem:[#allocation3 + $0xa8] sm:$0xff]
        %v287 = vld [vmem:[#allocation3 + $0xb0] sm:$0xff]
        %v288 = vld [vmem:[#allocation3 + $0xb8] sm:$0xff]
        %v289 = vld [vmem:[#allocation3 + $0xc0] sm:$0xff]
        %v290 = vld [vmem:[#allocation3 + $0xc8] sm:$0xff]
        %v291 = vld [vmem:[#allocation3 + $0xd0] sm:$0xff]
        %v292 = vld [vmem:[#allocation3 + $0xd8] sm:$0xff]
        %v293 = vld [vmem:[#allocation3 + $0xe0] sm:$0xff]
        %v294 = vld [vmem:[#allocation3 + $0xe8] sm:$0xff]
        %v295 = vld [vmem:[#allocation3 + $0xf0] sm:$0xff]
        %v296 = vld [vmem:[#allocation3 + $0xf8] sm:$0xff]
        %v297 = vld [vmem:[%s228] sm:$0xff]
        %v298 = vld [vmem:[%s228 + $0x8] sm:$0xff]
        %v299 = vld [vmem:[%s228 + $0x10] sm:$0xff]
        %v300 = vld [vmem:[%s228 + $0x18] sm:$0xff]
        %v301 = vld [vmem:[%s228 + $0x20] sm:$0xff]
        %v302 = vld [vmem:[%s228 + $0x28] sm:$0xff]
        %v303 = vld [vmem:[%s228 + $0x30] sm:$0xff]
        %v304 = vld [vmem:[%s228 + $0x38] sm:$0xff]
        %v305 = vld [vmem:[%s228 + $0x40] sm:$0xff]
        %v306 = vld [vmem:[%s228 + $0x48] sm:$0xff]
        %v307 = vld [vmem:[%s228 + $0x50] sm:$0xff]
        %v308 = vld [vmem:[%s228 + $0x58] sm:$0xff]
        %v309 = vld [vmem:[%s228 + $0x60] sm:$0xff]
        %v310 = vld [vmem:[%s228 + $0x68] sm:$0xff]
        %v311 = vld [vmem:[%s228 + $0x70] sm:$0xff]
        %v312 = vld [vmem:[%s228 + $0x78] sm:$0xff]
        %v313 = vld [vmem:[%s228 + $0x80] sm:$0xff]
        %v314 = vld [vmem:[%s228 + $0x88] sm:$0xff]
        %v315 = vld [vmem:[%s228 + $0x90] sm:$0xff]
        %v316 = vld [vmem:[%s228 + $0x98] sm:$0xff]
        %v317 = vld [vmem:[%s228 + $0xa0] sm:$0xff]
        %v318 = vld [vmem:[%s228 + $0xa8] sm:$0xff]
        %v319 = vld [vmem:[%s228 + $0xb0] sm:$0xff]
        %v320 = vld [vmem:[%s228 + $0xb8] sm:$0xff]
        %v321 = vld [vmem:[%s228 + $0xc0] sm:$0xff]
        %v322 = vld [vmem:[%s228 + $0xc8] sm:$0xff]
        %v323 = vld [vmem:[%s228 + $0xd0] sm:$0xff]
        %v324 = vld [vmem:[%s228 + $0xd8] sm:$0xff]
        %v325 = vld [vmem:[%s228 + $0xe0] sm:$0xff]
        %v326 = vld [vmem:[%s228 + $0xe8] sm:$0xff]
        %v327 = vld [vmem:[%s228 + $0xf0] sm:$0xff]
        %v328 = vld [vmem:[%s228 + $0xf8] sm:$0xff]
        %v361 = vunpack.c.l.b16 %v265
        %v362 = vunpack.c.h.b16 %v265
        %v363 = vunpack.c.l.b16 %v266
        %v364 = vunpack.c.h.b16 %v266
        %v365 = vunpack.c.l.b16 %v267
        %v366 = vunpack.c.h.b16 %v267
        %v367 = vunpack.c.l.b16 %v268
        %v368 = vunpack.c.h.b16 %v268
        %v369 = vunpack.c.l.b16 %v269
        %v370 = vunpack.c.h.b16 %v269
        %v371 = vunpack.c.l.b16 %v270
        %v372 = vunpack.c.h.b16 %v270
        %v373 = vunpack.c.l.b16 %v271
        %v374 = vunpack.c.h.b16 %v271
        %v375 = vunpack.c.l.b16 %v272
        %v376 = vunpack.c.h.b16 %v272
        %v377 = vunpack.c.l.b16 %v273
        %v378 = vunpack.c.h.b16 %v273
        %v379 = vunpack.c.l.b16 %v274
        %v380 = vunpack.c.h.b16 %v274
        %v381 = vunpack.c.l.b16 %v275
        %v382 = vunpack.c.h.b16 %v275
        %v383 = vunpack.c.l.b16 %v276
        %v384 = vunpack.c.h.b16 %v276
        %v385 = vunpack.c.l.b16 %v277
        %v386 = vunpack.c.h.b16 %v277
        %v387 = vunpack.c.l.b16 %v278
        %v388 = vunpack.c.h.b16 %v278
        %v389 = vunpack.c.l.b16 %v279
        %v390 = vunpack.c.h.b16 %v279
        %v391 = vunpack.c.l.b16 %v280
        %v392 = vunpack.c.h.b16 %v280
        %v393 = vunpack.c.l.b16 %v281
        %v394 = vunpack.c.h.b16 %v281
        %v395 = vunpack.c.l.b16 %v282
        %v396 = vunpack.c.h.b16 %v282
        %v397 = vunpack.c.l.b16 %v283
        %v398 = vunpack.c.h.b16 %v283
        %v399 = vunpack.c.l.b16 %v284
        %v400 = vunpack.c.h.b16 %v284
        %v401 = vunpack.c.l.b16 %v285
        %v402 = vunpack.c.h.b16 %v285
        %v403 = vunpack.c.l.b16 %v286
        %v404 = vunpack.c.h.b16 %v286
        %v405 = vunpack.c.l.b16 %v287
        %v406 = vunpack.c.h.b16 %v287
        %v407 = vunpack.c.l.b16 %v288
        %v408 = vunpack.c.h.b16 %v288
        %v409 = vunpack.c.l.b16 %v289
        %v410 = vunpack.c.h.b16 %v289
        %v411 = vunpack.c.l.b16 %v290
        %v412 = vunpack.c.h.b16 %v290
        %v413 = vunpack.c.l.b16 %v291
        %v414 = vunpack.c.h.b16 %v291
        %v415 = vunpack.c.l.b16 %v292
        %v416 = vunpack.c.h.b16 %v292
        %v417 = vunpack.c.l.b16 %v293
        %v418 = vunpack.c.h.b16 %v293
        %v419 = vunpack.c.l.b16 %v294
        %v420 = vunpack.c.h.b16 %v294
        %v421 = vunpack.c.l.b16 %v295
        %v422 = vunpack.c.h.b16 %v295
        %v423 = vunpack.c.l.b16 %v296
        %v424 = vunpack.c.h.b16 %v296
        %v425 = vpack.c.b16 %v363, %v361
        %v426 = vpack.c.b16 %v364, %v362
        %v427 = vpack.c.b16 %v367, %v365
        %v428 = vpack.c.b16 %v368, %v366
        %v429 = vpack.c.b16 %v371, %v369
        %v430 = vpack.c.b16 %v372, %v370
        %v431 = vpack.c.b16 %v375, %v373
        %v432 = vpack.c.b16 %v376, %v374
        %v433 = vpack.c.b16 %v379, %v377
        %v434 = vpack.c.b16 %v380, %v378
        %v435 = vpack.c.b16 %v383, %v381
        %v436 = vpack.c.b16 %v384, %v382
        %v437 = vpack.c.b16 %v387, %v385
        %v438 = vpack.c.b16 %v388, %v386
        %v439 = vpack.c.b16 %v391, %v389
        %v440 = vpack.c.b16 %v392, %v390
        %v441 = vpack.c.b16 %v395, %v393
        %v442 = vpack.c.b16 %v396, %v394
        %v443 = vpack.c.b16 %v399, %v397
        %v444 = vpack.c.b16 %v400, %v398
        %v445 = vpack.c.b16 %v403, %v401
        %v446 = vpack.c.b16 %v404, %v402
        %v447 = vpack.c.b16 %v407, %v405
        %v448 = vpack.c.b16 %v408, %v406
        %v449 = vpack.c.b16 %v411, %v409
        %v450 = vpack.c.b16 %v412, %v410
        %v451 = vpack.c.b16 %v415, %v413
        %v452 = vpack.c.b16 %v416, %v414
        %v453 = vpack.c.b16 %v419, %v417
        %v454 = vpack.c.b16 %v420, %v418
        %v455 = vpack.c.b16 %v423, %v421
        %v456 = vpack.c.b16 %v424, %v422
        %v521 = vunpack.c.l.b16 %v297
        %v522 = vunpack.c.h.b16 %v297
        %v523 = vunpack.c.l.b16 %v298
        %v524 = vunpack.c.h.b16 %v298
        %v525 = vunpack.c.l.b16 %v299
        %v526 = vunpack.c.h.b16 %v299
        %v527 = vunpack.c.l.b16 %v300
        %v528 = vunpack.c.h.b16 %v300
        %v529 = vunpack.c.l.b16 %v301
        %v530 = vunpack.c.h.b16 %v301
        %v531 = vunpack.c.l.b16 %v302
        %v532 = vunpack.c.h.b16 %v302
        %v533 = vunpack.c.l.b16 %v303
        %v534 = vunpack.c.h.b16 %v303
        %v535 = vunpack.c.l.b16 %v304
        %v536 = vunpack.c.h.b16 %v304
        %v537 = vunpack.c.l.b16 %v305
        %v538 = vunpack.c.h.b16 %v305
        %v539 = vunpack.c.l.b16 %v306
        %v540 = vunpack.c.h.b16 %v306
        %v541 = vunpack.c.l.b16 %v307
        %v542 = vunpack.c.h.b16 %v307
        %v543 = vunpack.c.l.b16 %v308
        %v544 = vunpack.c.h.b16 %v308
        %v545 = vunpack.c.l.b16 %v309
        %v546 = vunpack.c.h.b16 %v309
        %v547 = vunpack.c.l.b16 %v310
        %v548 = vunpack.c.h.b16 %v310
        %v549 = vunpack.c.l.b16 %v311
        %v550 = vunpack.c.h.b16 %v311
        %v551 = vunpack.c.l.b16 %v312
        %v552 = vunpack.c.h.b16 %v312
        %v553 = vunpack.c.l.b16 %v313
        %v554 = vunpack.c.h.b16 %v313
        %v555 = vunpack.c.l.b16 %v314
        %v556 = vunpack.c.h.b16 %v314
        %v557 = vunpack.c.l.b16 %v315
        %v558 = vunpack.c.h.b16 %v315
        %v559 = vunpack.c.l.b16 %v316
        %v560 = vunpack.c.h.b16 %v316
        %v561 = vunpack.c.l.b16 %v317
        %v562 = vunpack.c.h.b16 %v317
        %v563 = vunpack.c.l.b16 %v318
        %v564 = vunpack.c.h.b16 %v318
        %v565 = vunpack.c.l.b16 %v319
        %v566 = vunpack.c.h.b16 %v319
        %v567 = vunpack.c.l.b16 %v320
        %v568 = vunpack.c.h.b16 %v320
        %v569 = vunpack.c.l.b16 %v321
        %v570 = vunpack.c.h.b16 %v321
        %v571 = vunpack.c.l.b16 %v322
        %v572 = vunpack.c.h.b16 %v322
        %v573 = vunpack.c.l.b16 %v323
        %v574 = vunpack.c.h.b16 %v323
        %v575 = vunpack.c.l.b16 %v324
        %v576 = vunpack.c.h.b16 %v324
        %v577 = vunpack.c.l.b16 %v325
        %v578 = vunpack.c.h.b16 %v325
        %v579 = vunpack.c.l.b16 %v326
        %v580 = vunpack.c.h.b16 %v326
        %v581 = vunpack.c.l.b16 %v327
        %v582 = vunpack.c.h.b16 %v327
        %v583 = vunpack.c.l.b16 %v328
        %v584 = vunpack.c.h.b16 %v328
        %v585 = vpack.c.b16 %v523, %v521
        %v586 = vpack.c.b16 %v524, %v522
        %v587 = vpack.c.b16 %v527, %v525
        %v588 = vpack.c.b16 %v528, %v526
        %v589 = vpack.c.b16 %v531, %v529
        %v590 = vpack.c.b16 %v532, %v530
        %v591 = vpack.c.b16 %v535, %v533
        %v592 = vpack.c.b16 %v536, %v534
        %v593 = vpack.c.b16 %v539, %v537
        %v594 = vpack.c.b16 %v540, %v538
        %v595 = vpack.c.b16 %v543, %v541
        %v596 = vpack.c.b16 %v544, %v542
        %v597 = vpack.c.b16 %v547, %v545
        %v598 = vpack.c.b16 %v548, %v546
        %v599 = vpack.c.b16 %v551, %v549
        %v600 = vpack.c.b16 %v552, %v550
        %v601 = vpack.c.b16 %v555, %v553
        %v602 = vpack.c.b16 %v556, %v554
        %v603 = vpack.c.b16 %v559, %v557
        %v604 = vpack.c.b16 %v560, %v558
        %v605 = vpack.c.b16 %v563, %v561
        %v606 = vpack.c.b16 %v564, %v562
        %v607 = vpack.c.b16 %v567, %v565
        %v608 = vpack.c.b16 %v568, %v566
        %v609 = vpack.c.b16 %v571, %v569
        %v610 = vpack.c.b16 %v572, %v570
        %v611 = vpack.c.b16 %v575, %v573
        %v612 = vpack.c.b16 %v576, %v574
        %v613 = vpack.c.b16 %v579, %v577
        %v614 = vpack.c.b16 %v580, %v578
        %v615 = vpack.c.b16 %v583, %v581
        %v616 = vpack.c.b16 %v584, %v582
        %649 = vmatpush.bf16.msra.mxu0 %v599
        %650 = vmatpush.bf16.msra.mxu0 %v597
        %651 = vmatpush.bf16.msra.mxu0 %v595
        %652 = vmatpush.bf16.msra.mxu0 %v593
        %653 = vmatpush.bf16.msra.mxu0 %v591
        %654 = vmatpush.bf16.msra.mxu0 %v589
        %655 = vmatpush.bf16.msra.mxu0 %v587
        %656 = vmatpush.bf16.msra.mxu0 %v585
        %657 = vmatmul.bf16.gmra.mxu0 %v425
        %v658 = vpop.f32.mrf.mxu0
        %v659 = vadd.f32 0.0, %v658
        %v660 = vpop.f32.mrf.mxu0
        %v661 = vadd.f32 0.0, %v660
        %662 = vmatmul.bf16.gmra.mxu0 %v427
        %v663 = vpop.f32.mrf.mxu0
        %v664 = vadd.f32 0.0, %v663
        %v665 = vpop.f32.mrf.mxu0
        %v666 = vadd.f32 0.0, %v665
        %667 = vmatmul.bf16.gmra.mxu0 %v429
        %v668 = vpop.f32.mrf.mxu0
        %v669 = vadd.f32 0.0, %v668
        %v670 = vpop.f32.mrf.mxu0
        %v671 = vadd.f32 0.0, %v670
        %672 = vmatmul.bf16.gmra.mxu0 %v431
        %v673 = vpop.f32.mrf.mxu0
        %v674 = vadd.f32 0.0, %v673
        %v675 = vpop.f32.mrf.mxu0
        %v676 = vadd.f32 0.0, %v675
        %677 = vmatmul.bf16.gmra.mxu0 %v433
        %v678 = vpop.f32.mrf.mxu0
        %v679 = vadd.f32 0.0, %v678
        %v680 = vpop.f32.mrf.mxu0
        %v681 = vadd.f32 0.0, %v680
        %682 = vmatmul.bf16.gmra.mxu0 %v435
        %v683 = vpop.f32.mrf.mxu0
        %v684 = vadd.f32 0.0, %v683
        %v685 = vpop.f32.mrf.mxu0
        %v686 = vadd.f32 0.0, %v685
        %687 = vmatmul.bf16.gmra.mxu0 %v437
        %v688 = vpop.f32.mrf.mxu0
        %v689 = vadd.f32 0.0, %v688
        %v690 = vpop.f32.mrf.mxu0
        %v691 = vadd.f32 0.0, %v690
        %692 = vmatmul.bf16.gmra.mxu0 %v439
        %v693 = vpop.f32.mrf.mxu0
        %v694 = vadd.f32 0.0, %v693
        %v695 = vpop.f32.mrf.mxu0
        %v696 = vadd.f32 0.0, %v695
        %697 = vmatmul.bf16.gmra.mxu0 %v441
        %v698 = vpop.f32.mrf.mxu0
        %v699 = vadd.f32 0.0, %v698
        %v700 = vpop.f32.mrf.mxu0
        %v701 = vadd.f32 0.0, %v700
        %702 = vmatmul.bf16.gmra.mxu0 %v443
        %v703 = vpop.f32.mrf.mxu0
        %v704 = vadd.f32 0.0, %v703
        %v705 = vpop.f32.mrf.mxu0
        %v706 = vadd.f32 0.0, %v705
        %707 = vmatmul.bf16.gmra.mxu0 %v445
        %v708 = vpop.f32.mrf.mxu0
        %v709 = vadd.f32 0.0, %v708
        %v710 = vpop.f32.mrf.mxu0
        %v711 = vadd.f32 0.0, %v710
        %712 = vmatmul.bf16.gmra.mxu0 %v447
        %v713 = vpop.f32.mrf.mxu0
        %v714 = vadd.f32 0.0, %v713
        %v715 = vpop.f32.mrf.mxu0
        %v716 = vadd.f32 0.0, %v715
        %717 = vmatmul.bf16.gmra.mxu0 %v449
        %v718 = vpop.f32.mrf.mxu0
        %v719 = vadd.f32 0.0, %v718
        %v720 = vpop.f32.mrf.mxu0
        %v721 = vadd.f32 0.0, %v720
        %722 = vmatmul.bf16.gmra.mxu0 %v451
        %v723 = vpop.f32.mrf.mxu0
        %v724 = vadd.f32 0.0, %v723
        %v725 = vpop.f32.mrf.mxu0
        %v726 = vadd.f32 0.0, %v725
        %727 = vmatmul.bf16.gmra.mxu0 %v453
        %v728 = vpop.f32.mrf.mxu0
        %v729 = vadd.f32 0.0, %v728
        %v730 = vpop.f32.mrf.mxu0
        %v731 = vadd.f32 0.0, %v730
        %732 = vmatmul.bf16.gmra.mxu0 %v455
        %v733 = vpop.f32.mrf.mxu0
        %v734 = vadd.f32 0.0, %v733
        %v735 = vpop.f32.mrf.mxu0
        %v736 = vadd.f32 0.0, %v735
        %737 = vdwg.mxu0
        %738 = vmatpush.bf16.msra.mxu0 %v615
        %739 = vmatpush.bf16.msra.mxu0 %v613
        %740 = vmatpush.bf16.msra.mxu0 %v611
        %741 = vmatpush.bf16.msra.mxu0 %v609
        %742 = vmatpush.bf16.msra.mxu0 %v607
        %743 = vmatpush.bf16.msra.mxu0 %v605
        %744 = vmatpush.bf16.msra.mxu0 %v603
        %745 = vmatpush.bf16.msra.mxu0 %v601
        %746 = vmatmul.bf16.gmra.mxu0 %v426
        %v747 = vpop.f32.mrf.mxu0
        %v748 = vadd.f32 %v659, %v747
        %v749 = vpop.f32.mrf.mxu0
        %v750 = vadd.f32 %v661, %v749
        %751 = vmatmul.bf16.gmra.mxu0 %v428
        %v752 = vpop.f32.mrf.mxu0
        %v753 = vadd.f32 %v664, %v752
        %v754 = vpop.f32.mrf.mxu0
        %v755 = vadd.f32 %v666, %v754
        %756 = vmatmul.bf16.gmra.mxu0 %v430
        %v757 = vpop.f32.mrf.mxu0
        %v758 = vadd.f32 %v669, %v757
        %v759 = vpop.f32.mrf.mxu0
        %v760 = vadd.f32 %v671, %v759
        %761 = vmatmul.bf16.gmra.mxu0 %v432
        %v762 = vpop.f32.mrf.mxu0
        %v763 = vadd.f32 %v674, %v762
        %v764 = vpop.f32.mrf.mxu0
        %v765 = vadd.f32 %v676, %v764
        %766 = vmatmul.bf16.gmra.mxu0 %v434
        %v767 = vpop.f32.mrf.mxu0
        %v768 = vadd.f32 %v679, %v767
        %v769 = vpop.f32.mrf.mxu0
        %v770 = vadd.f32 %v681, %v769
        %771 = vmatmul.bf16.gmra.mxu0 %v436
        %v772 = vpop.f32.mrf.mxu0
        %v773 = vadd.f32 %v684, %v772
        %v774 = vpop.f32.mrf.mxu0
        %v775 = vadd.f32 %v686, %v774
        %776 = vmatmul.bf16.gmra.mxu0 %v438
        %v777 = vpop.f32.mrf.mxu0
        %v778 = vadd.f32 %v689, %v777
        %v779 = vpop.f32.mrf.mxu0
        %v780 = vadd.f32 %v691, %v779
        %781 = vmatmul.bf16.gmra.mxu0 %v440
        %v782 = vpop.f32.mrf.mxu0
        %v783 = vadd.f32 %v694, %v782
        %v784 = vpop.f32.mrf.mxu0
        %v785 = vadd.f32 %v696, %v784
        %786 = vmatmul.bf16.gmra.mxu0 %v442
        %v787 = vpop.f32.mrf.mxu0
        %v788 = vadd.f32 %v699, %v787
        %v789 = vpop.f32.mrf.mxu0
        %v790 = vadd.f32 %v701, %v789
        %791 = vmatmul.bf16.gmra.mxu0 %v444
        %v792 = vpop.f32.mrf.mxu0
        %v793 = vadd.f32 %v704, %v792
        %v794 = vpop.f32.mrf.mxu0
        %v795 = vadd.f32 %v706, %v794
        %796 = vmatmul.bf16.gmra.mxu0 %v446
        %v797 = vpop.f32.mrf.mxu0
        %v798 = vadd.f32 %v709, %v797
        %v799 = vpop.f32.mrf.mxu0
        %v800 = vadd.f32 %v711, %v799
        %801 = vmatmul.bf16.gmra.mxu0 %v448
        %v802 = vpop.f32.mrf.mxu0
        %v803 = vadd.f32 %v714, %v802
        %v804 = vpop.f32.mrf.mxu0
        %v805 = vadd.f32 %v716, %v804
        %806 = vmatmul.bf16.gmra.mxu0 %v450
        %v807 = vpop.f32.mrf.mxu0
        %v808 = vadd.f32 %v719, %v807
        %v809 = vpop.f32.mrf.mxu0
        %v810 = vadd.f32 %v721, %v809
        %811 = vmatmul.bf16.gmra.mxu0 %v452
        %v812 = vpop.f32.mrf.mxu0
        %v813 = vadd.f32 %v724, %v812
        %v814 = vpop.f32.mrf.mxu0
        %v815 = vadd.f32 %v726, %v814
        %816 = vmatmul.bf16.gmra.mxu0 %v454
        %v817 = vpop.f32.mrf.mxu0
        %v818 = vadd.f32 %v729, %v817
        %v819 = vpop.f32.mrf.mxu0
        %v820 = vadd.f32 %v731, %v819
        %821 = vmatmul.bf16.gmra.mxu0 %v456
        %v822 = vpop.f32.mrf.mxu0
        %v823 = vadd.f32 %v734, %v822
        %v824 = vpop.f32.mrf.mxu0
        %v825 = vadd.f32 %v736, %v824
        %826 = vdwg.mxu0
        %827 = vmatpush.bf16.msra.mxu0 %v600
        %828 = vmatpush.bf16.msra.mxu0 %v598
        %829 = vmatpush.bf16.msra.mxu0 %v596
        %830 = vmatpush.bf16.msra.mxu0 %v594
        %831 = vmatpush.bf16.msra.mxu0 %v592
        %832 = vmatpush.bf16.msra.mxu0 %v590
        %833 = vmatpush.bf16.msra.mxu0 %v588
        %834 = vmatpush.bf16.msra.mxu0 %v586
        %835 = vmatmul.bf16.gmra.mxu0 %v425
        %v836 = vpop.f32.mrf.mxu0
        %v837 = vadd.f32 0.0, %v836
        %v838 = vpop.f32.mrf.mxu0
        %v839 = vadd.f32 0.0, %v838
        %840 = vmatmul.bf16.gmra.mxu0 %v427
        %v841 = vpop.f32.mrf.mxu0
        %v842 = vadd.f32 0.0, %v841
        %v843 = vpop.f32.mrf.mxu0
        %v844 = vadd.f32 0.0, %v843
        %845 = vmatmul.bf16.gmra.mxu0 %v429
        %v846 = vpop.f32.mrf.mxu0
        %v847 = vadd.f32 0.0, %v846
        %v848 = vpop.f32.mrf.mxu0
        %v849 = vadd.f32 0.0, %v848
        %850 = vmatmul.bf16.gmra.mxu0 %v431
        %v851 = vpop.f32.mrf.mxu0
        %v852 = vadd.f32 0.0, %v851
        %v853 = vpop.f32.mrf.mxu0
        %v854 = vadd.f32 0.0, %v853
        %855 = vmatmul.bf16.gmra.mxu0 %v433
        %v856 = vpop.f32.mrf.mxu0
        %v857 = vadd.f32 0.0, %v856
        %v858 = vpop.f32.mrf.mxu0
        %v859 = vadd.f32 0.0, %v858
        %860 = vmatmul.bf16.gmra.mxu0 %v435
        %v861 = vpop.f32.mrf.mxu0
        %v862 = vadd.f32 0.0, %v861
        %v863 = vpop.f32.mrf.mxu0
        %v864 = vadd.f32 0.0, %v863
        %865 = vmatmul.bf16.gmra.mxu0 %v437
        %v866 = vpop.f32.mrf.mxu0
        %v867 = vadd.f32 0.0, %v866
        %v868 = vpop.f32.mrf.mxu0
        %v869 = vadd.f32 0.0, %v868
        %870 = vmatmul.bf16.gmra.mxu0 %v439
        %v871 = vpop.f32.mrf.mxu0
        %v872 = vadd.f32 0.0, %v871
        %v873 = vpop.f32.mrf.mxu0
        %v874 = vadd.f32 0.0, %v873
        %875 = vmatmul.bf16.gmra.mxu0 %v441
        %v876 = vpop.f32.mrf.mxu0
        %v877 = vadd.f32 0.0, %v876
        %v878 = vpop.f32.mrf.mxu0
        %v879 = vadd.f32 0.0, %v878
        %880 = vmatmul.bf16.gmra.mxu0 %v443
        %v881 = vpop.f32.mrf.mxu0
        %v882 = vadd.f32 0.0, %v881
        %v883 = vpop.f32.mrf.mxu0
        %v884 = vadd.f32 0.0, %v883
        %885 = vmatmul.bf16.gmra.mxu0 %v445
        %v886 = vpop.f32.mrf.mxu0
        %v887 = vadd.f32 0.0, %v886
        %v888 = vpop.f32.mrf.mxu0
        %v889 = vadd.f32 0.0, %v888
        %890 = vmatmul.bf16.gmra.mxu0 %v447
        %v891 = vpop.f32.mrf.mxu0
        %v892 = vadd.f32 0.0, %v891
        %v893 = vpop.f32.mrf.mxu0
        %v894 = vadd.f32 0.0, %v893
        %895 = vmatmul.bf16.gmra.mxu0 %v449
        %v896 = vpop.f32.mrf.mxu0
        %v897 = vadd.f32 0.0, %v896
        %v898 = vpop.f32.mrf.mxu0
        %v899 = vadd.f32 0.0, %v898
        %900 = vmatmul.bf16.gmra.mxu0 %v451
        %v901 = vpop.f32.mrf.mxu0
        %v902 = vadd.f32 0.0, %v901
        %v903 = vpop.f32.mrf.mxu0
        %v904 = vadd.f32 0.0, %v903
        %905 = vmatmul.bf16.gmra.mxu0 %v453
        %v906 = vpop.f32.mrf.mxu0
        %v907 = vadd.f32 0.0, %v906
        %v908 = vpop.f32.mrf.mxu0
        %v909 = vadd.f32 0.0, %v908
        %910 = vmatmul.bf16.gmra.mxu0 %v455
        %v911 = vpop.f32.mrf.mxu0
        %v912 = vadd.f32 0.0, %v911
        %v913 = vpop.f32.mrf.mxu0
        %v914 = vadd.f32 0.0, %v913
        %915 = vdwg.mxu0
        %916 = vmatpush.bf16.msra.mxu0 %v616
        %917 = vmatpush.bf16.msra.mxu0 %v614
        %918 = vmatpush.bf16.msra.mxu0 %v612
        %919 = vmatpush.bf16.msra.mxu0 %v610
        %920 = vmatpush.bf16.msra.mxu0 %v608
        %921 = vmatpush.bf16.msra.mxu0 %v606
        %922 = vmatpush.bf16.msra.mxu0 %v604
        %923 = vmatpush.bf16.msra.mxu0 %v602
        %924 = vmatmul.bf16.gmra.mxu0 %v426
        %v925 = vpop.f32.mrf.mxu0
        %v926 = vadd.f32 %v837, %v925
        %v927 = vpop.f32.mrf.mxu0
        %v928 = vadd.f32 %v839, %v927
        %929 = vmatmul.bf16.gmra.mxu0 %v428
        %v930 = vpop.f32.mrf.mxu0
        %v931 = vadd.f32 %v842, %v930
        %v932 = vpop.f32.mrf.mxu0
        %v933 = vadd.f32 %v844, %v932
        %934 = vmatmul.bf16.gmra.mxu0 %v430
        %v935 = vpop.f32.mrf.mxu0
        %v936 = vadd.f32 %v847, %v935
        %v937 = vpop.f32.mrf.mxu0
        %v938 = vadd.f32 %v849, %v937
        %939 = vmatmul.bf16.gmra.mxu0 %v432
        %v940 = vpop.f32.mrf.mxu0
        %v941 = vadd.f32 %v852, %v940
        %v942 = vpop.f32.mrf.mxu0
        %v943 = vadd.f32 %v854, %v942
        %944 = vmatmul.bf16.gmra.mxu0 %v434
        %v945 = vpop.f32.mrf.mxu0
        %v946 = vadd.f32 %v857, %v945
        %v947 = vpop.f32.mrf.mxu0
        %v948 = vadd.f32 %v859, %v947
        %949 = vmatmul.bf16.gmra.mxu0 %v436
        %v950 = vpop.f32.mrf.mxu0
        %v951 = vadd.f32 %v862, %v950
        %v952 = vpop.f32.mrf.mxu0
        %v953 = vadd.f32 %v864, %v952
        %954 = vmatmul.bf16.gmra.mxu0 %v438
        %v955 = vpop.f32.mrf.mxu0
        %v956 = vadd.f32 %v867, %v955
        %v957 = vpop.f32.mrf.mxu0
        %v958 = vadd.f32 %v869, %v957
        %959 = vmatmul.bf16.gmra.mxu0 %v440
        %v960 = vpop.f32.mrf.mxu0
        %v961 = vadd.f32 %v872, %v960
        %v962 = vpop.f32.mrf.mxu0
        %v963 = vadd.f32 %v874, %v962
        %964 = vmatmul.bf16.gmra.mxu0 %v442
        %v965 = vpop.f32.mrf.mxu0
        %v966 = vadd.f32 %v877, %v965
        %v967 = vpop.f32.mrf.mxu0
        %v968 = vadd.f32 %v879, %v967
        %969 = vmatmul.bf16.gmra.mxu0 %v444
        %v970 = vpop.f32.mrf.mxu0
        %v971 = vadd.f32 %v882, %v970
        %v972 = vpop.f32.mrf.mxu0
        %v973 = vadd.f32 %v884, %v972
        %974 = vmatmul.bf16.gmra.mxu0 %v446
        %v975 = vpop.f32.mrf.mxu0
        %v976 = vadd.f32 %v887, %v975
        %v977 = vpop.f32.mrf.mxu0
        %v978 = vadd.f32 %v889, %v977
        %979 = vmatmul.bf16.gmra.mxu0 %v448
        %v980 = vpop.f32.mrf.mxu0
        %v981 = vadd.f32 %v892, %v980
        %v982 = vpop.f32.mrf.mxu0
        %v983 = vadd.f32 %v894, %v982
        %984 = vmatmul.bf16.gmra.mxu0 %v450
        %v985 = vpop.f32.mrf.mxu0
        %v986 = vadd.f32 %v897, %v985
        %v987 = vpop.f32.mrf.mxu0
        %v988 = vadd.f32 %v899, %v987
        %989 = vmatmul.bf16.gmra.mxu0 %v452
        %v990 = vpop.f32.mrf.mxu0
        %v991 = vadd.f32 %v902, %v990
        %v992 = vpop.f32.mrf.mxu0
        %v993 = vadd.f32 %v904, %v992
        %994 = vmatmul.bf16.gmra.mxu0 %v454
        %v995 = vpop.f32.mrf.mxu0
        %v996 = vadd.f32 %v907, %v995
        %v997 = vpop.f32.mrf.mxu0
        %v998 = vadd.f32 %v909, %v997
        %999 = vmatmul.bf16.gmra.mxu0 %v456
        %v1000 = vpop.f32.mrf.mxu0
        %v1001 = vadd.f32 %v912, %v1000
        %v1002 = vpop.f32.mrf.mxu0
        %v1003 = vadd.f32 %v914, %v1002
        %1004 = vdwg.mxu0
        %v1005 = vmax.f32 %v748, 0.0
        %v1006 = vmax.f32 %v926, 0.0
        %v1007 = vmax.f32 %v750, 0.0
        %v1008 = vmax.f32 %v928, 0.0
        %v1009 = vmax.f32 %v753, 0.0
        %v1010 = vmax.f32 %v931, 0.0
        %v1011 = vmax.f32 %v755, 0.0
        %v1012 = vmax.f32 %v933, 0.0
        %v1013 = vmax.f32 %v758, 0.0
        %v1014 = vmax.f32 %v936, 0.0
        %v1015 = vmax.f32 %v760, 0.0
        %v1016 = vmax.f32 %v938, 0.0
        %v1017 = vmax.f32 %v763, 0.0
        %v1018 = vmax.f32 %v941, 0.0
        %v1019 = vmax.f32 %v765, 0.0
        %v1020 = vmax.f32 %v943, 0.0
        %v1021 = vmax.f32 %v768, 0.0
        %v1022 = vmax.f32 %v946, 0.0
        %v1023 = vmax.f32 %v770, 0.0
        %v1024 = vmax.f32 %v948, 0.0
        %v1025 = vmax.f32 %v773, 0.0
        %v1026 = vmax.f32 %v951, 0.0
        %v1027 = vmax.f32 %v775, 0.0
        %v1028 = vmax.f32 %v953, 0.0
        %v1029 = vmax.f32 %v778, 0.0
        %v1030 = vmax.f32 %v956, 0.0
        %v1031 = vmax.f32 %v780, 0.0
        %v1032 = vmax.f32 %v958, 0.0
        %v1033 = vmax.f32 %v783, 0.0
        %v1034 = vmax.f32 %v961, 0.0
        %v1035 = vmax.f32 %v785, 0.0
        %v1036 = vmax.f32 %v963, 0.0
        %v1037 = vmax.f32 %v788, 0.0
        %v1038 = vmax.f32 %v966, 0.0
        %v1039 = vmax.f32 %v790, 0.0
        %v1040 = vmax.f32 %v968, 0.0
        %v1041 = vmax.f32 %v793, 0.0
        %v1042 = vmax.f32 %v971, 0.0
        %v1043 = vmax.f32 %v795, 0.0
        %v1044 = vmax.f32 %v973, 0.0
        %v1045 = vmax.f32 %v798, 0.0
        %v1046 = vmax.f32 %v976, 0.0
        %v1047 = vmax.f32 %v800, 0.0
        %v1048 = vmax.f32 %v978, 0.0
        %v1049 = vmax.f32 %v803, 0.0
        %v1050 = vmax.f32 %v981, 0.0
        %v1051 = vmax.f32 %v805, 0.0
        %v1052 = vmax.f32 %v983, 0.0
        %v1053 = vmax.f32 %v808, 0.0
        %v1054 = vmax.f32 %v986, 0.0
        %v1055 = vmax.f32 %v810, 0.0
        %v1056 = vmax.f32 %v988, 0.0
        %v1057 = vmax.f32 %v813, 0.0
        %v1058 = vmax.f32 %v991, 0.0
        %v1059 = vmax.f32 %v815, 0.0
        %v1060 = vmax.f32 %v993, 0.0
        %v1061 = vmax.f32 %v818, 0.0
        %v1062 = vmax.f32 %v996, 0.0
        %v1063 = vmax.f32 %v820, 0.0
        %v1064 = vmax.f32 %v998, 0.0
        %v1065 = vmax.f32 %v823, 0.0
        %v1066 = vmax.f32 %v1001, 0.0
        %v1067 = vmax.f32 %v825, 0.0
        %v1068 = vmax.f32 %v1003, 0.0
        %v1069 = vmul.f32 %v1005, %v1005
        %v1070 = vmul.f32 %v1006, %v1006
        %v1071 = vmul.f32 %v1007, %v1007
        %v1072 = vmul.f32 %v1008, %v1008
        %v1073 = vmul.f32 %v1009, %v1009
        %v1074 = vmul.f32 %v1010, %v1010
        %v1075 = vmul.f32 %v1011, %v1011
        %v1076 = vmul.f32 %v1012, %v1012
        %v1077 = vmul.f32 %v1013, %v1013
        %v1078 = vmul.f32 %v1014, %v1014
        %v1079 = vmul.f32 %v1015, %v1015
        %v1080 = vmul.f32 %v1016, %v1016
        %v1081 = vmul.f32 %v1017, %v1017
        %v1082 = vmul.f32 %v1018, %v1018
        %v1083 = vmul.f32 %v1019, %v1019
        %v1084 = vmul.f32 %v1020, %v1020
        %v1085 = vmul.f32 %v1021, %v1021
        %v1086 = vmul.f32 %v1022, %v1022
        %v1087 = vmul.f32 %v1023, %v1023
        %v1088 = vmul.f32 %v1024, %v1024
        %v1089 = vmul.f32 %v1025, %v1025
        %v1090 = vmul.f32 %v1026, %v1026
        %v1091 = vmul.f32 %v1027, %v1027
        %v1092 = vmul.f32 %v1028, %v1028
        %v1093 = vmul.f32 %v1029, %v1029
        %v1094 = vmul.f32 %v1030, %v1030
        %v1095 = vmul.f32 %v1031, %v1031
        %v1096 = vmul.f32 %v1032, %v1032
        %v1097 = vmul.f32 %v1033, %v1033
        %v1098 = vmul.f32 %v1034, %v1034
        %v1099 = vmul.f32 %v1035, %v1035
        %v1100 = vmul.f32 %v1036, %v1036
        %v1101 = vmul.f32 %v1037, %v1037
        %v1102 = vmul.f32 %v1038, %v1038
        %v1103 = vmul.f32 %v1039, %v1039
        %v1104 = vmul.f32 %v1040, %v1040
        %v1105 = vmul.f32 %v1041, %v1041
        %v1106 = vmul.f32 %v1042, %v1042
        %v1107 = vmul.f32 %v1043, %v1043
        %v1108 = vmul.f32 %v1044, %v1044
        %v1109 = vmul.f32 %v1045, %v1045
        %v1110 = vmul.f32 %v1046, %v1046
        %v1111 = vmul.f32 %v1047, %v1047
        %v1112 = vmul.f32 %v1048, %v1048
        %v1113 = vmul.f32 %v1049, %v1049
        %v1114 = vmul.f32 %v1050, %v1050
        %v1115 = vmul.f32 %v1051, %v1051
        %v1116 = vmul.f32 %v1052, %v1052
        %v1117 = vmul.f32 %v1053, %v1053
        %v1118 = vmul.f32 %v1054, %v1054
        %v1119 = vmul.f32 %v1055, %v1055
        %v1120 = vmul.f32 %v1056, %v1056
        %v1121 = vmul.f32 %v1057, %v1057
        %v1122 = vmul.f32 %v1058, %v1058
        %v1123 = vmul.f32 %v1059, %v1059
        %v1124 = vmul.f32 %v1060, %v1060
        %v1125 = vmul.f32 %v1061, %v1061
        %v1126 = vmul.f32 %v1062, %v1062
        %v1127 = vmul.f32 %v1063, %v1063
        %v1128 = vmul.f32 %v1064, %v1064
        %v1129 = vmul.f32 %v1065, %v1065
        %v1130 = vmul.f32 %v1066, %v1066
        %v1131 = vmul.f32 %v1067, %v1067
        %v1132 = vmul.f32 %v1068, %v1068
        %v1133 = vpack.c.bf16 %v1071, %v1069
        %v1134 = vpack.c.bf16 %v1072, %v1070
        %v1135 = vpack.c.bf16 %v1075, %v1073
        %v1136 = vpack.c.bf16 %v1076, %v1074
        %v1137 = vpack.c.bf16 %v1079, %v1077
        %v1138 = vpack.c.bf16 %v1080, %v1078
        %v1139 = vpack.c.bf16 %v1083, %v1081
        %v1140 = vpack.c.bf16 %v1084, %v1082
        %v1141 = vpack.c.bf16 %v1087, %v1085
        %v1142 = vpack.c.bf16 %v1088, %v1086
        %v1143 = vpack.c.bf16 %v1091, %v1089
        %v1144 = vpack.c.bf16 %v1092, %v1090
        %v1145 = vpack.c.bf16 %v1095, %v1093
        %v1146 = vpack.c.bf16 %v1096, %v1094
        %v1147 = vpack.c.bf16 %v1099, %v1097
        %v1148 = vpack.c.bf16 %v1100, %v1098
        %v1149 = vpack.c.bf16 %v1103, %v1101
        %v1150 = vpack.c.bf16 %v1104, %v1102
        %v1151 = vpack.c.bf16 %v1107, %v1105
        %v1152 = vpack.c.bf16 %v1108, %v1106
        %v1153 = vpack.c.bf16 %v1111, %v1109
        %v1154 = vpack.c.bf16 %v1112, %v1110
        %v1155 = vpack.c.bf16 %v1115, %v1113
        %v1156 = vpack.c.bf16 %v1116, %v1114
        %v1157 = vpack.c.bf16 %v1119, %v1117
        %v1158 = vpack.c.bf16 %v1120, %v1118
        %v1159 = vpack.c.bf16 %v1123, %v1121
        %v1160 = vpack.c.bf16 %v1124, %v1122
        %v1161 = vpack.c.bf16 %v1127, %v1125
        %v1162 = vpack.c.bf16 %v1128, %v1126
        %v1163 = vpack.c.bf16 %v1131, %v1129
        %v1164 = vpack.c.bf16 %v1132, %v1130
        %v1165 = vld [vmem:[%s238] sm:$0xff]
        %v1166 = vld [vmem:[%s238 + $0x8] sm:$0xff]
        %v1167 = vld [vmem:[%s238 + $0x10] sm:$0xff]
        %v1168 = vld [vmem:[%s238 + $0x18] sm:$0xff]
        %v1169 = vld [vmem:[%s238 + $0x20] sm:$0xff]
        %v1170 = vld [vmem:[%s238 + $0x28] sm:$0xff]
        %v1171 = vld [vmem:[%s238 + $0x30] sm:$0xff]
        %v1172 = vld [vmem:[%s238 + $0x38] sm:$0xff]
        %v1173 = vld [vmem:[%s238 + $0x40] sm:$0xff]
        %v1174 = vld [vmem:[%s238 + $0x48] sm:$0xff]
        %v1175 = vld [vmem:[%s238 + $0x50] sm:$0xff]
        %v1176 = vld [vmem:[%s238 + $0x58] sm:$0xff]
        %v1177 = vld [vmem:[%s238 + $0x60] sm:$0xff]
        %v1178 = vld [vmem:[%s238 + $0x68] sm:$0xff]
        %v1179 = vld [vmem:[%s238 + $0x70] sm:$0xff]
        %v1180 = vld [vmem:[%s238 + $0x78] sm:$0xff]
        %v1181 = vld [vmem:[%s238 + $0x80] sm:$0xff]
        %v1182 = vld [vmem:[%s238 + $0x88] sm:$0xff]
        %v1183 = vld [vmem:[%s238 + $0x90] sm:$0xff]
        %v1184 = vld [vmem:[%s238 + $0x98] sm:$0xff]
        %v1185 = vld [vmem:[%s238 + $0xa0] sm:$0xff]
        %v1186 = vld [vmem:[%s238 + $0xa8] sm:$0xff]
        %v1187 = vld [vmem:[%s238 + $0xb0] sm:$0xff]
        %v1188 = vld [vmem:[%s238 + $0xb8] sm:$0xff]
        %v1189 = vld [vmem:[%s238 + $0xc0] sm:$0xff]
        %v1190 = vld [vmem:[%s238 + $0xc8] sm:$0xff]
        %v1191 = vld [vmem:[%s238 + $0xd0] sm:$0xff]
        %v1192 = vld [vmem:[%s238 + $0xd8] sm:$0xff]
        %v1193 = vld [vmem:[%s238 + $0xe0] sm:$0xff]
        %v1194 = vld [vmem:[%s238 + $0xe8] sm:$0xff]
        %v1195 = vld [vmem:[%s238 + $0xf0] sm:$0xff]
        %v1196 = vld [vmem:[%s238 + $0xf8] sm:$0xff]
        %v1229 = vunpack.c.l.b16 %v1165
        %v1230 = vunpack.c.h.b16 %v1165
        %v1231 = vunpack.c.l.b16 %v1166
        %v1232 = vunpack.c.h.b16 %v1166
        %v1233 = vunpack.c.l.b16 %v1167
        %v1234 = vunpack.c.h.b16 %v1167
        %v1235 = vunpack.c.l.b16 %v1168
        %v1236 = vunpack.c.h.b16 %v1168
        %v1237 = vunpack.c.l.b16 %v1169
        %v1238 = vunpack.c.h.b16 %v1169
        %v1239 = vunpack.c.l.b16 %v1170
        %v1240 = vunpack.c.h.b16 %v1170
        %v1241 = vunpack.c.l.b16 %v1171
        %v1242 = vunpack.c.h.b16 %v1171
        %v1243 = vunpack.c.l.b16 %v1172
        %v1244 = vunpack.c.h.b16 %v1172
        %v1245 = vunpack.c.l.b16 %v1173
        %v1246 = vunpack.c.h.b16 %v1173
        %v1247 = vunpack.c.l.b16 %v1174
        %v1248 = vunpack.c.h.b16 %v1174
        %v1249 = vunpack.c.l.b16 %v1175
        %v1250 = vunpack.c.h.b16 %v1175
        %v1251 = vunpack.c.l.b16 %v1176
        %v1252 = vunpack.c.h.b16 %v1176
        %v1253 = vunpack.c.l.b16 %v1177
        %v1254 = vunpack.c.h.b16 %v1177
        %v1255 = vunpack.c.l.b16 %v1178
        %v1256 = vunpack.c.h.b16 %v1178
        %v1257 = vunpack.c.l.b16 %v1179
        %v1258 = vunpack.c.h.b16 %v1179
        %v1259 = vunpack.c.l.b16 %v1180
        %v1260 = vunpack.c.h.b16 %v1180
        %v1261 = vunpack.c.l.b16 %v1181
        %v1262 = vunpack.c.h.b16 %v1181
        %v1263 = vunpack.c.l.b16 %v1182
        %v1264 = vunpack.c.h.b16 %v1182
        %v1265 = vunpack.c.l.b16 %v1183
        %v1266 = vunpack.c.h.b16 %v1183
        %v1267 = vunpack.c.l.b16 %v1184
        %v1268 = vunpack.c.h.b16 %v1184
        %v1269 = vunpack.c.l.b16 %v1185
        %v1270 = vunpack.c.h.b16 %v1185
        %v1271 = vunpack.c.l.b16 %v1186
        %v1272 = vunpack.c.h.b16 %v1186
        %v1273 = vunpack.c.l.b16 %v1187
        %v1274 = vunpack.c.h.b16 %v1187
        %v1275 = vunpack.c.l.b16 %v1188
        %v1276 = vunpack.c.h.b16 %v1188
        %v1277 = vunpack.c.l.b16 %v1189
        %v1278 = vunpack.c.h.b16 %v1189
        %v1279 = vunpack.c.l.b16 %v1190
        %v1280 = vunpack.c.h.b16 %v1190
        %v1281 = vunpack.c.l.b16 %v1191
        %v1282 = vunpack.c.h.b16 %v1191
        %v1283 = vunpack.c.l.b16 %v1192
        %v1284 = vunpack.c.h.b16 %v1192
        %v1285 = vunpack.c.l.b16 %v1193
        %v1286 = vunpack.c.h.b16 %v1193
        %v1287 = vunpack.c.l.b16 %v1194
        %v1288 = vunpack.c.h.b16 %v1194
        %v1289 = vunpack.c.l.b16 %v1195
        %v1290 = vunpack.c.h.b16 %v1195
        %v1291 = vunpack.c.l.b16 %v1196
        %v1292 = vunpack.c.h.b16 %v1196
        %v1293 = vpack.c.b16 %v1231, %v1229
        %v1294 = vpack.c.b16 %v1232, %v1230
        %v1295 = vpack.c.b16 %v1235, %v1233
        %v1296 = vpack.c.b16 %v1236, %v1234
        %v1297 = vpack.c.b16 %v1239, %v1237
        %v1298 = vpack.c.b16 %v1240, %v1238
        %v1299 = vpack.c.b16 %v1243, %v1241
        %v1300 = vpack.c.b16 %v1244, %v1242
        %v1301 = vpack.c.b16 %v1247, %v1245
        %v1302 = vpack.c.b16 %v1248, %v1246
        %v1303 = vpack.c.b16 %v1251, %v1249
        %v1304 = vpack.c.b16 %v1252, %v1250
        %v1305 = vpack.c.b16 %v1255, %v1253
        %v1306 = vpack.c.b16 %v1256, %v1254
        %v1307 = vpack.c.b16 %v1259, %v1257
        %v1308 = vpack.c.b16 %v1260, %v1258
        %v1309 = vpack.c.b16 %v1263, %v1261
        %v1310 = vpack.c.b16 %v1264, %v1262
        %v1311 = vpack.c.b16 %v1267, %v1265
        %v1312 = vpack.c.b16 %v1268, %v1266
        %v1313 = vpack.c.b16 %v1271, %v1269
        %v1314 = vpack.c.b16 %v1272, %v1270
        %v1315 = vpack.c.b16 %v1275, %v1273
        %v1316 = vpack.c.b16 %v1276, %v1274
        %v1317 = vpack.c.b16 %v1279, %v1277
        %v1318 = vpack.c.b16 %v1280, %v1278
        %v1319 = vpack.c.b16 %v1283, %v1281
        %v1320 = vpack.c.b16 %v1284, %v1282
        %v1321 = vpack.c.b16 %v1287, %v1285
        %v1322 = vpack.c.b16 %v1288, %v1286
        %v1323 = vpack.c.b16 %v1291, %v1289
        %v1324 = vpack.c.b16 %v1292, %v1290
        %1357 = vmatpush.bf16.msra.mxu0 %v1307
        %1358 = vmatpush.bf16.msra.mxu0 %v1305
        %1359 = vmatpush.bf16.msra.mxu0 %v1303
        %1360 = vmatpush.bf16.msra.mxu0 %v1301
        %1361 = vmatpush.bf16.msra.mxu0 %v1299
        %1362 = vmatpush.bf16.msra.mxu0 %v1297
        %1363 = vmatpush.bf16.msra.mxu0 %v1295
        %1364 = vmatpush.bf16.msra.mxu0 %v1293
        %1365 = vmatmul.bf16.gmra.mxu0 %v1133
        %v1366 = vpop.f32.mrf.mxu0
        %v1367 = vadd.f32 0.0, %v1366
        %v1368 = vpop.f32.mrf.mxu0
        %v1369 = vadd.f32 0.0, %v1368
        %1370 = vmatmul.bf16.gmra.mxu0 %v1135
        %v1371 = vpop.f32.mrf.mxu0
        %v1372 = vadd.f32 0.0, %v1371
        %v1373 = vpop.f32.mrf.mxu0
        %v1374 = vadd.f32 0.0, %v1373
        %1375 = vmatmul.bf16.gmra.mxu0 %v1137
        %v1376 = vpop.f32.mrf.mxu0
        %v1377 = vadd.f32 0.0, %v1376
        %v1378 = vpop.f32.mrf.mxu0
        %v1379 = vadd.f32 0.0, %v1378
        %1380 = vmatmul.bf16.gmra.mxu0 %v1139
        %v1381 = vpop.f32.mrf.mxu0
        %v1382 = vadd.f32 0.0, %v1381
        %v1383 = vpop.f32.mrf.mxu0
        %v1384 = vadd.f32 0.0, %v1383
        %1385 = vmatmul.bf16.gmra.mxu0 %v1141
        %v1386 = vpop.f32.mrf.mxu0
        %v1387 = vadd.f32 0.0, %v1386
        %v1388 = vpop.f32.mrf.mxu0
        %v1389 = vadd.f32 0.0, %v1388
        %1390 = vmatmul.bf16.gmra.mxu0 %v1143
        %v1391 = vpop.f32.mrf.mxu0
        %v1392 = vadd.f32 0.0, %v1391
        %v1393 = vpop.f32.mrf.mxu0
        %v1394 = vadd.f32 0.0, %v1393
        %1395 = vmatmul.bf16.gmra.mxu0 %v1145
        %v1396 = vpop.f32.mrf.mxu0
        %v1397 = vadd.f32 0.0, %v1396
        %v1398 = vpop.f32.mrf.mxu0
        %v1399 = vadd.f32 0.0, %v1398
        %1400 = vmatmul.bf16.gmra.mxu0 %v1147
        %v1401 = vpop.f32.mrf.mxu0
        %v1402 = vadd.f32 0.0, %v1401
        %v1403 = vpop.f32.mrf.mxu0
        %v1404 = vadd.f32 0.0, %v1403
        %1405 = vmatmul.bf16.gmra.mxu0 %v1149
        %v1406 = vpop.f32.mrf.mxu0
        %v1407 = vadd.f32 0.0, %v1406
        %v1408 = vpop.f32.mrf.mxu0
        %v1409 = vadd.f32 0.0, %v1408
        %1410 = vmatmul.bf16.gmra.mxu0 %v1151
        %v1411 = vpop.f32.mrf.mxu0
        %v1412 = vadd.f32 0.0, %v1411
        %v1413 = vpop.f32.mrf.mxu0
        %v1414 = vadd.f32 0.0, %v1413
        %1415 = vmatmul.bf16.gmra.mxu0 %v1153
        %v1416 = vpop.f32.mrf.mxu0
        %v1417 = vadd.f32 0.0, %v1416
        %v1418 = vpop.f32.mrf.mxu0
        %v1419 = vadd.f32 0.0, %v1418
        %1420 = vmatmul.bf16.gmra.mxu0 %v1155
        %v1421 = vpop.f32.mrf.mxu0
        %v1422 = vadd.f32 0.0, %v1421
        %v1423 = vpop.f32.mrf.mxu0
        %v1424 = vadd.f32 0.0, %v1423
        %1425 = vmatmul.bf16.gmra.mxu0 %v1157
        %v1426 = vpop.f32.mrf.mxu0
        %v1427 = vadd.f32 0.0, %v1426
        %v1428 = vpop.f32.mrf.mxu0
        %v1429 = vadd.f32 0.0, %v1428
        %1430 = vmatmul.bf16.gmra.mxu0 %v1159
        %v1431 = vpop.f32.mrf.mxu0
        %v1432 = vadd.f32 0.0, %v1431
        %v1433 = vpop.f32.mrf.mxu0
        %v1434 = vadd.f32 0.0, %v1433
        %1435 = vmatmul.bf16.gmra.mxu0 %v1161
        %v1436 = vpop.f32.mrf.mxu0
        %v1437 = vadd.f32 0.0, %v1436
        %v1438 = vpop.f32.mrf.mxu0
        %v1439 = vadd.f32 0.0, %v1438
        %1440 = vmatmul.bf16.gmra.mxu0 %v1163
        %v1441 = vpop.f32.mrf.mxu0
        %v1442 = vadd.f32 0.0, %v1441
        %v1443 = vpop.f32.mrf.mxu0
        %v1444 = vadd.f32 0.0, %v1443
        %1445 = vdwg.mxu0
        %1446 = vmatpush.bf16.msra.mxu0 %v1323
        %1447 = vmatpush.bf16.msra.mxu0 %v1321
        %1448 = vmatpush.bf16.msra.mxu0 %v1319
        %1449 = vmatpush.bf16.msra.mxu0 %v1317
        %1450 = vmatpush.bf16.msra.mxu0 %v1315
        %1451 = vmatpush.bf16.msra.mxu0 %v1313
        %1452 = vmatpush.bf16.msra.mxu0 %v1311
        %1453 = vmatpush.bf16.msra.mxu0 %v1309
        %1454 = vmatmul.bf16.gmra.mxu0 %v1134
        %v1455 = vpop.f32.mrf.mxu0
        %v1456 = vadd.f32 %v1367, %v1455
        %v1457 = vpop.f32.mrf.mxu0
        %v1458 = vadd.f32 %v1369, %v1457
        %1459 = vmatmul.bf16.gmra.mxu0 %v1136
        %v1460 = vpop.f32.mrf.mxu0
        %v1461 = vadd.f32 %v1372, %v1460
        %v1462 = vpop.f32.mrf.mxu0
        %v1463 = vadd.f32 %v1374, %v1462
        %1464 = vmatmul.bf16.gmra.mxu0 %v1138
        %v1465 = vpop.f32.mrf.mxu0
        %v1466 = vadd.f32 %v1377, %v1465
        %v1467 = vpop.f32.mrf.mxu0
        %v1468 = vadd.f32 %v1379, %v1467
        %1469 = vmatmul.bf16.gmra.mxu0 %v1140
        %v1470 = vpop.f32.mrf.mxu0
        %v1471 = vadd.f32 %v1382, %v1470
        %v1472 = vpop.f32.mrf.mxu0
        %v1473 = vadd.f32 %v1384, %v1472
        %1474 = vmatmul.bf16.gmra.mxu0 %v1142
        %v1475 = vpop.f32.mrf.mxu0
        %v1476 = vadd.f32 %v1387, %v1475
        %v1477 = vpop.f32.mrf.mxu0
        %v1478 = vadd.f32 %v1389, %v1477
        %1479 = vmatmul.bf16.gmra.mxu0 %v1144
        %v1480 = vpop.f32.mrf.mxu0
        %v1481 = vadd.f32 %v1392, %v1480
        %v1482 = vpop.f32.mrf.mxu0
        %v1483 = vadd.f32 %v1394, %v1482
        %1484 = vmatmul.bf16.gmra.mxu0 %v1146
        %v1485 = vpop.f32.mrf.mxu0
        %v1486 = vadd.f32 %v1397, %v1485
        %v1487 = vpop.f32.mrf.mxu0
        %v1488 = vadd.f32 %v1399, %v1487
        %1489 = vmatmul.bf16.gmra.mxu0 %v1148
        %v1490 = vpop.f32.mrf.mxu0
        %v1491 = vadd.f32 %v1402, %v1490
        %v1492 = vpop.f32.mrf.mxu0
        %v1493 = vadd.f32 %v1404, %v1492
        %1494 = vmatmul.bf16.gmra.mxu0 %v1150
        %v1495 = vpop.f32.mrf.mxu0
        %v1496 = vadd.f32 %v1407, %v1495
        %v1497 = vpop.f32.mrf.mxu0
        %v1498 = vadd.f32 %v1409, %v1497
        %1499 = vmatmul.bf16.gmra.mxu0 %v1152
        %v1500 = vpop.f32.mrf.mxu0
        %v1501 = vadd.f32 %v1412, %v1500
        %v1502 = vpop.f32.mrf.mxu0
        %v1503 = vadd.f32 %v1414, %v1502
        %1504 = vmatmul.bf16.gmra.mxu0 %v1154
        %v1505 = vpop.f32.mrf.mxu0
        %v1506 = vadd.f32 %v1417, %v1505
        %v1507 = vpop.f32.mrf.mxu0
        %v1508 = vadd.f32 %v1419, %v1507
        %1509 = vmatmul.bf16.gmra.mxu0 %v1156
        %v1510 = vpop.f32.mrf.mxu0
        %v1511 = vadd.f32 %v1422, %v1510
        %v1512 = vpop.f32.mrf.mxu0
        %v1513 = vadd.f32 %v1424, %v1512
        %1514 = vmatmul.bf16.gmra.mxu0 %v1158
        %v1515 = vpop.f32.mrf.mxu0
        %v1516 = vadd.f32 %v1427, %v1515
        %v1517 = vpop.f32.mrf.mxu0
        %v1518 = vadd.f32 %v1429, %v1517
        %1519 = vmatmul.bf16.gmra.mxu0 %v1160
        %v1520 = vpop.f32.mrf.mxu0
        %v1521 = vadd.f32 %v1432, %v1520
        %v1522 = vpop.f32.mrf.mxu0
        %v1523 = vadd.f32 %v1434, %v1522
        %1524 = vmatmul.bf16.gmra.mxu0 %v1162
        %v1525 = vpop.f32.mrf.mxu0
        %v1526 = vadd.f32 %v1437, %v1525
        %v1527 = vpop.f32.mrf.mxu0
        %v1528 = vadd.f32 %v1439, %v1527
        %1529 = vmatmul.bf16.gmra.mxu0 %v1164
        %v1530 = vpop.f32.mrf.mxu0
        %v1531 = vadd.f32 %v1442, %v1530
        %v1532 = vpop.f32.mrf.mxu0
        %v1533 = vadd.f32 %v1444, %v1532
        %1534 = vdwg.mxu0
        %1535 = vmatpush.bf16.msra.mxu0 %v1308
        %1536 = vmatpush.bf16.msra.mxu0 %v1306
        %1537 = vmatpush.bf16.msra.mxu0 %v1304
        %1538 = vmatpush.bf16.msra.mxu0 %v1302
        %1539 = vmatpush.bf16.msra.mxu0 %v1300
        %1540 = vmatpush.bf16.msra.mxu0 %v1298
        %1541 = vmatpush.bf16.msra.mxu0 %v1296
        %1542 = vmatpush.bf16.msra.mxu0 %v1294
        %1543 = vmatmul.bf16.gmra.mxu0 %v1133
        %v1544 = vpop.f32.mrf.mxu0
        %v1545 = vadd.f32 0.0, %v1544
        %v1546 = vpop.f32.mrf.mxu0
        %v1547 = vadd.f32 0.0, %v1546
        %1548 = vmatmul.bf16.gmra.mxu0 %v1135
        %v1549 = vpop.f32.mrf.mxu0
        %v1550 = vadd.f32 0.0, %v1549
        %v1551 = vpop.f32.mrf.mxu0
        %v1552 = vadd.f32 0.0, %v1551
        %1553 = vmatmul.bf16.gmra.mxu0 %v1137
        %v1554 = vpop.f32.mrf.mxu0
        %v1555 = vadd.f32 0.0, %v1554
        %v1556 = vpop.f32.mrf.mxu0
        %v1557 = vadd.f32 0.0, %v1556
        %1558 = vmatmul.bf16.gmra.mxu0 %v1139
        %v1559 = vpop.f32.mrf.mxu0
        %v1560 = vadd.f32 0.0, %v1559
        %v1561 = vpop.f32.mrf.mxu0
        %v1562 = vadd.f32 0.0, %v1561
        %1563 = vmatmul.bf16.gmra.mxu0 %v1141
        %v1564 = vpop.f32.mrf.mxu0
        %v1565 = vadd.f32 0.0, %v1564
        %v1566 = vpop.f32.mrf.mxu0
        %v1567 = vadd.f32 0.0, %v1566
        %1568 = vmatmul.bf16.gmra.mxu0 %v1143
        %v1569 = vpop.f32.mrf.mxu0
        %v1570 = vadd.f32 0.0, %v1569
        %v1571 = vpop.f32.mrf.mxu0
        %v1572 = vadd.f32 0.0, %v1571
        %1573 = vmatmul.bf16.gmra.mxu0 %v1145
        %v1574 = vpop.f32.mrf.mxu0
        %v1575 = vadd.f32 0.0, %v1574
        %v1576 = vpop.f32.mrf.mxu0
        %v1577 = vadd.f32 0.0, %v1576
        %1578 = vmatmul.bf16.gmra.mxu0 %v1147
        %v1579 = vpop.f32.mrf.mxu0
        %v1580 = vadd.f32 0.0, %v1579
        %v1581 = vpop.f32.mrf.mxu0
        %v1582 = vadd.f32 0.0, %v1581
        %1583 = vmatmul.bf16.gmra.mxu0 %v1149
        %v1584 = vpop.f32.mrf.mxu0
        %v1585 = vadd.f32 0.0, %v1584
        %v1586 = vpop.f32.mrf.mxu0
        %v1587 = vadd.f32 0.0, %v1586
        %1588 = vmatmul.bf16.gmra.mxu0 %v1151
        %v1589 = vpop.f32.mrf.mxu0
        %v1590 = vadd.f32 0.0, %v1589
        %v1591 = vpop.f32.mrf.mxu0
        %v1592 = vadd.f32 0.0, %v1591
        %1593 = vmatmul.bf16.gmra.mxu0 %v1153
        %v1594 = vpop.f32.mrf.mxu0
        %v1595 = vadd.f32 0.0, %v1594
        %v1596 = vpop.f32.mrf.mxu0
        %v1597 = vadd.f32 0.0, %v1596
        %1598 = vmatmul.bf16.gmra.mxu0 %v1155
        %v1599 = vpop.f32.mrf.mxu0
        %v1600 = vadd.f32 0.0, %v1599
        %v1601 = vpop.f32.mrf.mxu0
        %v1602 = vadd.f32 0.0, %v1601
        %1603 = vmatmul.bf16.gmra.mxu0 %v1157
        %v1604 = vpop.f32.mrf.mxu0
        %v1605 = vadd.f32 0.0, %v1604
        %v1606 = vpop.f32.mrf.mxu0
        %v1607 = vadd.f32 0.0, %v1606
        %1608 = vmatmul.bf16.gmra.mxu0 %v1159
        %v1609 = vpop.f32.mrf.mxu0
        %v1610 = vadd.f32 0.0, %v1609
        %v1611 = vpop.f32.mrf.mxu0
        %v1612 = vadd.f32 0.0, %v1611
        %1613 = vmatmul.bf16.gmra.mxu0 %v1161
        %v1614 = vpop.f32.mrf.mxu0
        %v1615 = vadd.f32 0.0, %v1614
        %v1616 = vpop.f32.mrf.mxu0
        %v1617 = vadd.f32 0.0, %v1616
        %1618 = vmatmul.bf16.gmra.mxu0 %v1163
        %v1619 = vpop.f32.mrf.mxu0
        %v1620 = vadd.f32 0.0, %v1619
        %v1621 = vpop.f32.mrf.mxu0
        %v1622 = vadd.f32 0.0, %v1621
        %1623 = vdwg.mxu0
        %1624 = vmatpush.bf16.msra.mxu0 %v1324
        %1625 = vmatpush.bf16.msra.mxu0 %v1322
        %1626 = vmatpush.bf16.msra.mxu0 %v1320
        %1627 = vmatpush.bf16.msra.mxu0 %v1318
        %1628 = vmatpush.bf16.msra.mxu0 %v1316
        %1629 = vmatpush.bf16.msra.mxu0 %v1314
        %1630 = vmatpush.bf16.msra.mxu0 %v1312
        %1631 = vmatpush.bf16.msra.mxu0 %v1310
        %1632 = vmatmul.bf16.gmra.mxu0 %v1134
        %v1633 = vpop.f32.mrf.mxu0
        %v1634 = vadd.f32 %v1545, %v1633
        %v1635 = vpop.f32.mrf.mxu0
        %v1636 = vadd.f32 %v1547, %v1635
        %1637 = vmatmul.bf16.gmra.mxu0 %v1136
        %v1638 = vpop.f32.mrf.mxu0
        %v1639 = vadd.f32 %v1550, %v1638
        %v1640 = vpop.f32.mrf.mxu0
        %v1641 = vadd.f32 %v1552, %v1640
        %1642 = vmatmul.bf16.gmra.mxu0 %v1138
        %v1643 = vpop.f32.mrf.mxu0
        %v1644 = vadd.f32 %v1555, %v1643
        %v1645 = vpop.f32.mrf.mxu0
        %v1646 = vadd.f32 %v1557, %v1645
        %1647 = vmatmul.bf16.gmra.mxu0 %v1140
        %v1648 = vpop.f32.mrf.mxu0
        %v1649 = vadd.f32 %v1560, %v1648
        %v1650 = vpop.f32.mrf.mxu0
        %v1651 = vadd.f32 %v1562, %v1650
        %1652 = vmatmul.bf16.gmra.mxu0 %v1142
        %v1653 = vpop.f32.mrf.mxu0
        %v1654 = vadd.f32 %v1565, %v1653
        %v1655 = vpop.f32.mrf.mxu0
        %v1656 = vadd.f32 %v1567, %v1655
        %1657 = vmatmul.bf16.gmra.mxu0 %v1144
        %v1658 = vpop.f32.mrf.mxu0
        %v1659 = vadd.f32 %v1570, %v1658
        %v1660 = vpop.f32.mrf.mxu0
        %v1661 = vadd.f32 %v1572, %v1660
        %1662 = vmatmul.bf16.gmra.mxu0 %v1146
        %v1663 = vpop.f32.mrf.mxu0
        %v1664 = vadd.f32 %v1575, %v1663
        %v1665 = vpop.f32.mrf.mxu0
        %v1666 = vadd.f32 %v1577, %v1665
        %1667 = vmatmul.bf16.gmra.mxu0 %v1148
        %v1668 = vpop.f32.mrf.mxu0
        %v1669 = vadd.f32 %v1580, %v1668
        %v1670 = vpop.f32.mrf.mxu0
        %v1671 = vadd.f32 %v1582, %v1670
        %1672 = vmatmul.bf16.gmra.mxu0 %v1150
        %v1673 = vpop.f32.mrf.mxu0
        %v1674 = vadd.f32 %v1585, %v1673
        %v1675 = vpop.f32.mrf.mxu0
        %v1676 = vadd.f32 %v1587, %v1675
        %1677 = vmatmul.bf16.gmra.mxu0 %v1152
        %v1678 = vpop.f32.mrf.mxu0
        %v1679 = vadd.f32 %v1590, %v1678
        %v1680 = vpop.f32.mrf.mxu0
        %v1681 = vadd.f32 %v1592, %v1680
        %1682 = vmatmul.bf16.gmra.mxu0 %v1154
        %v1683 = vpop.f32.mrf.mxu0
        %v1684 = vadd.f32 %v1595, %v1683
        %v1685 = vpop.f32.mrf.mxu0
        %v1686 = vadd.f32 %v1597, %v1685
        %1687 = vmatmul.bf16.gmra.mxu0 %v1156
        %v1688 = vpop.f32.mrf.mxu0
        %v1689 = vadd.f32 %v1600, %v1688
        %v1690 = vpop.f32.mrf.mxu0
        %v1691 = vadd.f32 %v1602, %v1690
        %1692 = vmatmul.bf16.gmra.mxu0 %v1158
        %v1693 = vpop.f32.mrf.mxu0
        %v1694 = vadd.f32 %v1605, %v1693
        %v1695 = vpop.f32.mrf.mxu0
        %v1696 = vadd.f32 %v1607, %v1695
        %1697 = vmatmul.bf16.gmra.mxu0 %v1160
        %v1698 = vpop.f32.mrf.mxu0
        %v1699 = vadd.f32 %v1610, %v1698
        %v1700 = vpop.f32.mrf.mxu0
        %v1701 = vadd.f32 %v1612, %v1700
        %1702 = vmatmul.bf16.gmra.mxu0 %v1162
        %v1703 = vpop.f32.mrf.mxu0
        %v1704 = vadd.f32 %v1615, %v1703
        %v1705 = vpop.f32.mrf.mxu0
        %v1706 = vadd.f32 %v1617, %v1705
        %1707 = vmatmul.bf16.gmra.mxu0 %v1164
        %v1708 = vpop.f32.mrf.mxu0
        %v1709 = vadd.f32 %v1620, %v1708
        %v1710 = vpop.f32.mrf.mxu0
        %v1711 = vadd.f32 %v1622, %v1710
        %1712 = vdwg.mxu0
        %p1713 = scmp.eq.s32.totalorder %s24, 0
        // Predicated region
        $region45: #{tpu_custom_call.1} parent=31 // pred_check
          %p1714 = pneg %p1713
        $region46: #{tpu_custom_call.1} parent=31 // pred_check_branch
          %1716 = sbr.rel (%p1714) target = $region48
        $region47: #{tpu_custom_call.1} parent=31 // pred_region
          %1717 = vst [vmem:[#allocation2] sm:$0xff] %v1456
          %1718 = vst [vmem:[#allocation2 + $0x8] sm:$0xff] %v1634
          %1719 = vst [vmem:[#allocation2 + $0x10] sm:$0xff] %v1458
          %1720 = vst [vmem:[#allocation2 + $0x18] sm:$0xff] %v1636
          %1721 = vst [vmem:[#allocation2 + $0x20] sm:$0xff] %v1461
          %1722 = vst [vmem:[#allocation2 + $0x28] sm:$0xff] %v1639
          %1723 = vst [vmem:[#allocation2 + $0x30] sm:$0xff] %v1463
          %1724 = vst [vmem:[#allocation2 + $0x38] sm:$0xff] %v1641
          %1725 = vst [vmem:[#allocation2 + $0x40] sm:$0xff] %v1466
          %1726 = vst [vmem:[#allocation2 + $0x48] sm:$0xff] %v1644
          %1727 = vst [vmem:[#allocation2 + $0x50] sm:$0xff] %v1468
          %1728 = vst [vmem:[#allocation2 + $0x58] sm:$0xff] %v1646
          %1729 = vst [vmem:[#allocation2 + $0x60] sm:$0xff] %v1471
          %1730 = vst [vmem:[#allocation2 + $0x68] sm:$0xff] %v1649
          %1731 = vst [vmem:[#allocation2 + $0x70] sm:$0xff] %v1473
          %1732 = vst [vmem:[#allocation2 + $0x78] sm:$0xff] %v1651
          %1733 = vst [vmem:[#allocation2 + $0x80] sm:$0xff] %v1476
          %1734 = vst [vmem:[#allocation2 + $0x88] sm:$0xff] %v1654
          %1735 = vst [vmem:[#allocation2 + $0x90] sm:$0xff] %v1478
          %1736 = vst [vmem:[#allocation2 + $0x98] sm:$0xff] %v1656
          %1737 = vst [vmem:[#allocation2 + $0xa0] sm:$0xff] %v1481
          %1738 = vst [vmem:[#allocation2 + $0xa8] sm:$0xff] %v1659
          %1739 = vst [vmem:[#allocation2 + $0xb0] sm:$0xff] %v1483
          %1740 = vst [vmem:[#allocation2 + $0xb8] sm:$0xff] %v1661
          %1741 = vst [vmem:[#allocation2 + $0xc0] sm:$0xff] %v1486
          %1742 = vst [vmem:[#allocation2 + $0xc8] sm:$0xff] %v1664
          %1743 = vst [vmem:[#allocation2 + $0xd0] sm:$0xff] %v1488
          %1744 = vst [vmem:[#allocation2 + $0xd8] sm:$0xff] %v1666
          %1745 = vst [vmem:[#allocation2 + $0xe0] sm:$0xff] %v1491
          %1746 = vst [vmem:[#allocation2 + $0xe8] sm:$0xff] %v1669
          %1747 = vst [vmem:[#allocation2 + $0xf0] sm:$0xff] %v1493
          %1748 = vst [vmem:[#allocation2 + $0xf8] sm:$0xff] %v1671
          %1749 = vst [vmem:[#allocation2 + $0x100] sm:$0xff] %v1496
          %1750 = vst [vmem:[#allocation2 + $0x108] sm:$0xff] %v1674
          %1751 = vst [vmem:[#allocation2 + $0x110] sm:$0xff] %v1498
          %1752 = vst [vmem:[#allocation2 + $0x118] sm:$0xff] %v1676
          %1753 = vst [vmem:[#allocation2 + $0x120] sm:$0xff] %v1501
          %1754 = vst [vmem:[#allocation2 + $0x128] sm:$0xff] %v1679
          %1755 = vst [vmem:[#allocation2 + $0x130] sm:$0xff] %v1503
          %1756 = vst [vmem:[#allocation2 + $0x138] sm:$0xff] %v1681
          %1757 = vst [vmem:[#allocation2 + $0x140] sm:$0xff] %v1506
          %1758 = vst [vmem:[#allocation2 + $0x148] sm:$0xff] %v1684
          %1759 = vst [vmem:[#allocation2 + $0x150] sm:$0xff] %v1508
          %1760 = vst [vmem:[#allocation2 + $0x158] sm:$0xff] %v1686
          %1761 = vst [vmem:[#allocation2 + $0x160] sm:$0xff] %v1511
          %1762 = vst [vmem:[#allocation2 + $0x168] sm:$0xff] %v1689
          %1763 = vst [vmem:[#allocation2 + $0x170] sm:$0xff] %v1513
          %1764 = vst [vmem:[#allocation2 + $0x178] sm:$0xff] %v1691
          %1765 = vst [vmem:[#allocation2 + $0x180] sm:$0xff] %v1516
          %1766 = vst [vmem:[#allocation2 + $0x188] sm:$0xff] %v1694
          %1767 = vst [vmem:[#allocation2 + $0x190] sm:$0xff] %v1518
          %1768 = vst [vmem:[#allocation2 + $0x198] sm:$0xff] %v1696
          %1769 = vst [vmem:[#allocation2 + $0x1a0] sm:$0xff] %v1521
          %1770 = vst [vmem:[#allocation2 + $0x1a8] sm:$0xff] %v1699
          %1771 = vst [vmem:[#allocation2 + $0x1b0] sm:$0xff] %v1523
          %1772 = vst [vmem:[#allocation2 + $0x1b8] sm:$0xff] %v1701
          %1773 = vst [vmem:[#allocation2 + $0x1c0] sm:$0xff] %v1526
          %1774 = vst [vmem:[#allocation2 + $0x1c8] sm:$0xff] %v1704
          %1775 = vst [vmem:[#allocation2 + $0x1d0] sm:$0xff] %v1528
          %1776 = vst [vmem:[#allocation2 + $0x1d8] sm:$0xff] %v1706
          %1777 = vst [vmem:[#allocation2 + $0x1e0] sm:$0xff] %v1531
          %1778 = vst [vmem:[#allocation2 + $0x1e8] sm:$0xff] %v1709
          %1779 = vst [vmem:[#allocation2 + $0x1f0] sm:$0xff] %v1533
          %1780 = vst [vmem:[#allocation2 + $0x1f8] sm:$0xff] %v1711
        $region48: #{tpu_custom_call.1} parent=31 // pred_fallthru
          _
        %p1781 = scmp.gt.s32.totalorder %s24, 0
        // Predicated region
        $region49: #{tpu_custom_call.1} parent=31 // pred_check
          %p1782 = pneg %p1781
        $region50: #{tpu_custom_call.1} parent=31 // pred_check_branch
          %1784 = sbr.rel (%p1782) target = $region52
        $region51: #{tpu_custom_call.1} parent=31 // pred_region
          %v1785 = vld [vmem:[#allocation2] sm:$0xff]
          %v1786 = vld [vmem:[#allocation2 + $0x8] sm:$0xff]
          %v1787 = vld [vmem:[#allocation2 + $0x10] sm:$0xff]
          %v1788 = vld [vmem:[#allocation2 + $0x18] sm:$0xff]
          %v1789 = vld [vmem:[#allocation2 + $0x20] sm:$0xff]
          %v1790 = vld [vmem:[#allocation2 + $0x28] sm:$0xff]
          %v1791 = vld [vmem:[#allocation2 + $0x30] sm:$0xff]
          %v1792 = vld [vmem:[#allocation2 + $0x38] sm:$0xff]
          %v1793 = vld [vmem:[#allocation2 + $0x40] sm:$0xff]
          %v1794 = vld [vmem:[#allocation2 + $0x48] sm:$0xff]
          %v1795 = vld [vmem:[#allocation2 + $0x50] sm:$0xff]
          %v1796 = vld [vmem:[#allocation2 + $0x58] sm:$0xff]
          %v1797 = vld [vmem:[#allocation2 + $0x60] sm:$0xff]
          %v1798 = vld [vmem:[#allocation2 + $0x68] sm:$0xff]
          %v1799 = vld [vmem:[#allocation2 + $0x70] sm:$0xff]
          %v1800 = vld [vmem:[#allocation2 + $0x78] sm:$0xff]
          %v1801 = vld [vmem:[#allocation2 + $0x80] sm:$0xff]
          %v1802 = vld [vmem:[#allocation2 + $0x88] sm:$0xff]
          %v1803 = vld [vmem:[#allocation2 + $0x90] sm:$0xff]
          %v1804 = vld [vmem:[#allocation2 + $0x98] sm:$0xff]
          %v1805 = vld [vmem:[#allocation2 + $0xa0] sm:$0xff]
          %v1806 = vld [vmem:[#allocation2 + $0xa8] sm:$0xff]
          %v1807 = vld [vmem:[#allocation2 + $0xb0] sm:$0xff]
          %v1808 = vld [vmem:[#allocation2 + $0xb8] sm:$0xff]
          %v1809 = vld [vmem:[#allocation2 + $0xc0] sm:$0xff]
          %v1810 = vld [vmem:[#allocation2 + $0xc8] sm:$0xff]
          %v1811 = vld [vmem:[#allocation2 + $0xd0] sm:$0xff]
          %v1812 = vld [vmem:[#allocation2 + $0xd8] sm:$0xff]
          %v1813 = vld [vmem:[#allocation2 + $0xe0] sm:$0xff]
          %v1814 = vld [vmem:[#allocation2 + $0xe8] sm:$0xff]
          %v1815 = vld [vmem:[#allocation2 + $0xf0] sm:$0xff]
          %v1816 = vld [vmem:[#allocation2 + $0xf8] sm:$0xff]
          %v1817 = vld [vmem:[#allocation2 + $0x100] sm:$0xff]
          %v1818 = vld [vmem:[#allocation2 + $0x108] sm:$0xff]
          %v1819 = vld [vmem:[#allocation2 + $0x110] sm:$0xff]
          %v1820 = vld [vmem:[#allocation2 + $0x118] sm:$0xff]
          %v1821 = vld [vmem:[#allocation2 + $0x120] sm:$0xff]
          %v1822 = vld [vmem:[#allocation2 + $0x128] sm:$0xff]
          %v1823 = vld [vmem:[#allocation2 + $0x130] sm:$0xff]
          %v1824 = vld [vmem:[#allocation2 + $0x138] sm:$0xff]
          %v1825 = vld [vmem:[#allocation2 + $0x140] sm:$0xff]
          %v1826 = vld [vmem:[#allocation2 + $0x148] sm:$0xff]
          %v1827 = vld [vmem:[#allocation2 + $0x150] sm:$0xff]
          %v1828 = vld [vmem:[#allocation2 + $0x158] sm:$0xff]
          %v1829 = vld [vmem:[#allocation2 + $0x160] sm:$0xff]
          %v1830 = vld [vmem:[#allocation2 + $0x168] sm:$0xff]
          %v1831 = vld [vmem:[#allocation2 + $0x170] sm:$0xff]
          %v1832 = vld [vmem:[#allocation2 + $0x178] sm:$0xff]
          %v1833 = vld [vmem:[#allocation2 + $0x180] sm:$0xff]
          %v1834 = vld [vmem:[#allocation2 + $0x188] sm:$0xff]
          %v1835 = vld [vmem:[#allocation2 + $0x190] sm:$0xff]
          %v1836 = vld [vmem:[#allocation2 + $0x198] sm:$0xff]
          %v1837 = vld [vmem:[#allocation2 + $0x1a0] sm:$0xff]
          %v1838 = vld [vmem:[#allocation2 + $0x1a8] sm:$0xff]
          %v1839 = vld [vmem:[#allocation2 + $0x1b0] sm:$0xff]
          %v1840 = vld [vmem:[#allocation2 + $0x1b8] sm:$0xff]
          %v1841 = vld [vmem:[#allocation2 + $0x1c0] sm:$0xff]
          %v1842 = vld [vmem:[#allocation2 + $0x1c8] sm:$0xff]
          %v1843 = vld [vmem:[#allocation2 + $0x1d0] sm:$0xff]
          %v1844 = vld [vmem:[#allocation2 + $0x1d8] sm:$0xff]
          %v1845 = vld [vmem:[#allocation2 + $0x1e0] sm:$0xff]
          %v1846 = vld [vmem:[#allocation2 + $0x1e8] sm:$0xff]
          %v1847 = vld [vmem:[#allocation2 + $0x1f0] sm:$0xff]
          %v1848 = vld [vmem:[#allocation2 + $0x1f8] sm:$0xff]
          %v1849 = vadd.f32 %v1785, %v1456
          %v1850 = vadd.f32 %v1786, %v1634
          %v1851 = vadd.f32 %v1787, %v1458
          %v1852 = vadd.f32 %v1788, %v1636
          %v1853 = vadd.f32 %v1789, %v1461
          %v1854 = vadd.f32 %v1790, %v1639
          %v1855 = vadd.f32 %v1791, %v1463
          %v1856 = vadd.f32 %v1792, %v1641
          %v1857 = vadd.f32 %v1793, %v1466
          %v1858 = vadd.f32 %v1794, %v1644
          %v1859 = vadd.f32 %v1795, %v1468
          %v1860 = vadd.f32 %v1796, %v1646
          %v1861 = vadd.f32 %v1797, %v1471
          %v1862 = vadd.f32 %v1798, %v1649
          %v1863 = vadd.f32 %v1799, %v1473
          %v1864 = vadd.f32 %v1800, %v1651
          %v1865 = vadd.f32 %v1801, %v1476
          %v1866 = vadd.f32 %v1802, %v1654
          %v1867 = vadd.f32 %v1803, %v1478
          %v1868 = vadd.f32 %v1804, %v1656
          %v1869 = vadd.f32 %v1805, %v1481
          %v1870 = vadd.f32 %v1806, %v1659
          %v1871 = vadd.f32 %v1807, %v1483
          %v1872 = vadd.f32 %v1808, %v1661
          %v1873 = vadd.f32 %v1809, %v1486
          %v1874 = vadd.f32 %v1810, %v1664
          %v1875 = vadd.f32 %v1811, %v1488
          %v1876 = vadd.f32 %v1812, %v1666
          %v1877 = vadd.f32 %v1813, %v1491
          %v1878 = vadd.f32 %v1814, %v1669
          %v1879 = vadd.f32 %v1815, %v1493
          %v1880 = vadd.f32 %v1816, %v1671
          %v1881 = vadd.f32 %v1817, %v1496
          %v1882 = vadd.f32 %v1818, %v1674
          %v1883 = vadd.f32 %v1819, %v1498
          %v1884 = vadd.f32 %v1820, %v1676
          %v1885 = vadd.f32 %v1821, %v1501
          %v1886 = vadd.f32 %v1822, %v1679
          %v1887 = vadd.f32 %v1823, %v1503
          %v1888 = vadd.f32 %v1824, %v1681
          %v1889 = vadd.f32 %v1825, %v1506
          %v1890 = vadd.f32 %v1826, %v1684
          %v1891 = vadd.f32 %v1827, %v1508
          %v1892 = vadd.f32 %v1828, %v1686
          %v1893 = vadd.f32 %v1829, %v1511
          %v1894 = vadd.f32 %v1830, %v1689
          %v1895 = vadd.f32 %v1831, %v1513
          %v1896 = vadd.f32 %v1832, %v1691
          %v1897 = vadd.f32 %v1833, %v1516
          %v1898 = vadd.f32 %v1834, %v1694
          %v1899 = vadd.f32 %v1835, %v1518
          %v1900 = vadd.f32 %v1836, %v1696
          %v1901 = vadd.f32 %v1837, %v1521
          %v1902 = vadd.f32 %v1838, %v1699
          %v1903 = vadd.f32 %v1839, %v1523
          %v1904 = vadd.f32 %v1840, %v1701
          %v1905 = vadd.f32 %v1841, %v1526
          %v1906 = vadd.f32 %v1842, %v1704
          %v1907 = vadd.f32 %v1843, %v1528
          %v1908 = vadd.f32 %v1844, %v1706
          %v1909 = vadd.f32 %v1845, %v1531
          %v1910 = vadd.f32 %v1846, %v1709
          %v1911 = vadd.f32 %v1847, %v1533
          %v1912 = vadd.f32 %v1848, %v1711
          %1913 = vst [vmem:[#allocation2] sm:$0xff] %v1849
          %1914 = vst [vmem:[#allocation2 + $0x8] sm:$0xff] %v1850
          %1915 = vst [vmem:[#allocation2 + $0x10] sm:$0xff] %v1851
          %1916 = vst [vmem:[#allocation2 + $0x18] sm:$0xff] %v1852
          %1917 = vst [vmem:[#allocation2 + $0x20] sm:$0xff] %v1853
          %1918 = vst [vmem:[#allocation2 + $0x28] sm:$0xff] %v1854
          %1919 = vst [vmem:[#allocation2 + $0x30] sm:$0xff] %v1855
          %1920 = vst [vmem:[#allocation2 + $0x38] sm:$0xff] %v1856
          %1921 = vst [vmem:[#allocation2 + $0x40] sm:$0xff] %v1857
          %1922 = vst [vmem:[#allocation2 + $0x48] sm:$0xff] %v1858
          %1923 = vst [vmem:[#allocation2 + $0x50] sm:$0xff] %v1859
          %1924 = vst [vmem:[#allocation2 + $0x58] sm:$0xff] %v1860
          %1925 = vst [vmem:[#allocation2 + $0x60] sm:$0xff] %v1861
          %1926 = vst [vmem:[#allocation2 + $0x68] sm:$0xff] %v1862
          %1927 = vst [vmem:[#allocation2 + $0x70] sm:$0xff] %v1863
          %1928 = vst [vmem:[#allocation2 + $0x78] sm:$0xff] %v1864
          %1929 = vst [vmem:[#allocation2 + $0x80] sm:$0xff] %v1865
          %1930 = vst [vmem:[#allocation2 + $0x88] sm:$0xff] %v1866
          %1931 = vst [vmem:[#allocation2 + $0x90] sm:$0xff] %v1867
          %1932 = vst [vmem:[#allocation2 + $0x98] sm:$0xff] %v1868
          %1933 = vst [vmem:[#allocation2 + $0xa0] sm:$0xff] %v1869
          %1934 = vst [vmem:[#allocation2 + $0xa8] sm:$0xff] %v1870
          %1935 = vst [vmem:[#allocation2 + $0xb0] sm:$0xff] %v1871
          %1936 = vst [vmem:[#allocation2 + $0xb8] sm:$0xff] %v1872
          %1937 = vst [vmem:[#allocation2 + $0xc0] sm:$0xff] %v1873
          %1938 = vst [vmem:[#allocation2 + $0xc8] sm:$0xff] %v1874
          %1939 = vst [vmem:[#allocation2 + $0xd0] sm:$0xff] %v1875
          %1940 = vst [vmem:[#allocation2 + $0xd8] sm:$0xff] %v1876
          %1941 = vst [vmem:[#allocation2 + $0xe0] sm:$0xff] %v1877
          %1942 = vst [vmem:[#allocation2 + $0xe8] sm:$0xff] %v1878
          %1943 = vst [vmem:[#allocation2 + $0xf0] sm:$0xff] %v1879
          %1944 = vst [vmem:[#allocation2 + $0xf8] sm:$0xff] %v1880
          %1945 = vst [vmem:[#allocation2 + $0x100] sm:$0xff] %v1881
          %1946 = vst [vmem:[#allocation2 + $0x108] sm:$0xff] %v1882
          %1947 = vst [vmem:[#allocation2 + $0x110] sm:$0xff] %v1883
          %1948 = vst [vmem:[#allocation2 + $0x118] sm:$0xff] %v1884
          %1949 = vst [vmem:[#allocation2 + $0x120] sm:$0xff] %v1885
          %1950 = vst [vmem:[#allocation2 + $0x128] sm:$0xff] %v1886
          %1951 = vst [vmem:[#allocation2 + $0x130] sm:$0xff] %v1887
          %1952 = vst [vmem:[#allocation2 + $0x138] sm:$0xff] %v1888
          %1953 = vst [vmem:[#allocation2 + $0x140] sm:$0xff] %v1889
          %1954 = vst [vmem:[#allocation2 + $0x148] sm:$0xff] %v1890
          %1955 = vst [vmem:[#allocation2 + $0x150] sm:$0xff] %v1891
          %1956 = vst [vmem:[#allocation2 + $0x158] sm:$0xff] %v1892
          %1957 = vst [vmem:[#allocation2 + $0x160] sm:$0xff] %v1893
          %1958 = vst [vmem:[#allocation2 + $0x168] sm:$0xff] %v1894
          %1959 = vst [vmem:[#allocation2 + $0x170] sm:$0xff] %v1895
          %1960 = vst [vmem:[#allocation2 + $0x178] sm:$0xff] %v1896
          %1961 = vst [vmem:[#allocation2 + $0x180] sm:$0xff] %v1897
          %1962 = vst [vmem:[#allocation2 + $0x188] sm:$0xff] %v1898
          %1963 = vst [vmem:[#allocation2 + $0x190] sm:$0xff] %v1899
          %1964 = vst [vmem:[#allocation2 + $0x198] sm:$0xff] %v1900
          %1965 = vst [vmem:[#allocation2 + $0x1a0] sm:$0xff] %v1901
          %1966 = vst [vmem:[#allocation2 + $0x1a8] sm:$0xff] %v1902
          %1967 = vst [vmem:[#allocation2 + $0x1b0] sm:$0xff] %v1903
          %1968 = vst [vmem:[#allocation2 + $0x1b8] sm:$0xff] %v1904
          %1969 = vst [vmem:[#allocation2 + $0x1c0] sm:$0xff] %v1905
          %1970 = vst [vmem:[#allocation2 + $0x1c8] sm:$0xff] %v1906
          %1971 = vst [vmem:[#allocation2 + $0x1d0] sm:$0xff] %v1907
          %1972 = vst [vmem:[#allocation2 + $0x1d8] sm:$0xff] %v1908
          %1973 = vst [vmem:[#allocation2 + $0x1e0] sm:$0xff] %v1909
          %1974 = vst [vmem:[#allocation2 + $0x1e8] sm:$0xff] %v1910
          %1975 = vst [vmem:[#allocation2 + $0x1f0] sm:$0xff] %v1911
          %1976 = vst [vmem:[#allocation2 + $0x1f8] sm:$0xff] %v1912
        $region52: #{tpu_custom_call.1} parent=31 // pred_fallthru
          _
        %p1977 = scmp.eq.s32.totalorder %s24, 1
        // Predicated region
        $region53: #{tpu_custom_call.1} parent=31 // pred_check
          %p1978 = pneg %p1977
        $region54: #{tpu_custom_call.1} parent=31 // pred_check_branch
          %1980 = sbr.rel (%p1978) target = $region56
        $region55: #{tpu_custom_call.1} parent=31 // pred_region
          %v1981 = vld [vmem:[#allocation2] sm:$0xff]
          %v1982 = vld [vmem:[#allocation2 + $0x8] sm:$0xff]
          %v1983 = vld [vmem:[#allocation2 + $0x10] sm:$0xff]
          %v1984 = vld [vmem:[#allocation2 + $0x18] sm:$0xff]
          %v1985 = vld [vmem:[#allocation2 + $0x20] sm:$0xff]
          %v1986 = vld [vmem:[#allocation2 + $0x28] sm:$0xff]
          %v1987 = vld [vmem:[#allocation2 + $0x30] sm:$0xff]
          %v1988 = vld [vmem:[#allocation2 + $0x38] sm:$0xff]
          %v1989 = vld [vmem:[#allocation2 + $0x40] sm:$0xff]
          %v1990 = vld [vmem:[#allocation2 + $0x48] sm:$0xff]
          %v1991 = vld [vmem:[#allocation2 + $0x50] sm:$0xff]
          %v1992 = vld [vmem:[#allocation2 + $0x58] sm:$0xff]
          %v1993 = vld [vmem:[#allocation2 + $0x60] sm:$0xff]
          %v1994 = vld [vmem:[#allocation2 + $0x68] sm:$0xff]
          %v1995 = vld [vmem:[#allocation2 + $0x70] sm:$0xff]
          %v1996 = vld [vmem:[#allocation2 + $0x78] sm:$0xff]
          %v1997 = vld [vmem:[#allocation2 + $0x80] sm:$0xff]
          %v1998 = vld [vmem:[#allocation2 + $0x88] sm:$0xff]
          %v1999 = vld [vmem:[#allocation2 + $0x90] sm:$0xff]
          %v2000 = vld [vmem:[#allocation2 + $0x98] sm:$0xff]
          %v2001 = vld [vmem:[#allocation2 + $0xa0] sm:$0xff]
          %v2002 = vld [vmem:[#allocation2 + $0xa8] sm:$0xff]
          %v2003 = vld [vmem:[#allocation2 + $0xb0] sm:$0xff]
          %v2004 = vld [vmem:[#allocation2 + $0xb8] sm:$0xff]
          %v2005 = vld [vmem:[#allocation2 + $0xc0] sm:$0xff]
          %v2006 = vld [vmem:[#allocation2 + $0xc8] sm:$0xff]
          %v2007 = vld [vmem:[#allocation2 + $0xd0] sm:$0xff]
          %v2008 = vld [vmem:[#allocation2 + $0xd8] sm:$0xff]
          %v2009 = vld [vmem:[#allocation2 + $0xe0] sm:$0xff]
          %v2010 = vld [vmem:[#allocation2 + $0xe8] sm:$0xff]
          %v2011 = vld [vmem:[#allocation2 + $0xf0] sm:$0xff]
          %v2012 = vld [vmem:[#allocation2 + $0xf8] sm:$0xff]
          %v2013 = vld [vmem:[#allocation2 + $0x100] sm:$0xff]
          %v2014 = vld [vmem:[#allocation2 + $0x108] sm:$0xff]
          %v2015 = vld [vmem:[#allocation2 + $0x110] sm:$0xff]
          %v2016 = vld [vmem:[#allocation2 + $0x118] sm:$0xff]
          %v2017 = vld [vmem:[#allocation2 + $0x120] sm:$0xff]
          %v2018 = vld [vmem:[#allocation2 + $0x128] sm:$0xff]
          %v2019 = vld [vmem:[#allocation2 + $0x130] sm:$0xff]
          %v2020 = vld [vmem:[#allocation2 + $0x138] sm:$0xff]
          %v2021 = vld [vmem:[#allocation2 + $0x140] sm:$0xff]
          %v2022 = vld [vmem:[#allocation2 + $0x148] sm:$0xff]
          %v2023 = vld [vmem:[#allocation2 + $0x150] sm:$0xff]
          %v2024 = vld [vmem:[#allocation2 + $0x158] sm:$0xff]
          %v2025 = vld [vmem:[#allocation2 + $0x160] sm:$0xff]
          %v2026 = vld [vmem:[#allocation2 + $0x168] sm:$0xff]
          %v2027 = vld [vmem:[#allocation2 + $0x170] sm:$0xff]
          %v2028 = vld [vmem:[#allocation2 + $0x178] sm:$0xff]
          %v2029 = vld [vmem:[#allocation2 + $0x180] sm:$0xff]
          %v2030 = vld [vmem:[#allocation2 + $0x188] sm:$0xff]
          %v2031 = vld [vmem:[#allocation2 + $0x190] sm:$0xff]
          %v2032 = vld [vmem:[#allocation2 + $0x198] sm:$0xff]
          %v2033 = vld [vmem:[#allocation2 + $0x1a0] sm:$0xff]
          %v2034 = vld [vmem:[#allocation2 + $0x1a8] sm:$0xff]
          %v2035 = vld [vmem:[#allocation2 + $0x1b0] sm:$0xff]
          %v2036 = vld [vmem:[#allocation2 + $0x1b8] sm:$0xff]
          %v2037 = vld [vmem:[#allocation2 + $0x1c0] sm:$0xff]
          %v2038 = vld [vmem:[#allocation2 + $0x1c8] sm:$0xff]
          %v2039 = vld [vmem:[#allocation2 + $0x1d0] sm:$0xff]
          %v2040 = vld [vmem:[#allocation2 + $0x1d8] sm:$0xff]
          %v2041 = vld [vmem:[#allocation2 + $0x1e0] sm:$0xff]
          %v2042 = vld [vmem:[#allocation2 + $0x1e8] sm:$0xff]
          %v2043 = vld [vmem:[#allocation2 + $0x1f0] sm:$0xff]
          %v2044 = vld [vmem:[#allocation2 + $0x1f8] sm:$0xff]
          %v2045 = vpack.c.bf16 %v1982, %v1981
          %v2046 = vpack.c.bf16 %v1984, %v1983
          %v2047 = vpack.c.bf16 %v1986, %v1985
          %v2048 = vpack.c.bf16 %v1988, %v1987
          %v2049 = vpack.c.bf16 %v1990, %v1989
          %v2050 = vpack.c.bf16 %v1992, %v1991
          %v2051 = vpack.c.bf16 %v1994, %v1993
          %v2052 = vpack.c.bf16 %v1996, %v1995
          %v2053 = vpack.c.bf16 %v1998, %v1997
          %v2054 = vpack.c.bf16 %v2000, %v1999
          %v2055 = vpack.c.bf16 %v2002, %v2001
          %v2056 = vpack.c.bf16 %v2004, %v2003
          %v2057 = vpack.c.bf16 %v2006, %v2005
          %v2058 = vpack.c.bf16 %v2008, %v2007
          %v2059 = vpack.c.bf16 %v2010, %v2009
          %v2060 = vpack.c.bf16 %v2012, %v2011
          %v2061 = vpack.c.bf16 %v2014, %v2013
          %v2062 = vpack.c.bf16 %v2016, %v2015
          %v2063 = vpack.c.bf16 %v2018, %v2017
          %v2064 = vpack.c.bf16 %v2020, %v2019
          %v2065 = vpack.c.bf16 %v2022, %v2021
          %v2066 = vpack.c.bf16 %v2024, %v2023
          %v2067 = vpack.c.bf16 %v2026, %v2025
          %v2068 = vpack.c.bf16 %v2028, %v2027
          %v2069 = vpack.c.bf16 %v2030, %v2029
          %v2070 = vpack.c.bf16 %v2032, %v2031
          %v2071 = vpack.c.bf16 %v2034, %v2033
          %v2072 = vpack.c.bf16 %v2036, %v2035
          %v2073 = vpack.c.bf16 %v2038, %v2037
          %v2074 = vpack.c.bf16 %v2040, %v2039
          %v2075 = vpack.c.bf16 %v2042, %v2041
          %v2076 = vpack.c.bf16 %v2044, %v2043
          %2077 = vst [vmem:[#allocation9] sm:$0xff] %v2045
          %2078 = vst [vmem:[#allocation9 + $0x8] sm:$0xff] %v2046
          %2079 = vst [vmem:[#allocation9 + $0x10] sm:$0xff] %v2047
          %2080 = vst [vmem:[#allocation9 + $0x18] sm:$0xff] %v2048
          %2081 = vst [vmem:[#allocation9 + $0x20] sm:$0xff] %v2049
          %2082 = vst [vmem:[#allocation9 + $0x28] sm:$0xff] %v2050
          %2083 = vst [vmem:[#allocation9 + $0x30] sm:$0xff] %v2051
          %2084 = vst [vmem:[#allocation9 + $0x38] sm:$0xff] %v2052
          %2085 = vst [vmem:[#allocation9 + $0x40] sm:$0xff] %v2053
          %2086 = vst [vmem:[#allocation9 + $0x48] sm:$0xff] %v2054
          %2087 = vst [vmem:[#allocation9 + $0x50] sm:$0xff] %v2055
          %2088 = vst [vmem:[#allocation9 + $0x58] sm:$0xff] %v2056
          %2089 = vst [vmem:[#allocation9 + $0x60] sm:$0xff] %v2057
          %2090 = vst [vmem:[#allocation9 + $0x68] sm:$0xff] %v2058
          %2091 = vst [vmem:[#allocation9 + $0x70] sm:$0xff] %v2059
          %2092 = vst [vmem:[#allocation9 + $0x78] sm:$0xff] %v2060
          %2093 = vst [vmem:[#allocation9 + $0x80] sm:$0xff] %v2061
          %2094 = vst [vmem:[#allocation9 + $0x88] sm:$0xff] %v2062
          %2095 = vst [vmem:[#allocation9 + $0x90] sm:$0xff] %v2063
          %2096 = vst [vmem:[#allocation9 + $0x98] sm:$0xff] %v2064
          %2097 = vst [vmem:[#allocation9 + $0xa0] sm:$0xff] %v2065
          %2098 = vst [vmem:[#allocation9 + $0xa8] sm:$0xff] %v2066
          %2099 = vst [vmem:[#allocation9 + $0xb0] sm:$0xff] %v2067
          %2100 = vst [vmem:[#allocation9 + $0xb8] sm:$0xff] %v2068
          %2101 = vst [vmem:[#allocation9 + $0xc0] sm:$0xff] %v2069
          %2102 = vst [vmem:[#allocation9 + $0xc8] sm:$0xff] %v2070
          %2103 = vst [vmem:[#allocation9 + $0xd0] sm:$0xff] %v2071
          %2104 = vst [vmem:[#allocation9 + $0xd8] sm:$0xff] %v2072
          %2105 = vst [vmem:[#allocation9 + $0xe0] sm:$0xff] %v2073
          %2106 = vst [vmem:[#allocation9 + $0xe8] sm:$0xff] %v2074
          %2107 = vst [vmem:[#allocation9 + $0xf0] sm:$0xff] %v2075
          %2108 = vst [vmem:[#allocation9 + $0xf8] sm:$0xff] %v2076
        $region56: #{tpu_custom_call.1} parent=31 // pred_fallthru
          _
        // Predicated region
        $region57: #{tpu_custom_call.1} parent=31 // pred_check
          %p2109 = pneg %p127
        $region58: #{tpu_custom_call.1} parent=31 // pred_check_branch
          %2111 = sbr.rel (%p2109) target = $region60
        $region59: #{tpu_custom_call.1} parent=31 // pred_region
          %s2112 = smul.u32 32, %s23
          %2114 = vsyncadd [#allocation5], 0
          %s2115 = smul.addr %s2112, 2
          %s2116 = smul.addr %s2115, 4
          %s2117 = scalar_lea.hbm %s3, %s2116
          %s2118 = sshll.u32 [#allocation9], 4
          %s2119 = int_to_ptr.vmem [resolvable:$true] %s2118
          %s2120 = sshll.u32 %s2117, 4
          %s2121 = int_to_ptr.hbm [resolvable:$true] %s2120
          %2126 = dma.vmem_to_hbm [thread:$0]  %s2119, 4096, %s2121, [#allocation5], 128, 128, 8
        $region60: #{tpu_custom_call.1} parent=31 // pred_fallthru
          _
        // Predicated region
        $region61: #{tpu_custom_call.1} parent=31 // pred_check
          %p2127 = pneg %p127
        $region62: #{tpu_custom_call.1} parent=31 // pred_check_branch
          %2129 = sbr.rel (%p2127) target = $region64
        $region63: #{tpu_custom_call.1} parent=31 // pred_region
          %2131 = dma.done [#allocation5], 4096
        $region64: #{tpu_custom_call.1} parent=31 // pred_fallthru
          _
      $region32: #{tpu_custom_call.1} parent=5 // pred_fallthru
        _
      %p2132 = scmp.le.s32.totalorder 2, %s14
      // Predicated region
      $region65: #{tpu_custom_call.1} parent=5 // pred_check
        %p2133 = pneg %p2132
      $region66: #{tpu_custom_call.1} parent=5 // pred_check_branch
        %2135 = sbr.rel (%p2133) target = $region68
      $region67: #{tpu_custom_call.1} parent=5 // pred_region
        %s2136 = ssub.s32 %s14, 2
      $region68: #{tpu_custom_call.1} parent=5 // pred_fallthru
        _
    $region6: #{tpu_custom_call.1} parent=1 // loop_footer
      %s18 = sadd.s32 1, %s14
    $region7: #{tpu_custom_call.1} parent=1 // loop_footer_branch
      %13 = sbr.rel target = $region3
    $region8: #{tpu_custom_call.1} parent=1 // loop_exit
      _
    %2137 = vsyncpa [#allocation4], 1
    %s2138 = scalar_lea.sflag [#allocation4], 1
    %2139 = vsyncpa %s2138, 1
    %2140 = vsyncpa [#allocation7], 1
    %s2141 = scalar_lea.sflag [#allocation7], 1
    %2142 = vsyncpa %s2141, 1
    %2143 = vsyncpa [#allocation5], 1
    %s2144 = scalar_lea.sflag [#allocation5], 1
    %2145 = vsyncpa %s2144, 1

</llo_original>
